<compile_context>
chip_gen: v5e
topology: v5e:2x2
jax: 0.10.0
libtpu: 0.0.40
codegen_flags: <defaults>
</compile_context>

<pallas_src>
import functools

import jax
import jax.numpy as jnp
import numpy as np
from jax.experimental import pallas as pl
from jax.experimental.pallas import tpu as pltpu

# ----------------------------- model dimensions -----------------------------
C_TARGET = 447   # c_target_feat
PAIR_C = 128     # pair_channel
SEQ_C = 384      # seq_channel
MSA_C = 64       # msa_channel
REL_C = 139      # c_rel_feat
MSA_F = 34       # msa feature dim
LN_EPS = 1e-5
PROJ_OUT = 2 * PAIR_C + SEQ_C + MSA_C    # 704 fused projection width
_SINGLE_LO = 2 * PAIR_C                  # 256
_SINGLE_HI = 2 * PAIR_C + SEQ_C          # 640


# ------------------------------ tiling helpers -------------------------------
def _pick_tile(n, cap, mult=8):
    """Largest multiple-of-`mult` divisor of n that is <= cap; else n (no tiling).

    Never returns a tile that violates the (8,128) BlockSpec constraint:
    result is either a multiple of `mult` or the full dimension.
    TODO(synk): for awkward N, pad in the wrapper instead of falling back to full.
    """
    if n <= cap:
        return n
    t = (cap // mult) * mult
    while t >= mult:
        if n % t == 0:
            return t
        t -= mult
    return n


def _layernorm(x, gamma, beta):
    """One-pass LayerNorm: var = E[x^2] - E[x]^2 (f32 math)."""
    mean = jnp.mean(x, axis=-1, keepdims=True)
    mean_sq = jnp.mean(x * x, axis=-1, keepdims=True)
    var = mean_sq - mean * mean
    return (x - mean) * jax.lax.rsqrt(var + LN_EPS) * gamma + beta


# ------------------------------ Pallas kernels -------------------------------
def _proj_single_kernel(tf_ref, w_cat_ref, prev_s_ref, ln_g_ref, ln_b_ref,
                        w_prev_s_ref, o_ref):
    """Fused target_feat projections + single-activation embedding.

    y = target_feat @ [w_left | w_right | w_single | w_extra]   (bf16 MXU)
    y[:, single] += LayerNorm(prev_single) @ w_prev_single
    Stored as one lane-dense (tm, 704) block.
    """
    y = jnp.dot(tf_ref[...], w_cat_ref[...], preferred_element_type=jnp.float32)
    ps_ln = _layernorm(prev_s_ref[...].astype(jnp.float32),
                       ln_g_ref[...], ln_b_ref[...])
    ps = jnp.dot(ps_ln.astype(jnp.bfloat16), w_prev_s_ref[...],
                 preferred_element_type=jnp.float32)
    o_ref[:, :_SINGLE_LO] = y[:, :_SINGLE_LO]
    o_ref[:, _SINGLE_LO:_SINGLE_HI] = y[:, _SINGLE_LO:_SINGLE_HI] + ps
    o_ref[:, _SINGLE_HI:] = y[:, _SINGLE_HI:]


def _pair_embed_kernel(
    bonds_ref, flags_ref,                                   # scalar prefetch (SMEM)
    left_ref, right_ref, prev_pair_ref, gamma_ref, beta_ref, w_prev_ref,
    rel_ref, w_pos_ref, w_bond_ref, mask_col_ref, mask_row_ref,
    pair_out_ref, mask_out_ref, *, n_tokens,
):
    """Fused pair-activation embedding for one (row_tile, col_tile) block."""
    tr, tc, c = prev_pair_ref.shape
    i = pl.program_id(0)
    j = pl.program_id(1)

    # prev-pair branch: LayerNorm in f32, bf16 MXU operands, f32 accumulator.
    pp_ln = _layernorm(prev_pair_ref[...].astype(jnp.float32),
                       gamma_ref[...], beta_ref[...])
    acc = jnp.dot(pp_ln.astype(jnp.bfloat16).reshape(tr * tc, c), w_prev_ref[...],
                  preferred_element_type=jnp.float32)

    # relative-encoding branch (rel_feat streamed bf16).
    acc += jnp.dot(rel_ref[...].reshape(tr * tc, REL_C), w_pos_ref[...],
                   preferred_element_type=jnp.float32)
    acc = acc.reshape(tr, tc, c)

    # sequence pair embedding: left[:, None] + right[None, :] (f32).
    acc += left_ref[...][:, None, :] + right_ref[...][None, :, :]

    # pair mask: mask[:, None] * mask[None, :]
    mask_out_ref[...] = mask_col_ref[...] * mask_row_ref[...]

    # bond branch: only executed on blocks that actually contain a bond.
    has_bond = flags_ref[i * pl.num_programs(1) + j] > 0

    @pl.when(has_bond)
    def _():
        row_ids = i * tr + jax.lax.broadcasted_iota(jnp.int32, (tr, tc), 0)
        col_ids = j * tc + jax.lax.broadcasted_iota(jnp.int32, (tr, tc), 1)
        packed = row_ids * n_tokens + col_ids
        contact = jnp.zeros((tr, tc), jnp.float32)
        for b in range(bonds_ref.shape[0]):        # small static bond count
            contact = jnp.maximum(
                contact, (packed == bonds_ref[b]).astype(jnp.float32))
        pair_out_ref[...] = (
            acc + contact[:, :, None] * w_bond_ref[...][None]
        ).astype(pair_out_ref.dtype)

    @pl.when(jnp.logical_not(has_bond))
    def _():
        pair_out_ref[...] = acc.astype(pair_out_ref.dtype)


def _msa_embed_kernel(msa_feat_ref, w_msa_ref, extra_ref, o_ref):
    """msa_act = Linear(msa_feat) + extra_msa_target_proj[None] (lane-dense store)."""
    ts, tn, f = msa_feat_ref.shape
    msa = jnp.dot(msa_feat_ref[...].reshape(ts * tn, f), w_msa_ref[...],
                  preferred_element_type=jnp.float32).reshape(ts, tn, MSA_C)
    out = msa + extra_ref[...][None]
    o_ref[...] = out.reshape(ts, tn * MSA_C).astype(o_ref.dtype)


# --------------------------------- wrappers ----------------------------------
def fused_projection(tf_bf16, w_cat, prev_single, ln_g, ln_b, w_prev_s,
                     *, row_cap=256):
    n = tf_bf16.shape[0]
    tm = _pick_tile(n, row_cap)
    return pl.pallas_call(
        _proj_single_kernel,
        out_shape=jax.ShapeDtypeStruct((n, PROJ_OUT), jnp.float32),
        grid=(n // tm,),
        in_specs=[
            pl.BlockSpec((tm, C_TARGET), lambda i: (i, 0)),
            pl.BlockSpec((C_TARGET, PROJ_OUT), lambda i: (0, 0)),
            pl.BlockSpec((tm, SEQ_C), lambda i: (i, 0)),
            pl.BlockSpec((1, SEQ_C), lambda i: (0, 0)),
            pl.BlockSpec((1, SEQ_C), lambda i: (0, 0)),
            pl.BlockSpec((SEQ_C, SEQ_C), lambda i: (0, 0)),
        ],
        out_specs=pl.BlockSpec((tm, PROJ_OUT), lambda i: (i, 0)),
        compiler_params=pltpu.CompilerParams(dimension_semantics=("parallel",)),
    )(tf_bf16, w_cat, prev_single, ln_g, ln_b, w_prev_s)


def pair_embedding(proj, prev_pair_bf16, ln_g, ln_b, w_prev, rel_bf16, w_pos,
                   w_bond, mask, bonds_packed, block_flags,
                   *, tr, tc, vmem_limit_bytes):
    n = prev_pair_bf16.shape[0]
    kernel = functools.partial(_pair_embed_kernel, n_tokens=n)
    mask_col = mask[:, None]          # (N, 1)
    mask_row = mask[None, :]          # (1, N)
    return pl.pallas_call(
        kernel,
        out_shape=(
            jax.ShapeDtypeStruct((n, n, PAIR_C), jnp.bfloat16),
            jax.ShapeDtypeStruct((n, n), jnp.float32),
        ),
        grid_spec=pltpu.PrefetchScalarGridSpec(
            num_scalar_prefetch=2,              # packed bonds + per-block flags
            grid=(n // tr, n // tc),            # j inner: left/weights stay resident
            in_specs=[
                # left / right read straight out of the fused projection output
                # via column-block indices 0 and 1 (no XLA slice copies).
                pl.BlockSpec((tr, PAIR_C), lambda i, j, *_: (i, 0)),
                pl.BlockSpec((tc, PAIR_C), lambda i, j, *_: (j, 1)),
                pl.BlockSpec((tr, tc, PAIR_C), lambda i, j, *_: (i, j, 0)),  # prev_pair bf16
                pl.BlockSpec((1, PAIR_C), lambda i, j, *_: (0, 0)),          # ln gamma
                pl.BlockSpec((1, PAIR_C), lambda i, j, *_: (0, 0)),          # ln beta
                pl.BlockSpec((PAIR_C, PAIR_C), lambda i, j, *_: (0, 0)),     # w_prev bf16
                pl.BlockSpec((tr, tc, REL_C), lambda i, j, *_: (i, j, 0)),   # rel bf16
                pl.BlockSpec((REL_C, PAIR_C), lambda i, j, *_: (0, 0)),      # w_pos bf16
                pl.BlockSpec((1, PAIR_C), lambda i, j, *_: (0, 0)),          # w_bond
                pl.BlockSpec((tr, 1), lambda i, j, *_: (i, 0)),              # mask col
                pl.BlockSpec((1, tc), lambda i, j, *_: (0, j)),              # mask row
            ],
            out_specs=[
                pl.BlockSpec((tr, tc, PAIR_C), lambda i, j, *_: (i, j, 0)),
                pl.BlockSpec((tr, tc), lambda i, j, *_: (i, j)),
            ],
        ),
        compiler_params=pltpu.CompilerParams(
            dimension_semantics=("parallel", "parallel"),   # megacore sharding
            vmem_limit_bytes=vmem_limit_bytes,
        ),
    )(bonds_packed, block_flags, proj, proj, prev_pair_bf16, ln_g, ln_b, w_prev,
      rel_bf16, w_pos, w_bond, mask_col, mask_row)


def msa_embedding(msa_feat_bf16, w_msa, extra_proj, *, row_cap=64, tok_cap=256):
    s, n, _ = msa_feat_bf16.shape
    ts = _pick_tile(s, row_cap)
    tn = _pick_tile(n, tok_cap)
    out = pl.pallas_call(
        _msa_embed_kernel,
        out_shape=jax.ShapeDtypeStruct((s, n * MSA_C), jnp.float32),
        grid=(s // ts, n // tn),
        in_specs=[
            pl.BlockSpec((ts, tn, MSA_F), lambda si, ni: (si, ni, 0)),
            pl.BlockSpec((MSA_F, MSA_C), lambda si, ni: (0, 0)),
            pl.BlockSpec((tn, MSA_C), lambda si, ni: (ni, 0)),
        ],
        out_specs=pl.BlockSpec((ts, tn * MSA_C), lambda si, ni: (si, ni)),
        compiler_params=pltpu.CompilerParams(
            dimension_semantics=("parallel", "parallel")),
    )(msa_feat_bf16, w_msa, extra_proj)
    return out.reshape(s, n, MSA_C)       # free (contiguous) reshape


# ---------------------------- parameter preparation ---------------------------
def prepare_params(raw):
    """Hoisted out of the per-call jit: fused/bf16 weights, f32 LN params."""
    w_cat = jnp.concatenate(
        [raw["w_left"], raw["w_right"], raw["w_single"], raw["w_extra_msa"]],
        axis=1).astype(jnp.bfloat16)                       # [447, 704]
    return {
        "w_cat": w_cat,
        "w_prev_pair": raw["w_prev_pair"].astype(jnp.bfloat16),
        "prev_pair_ln_g": raw["prev_pair_ln_g"].astype(jnp.float32),
        "prev_pair_ln_b": raw["prev_pair_ln_b"].astype(jnp.float32),
        "w_pos": raw["w_pos"].astype(jnp.bfloat16),
        "w_bond": raw["w_bond"].astype(jnp.float32),
        "w_prev_single": raw["w_prev_single"].astype(jnp.bfloat16),
        "prev_single_ln_g": raw["prev_single_ln_g"].astype(jnp.float32),
        "prev_single_ln_b": raw["prev_single_ln_b"].astype(jnp.float32),
        "w_msa": raw["w_msa"].astype(jnp.bfloat16),
    }


def _bond_block_flags(bond_idxs, n, tr, tc):
    """Pack bonds to 1-D row*N+col (SMEM-friendly) and per-grid-block flags.

    Entries at (0,0) are padding sentinels in the reference (contact[0,0]=0);
    they are mapped to -1 so they never match any packed iota value.
    """
    rows = bond_idxs[:, 0].astype(jnp.int32)
    cols = bond_idxs[:, 1].astype(jnp.int32)
    packed = rows * n + cols
    valid = packed != 0
    packed = jnp.where(valid, packed, -1)
    ni, nj = n // tr, n // tc
    blk = (rows // tr) * nj + (cols // tc)
    flags = jnp.zeros((ni * nj,), jnp.int32).at[blk].add(valid.astype(jnp.int32))
    return packed, flags


# ------------------------------ full forward ---------------------------------
@functools.partial(
    jax.jit,
    static_argnames=("proj_row_cap", "pair_row_cap", "pair_col_cap",
                     "msa_row_cap", "msa_tok_cap", "pair_vmem_bytes"))
def evoformer_forward(params, target_feat, prev_pair, prev_single,
                      token_mask, rel_feat, msa_feat, bond_gather_idxs,
                      *, proj_row_cap=256, pair_row_cap=64, pair_col_cap=128,
                      msa_row_cap=64, msa_tok_cap=256,
                      pair_vmem_bytes=48 * 1024 * 1024):
    n = target_feat.shape[0]
    tr = _pick_tile(n, pair_row_cap)
    tc = _pick_tile(n, pair_col_cap, mult=128)

    # bf16 HBM streams (no-ops if the caller already stores these in bf16).
    tf_bf = target_feat.astype(jnp.bfloat16)
    prev_pair_bf = prev_pair.astype(jnp.bfloat16)
    rel_bf = rel_feat.astype(jnp.bfloat16)
    msa_bf = msa_feat.astype(jnp.bfloat16)

    bonds_packed, block_flags = _bond_block_flags(bond_gather_idxs, n, tr, tc)

    # One fused MXU matmul for left/right/single/extra projections; the single
    # slice already includes Linear(LayerNorm(prev['single'])).
    proj = fused_projection(
        tf_bf, params["w_cat"], prev_single.astype(jnp.float32),
        params["prev_single_ln_g"], params["prev_single_ln_b"],
        params["w_prev_single"], row_cap=proj_row_cap)

    # Fused pair embedding + pair mask (2-D tiled, bf16 streams, sparse bonds).
    pair_act, pair_mask = pair_embedding(
        proj, prev_pair_bf,
        params["prev_pair_ln_g"], params["prev_pair_ln_b"], params["w_prev_pair"],
        rel_bf, params["w_pos"], params["w_bond"],
        token_mask.astype(jnp.float32), bonds_packed, block_flags,
        tr=tr, tc=tc, vmem_limit_bytes=pair_vmem_bytes)

    single_act = proj[:, _SINGLE_LO:_SINGLE_HI]
    extra_msa = proj[:, _SINGLE_HI:]

    # MSA activation embedding (tiled over msa rows AND tokens).
    msa_act = msa_embedding(msa_bf, params["w_msa"], extra_msa,
                            row_cap=msa_row_cap, tok_cap=msa_tok_cap)

    # TODO(synk): template_embedding / msa_stack (EvoformerBlock x4) /
    # trunk_pairformer (PairformerBlock x48) have no provided definitions.
    return {
        "single": single_act,
        "pair": pair_act,
        "pair_mask": pair_mask,
        "msa": msa_act,
        "target_feat": target_feat,
    }


# ---------------------------- pure-JAX reference ------------------------------
def reference_forward(raw, target_feat, prev_pair, prev_single,
                      token_mask, rel_feat, msa_feat, bond_gather_idxs):
    def ln(x, g, b):
        m = x.mean(-1, keepdims=True)
        v = ((x - m) ** 2).mean(-1, keepdims=True)
        return (x - m) / jnp.sqrt(v + LN_EPS) * g + b

    left = target_feat @ raw["w_left"]
    right = target_feat @ raw["w_right"]
    pair = left[:, None] + right[None, :]
    pair = pair + ln(prev_pair, raw["prev_pair_ln_g"][0],
                     raw["prev_pair_ln_b"][0]) @ raw["w_prev_pair"]
    pair = pair + rel_feat @ raw["w_pos"]
    n = target_feat.shape[0]
    contact = jnp.zeros((n, n), jnp.float32)
    contact = contact.at[bond_gather_idxs[:, 0], bond_gather_idxs[:, 1]].set(1.0)
    contact = contact.at[0, 0].set(0.0)
    pair = pair + contact[:, :, None] * raw["w_bond"][0][None, None, :]
    pair_mask = token_mask[:, None] * token_mask[None, :]
    single = target_feat @ raw["w_single"] + ln(
        prev_single, raw["prev_single_ln_g"][0],
        raw["prev_single_ln_b"][0]) @ raw["w_prev_single"]
    msa = msa_feat @ raw["w_msa"] + (target_feat @ raw["w_extra_msa"])[None]
    return pair, pair_mask, single, msa


# ---------------------------------- main --------------------------------------
if __name__ == "__main__":
    key = jax.random.PRNGKey(0)
    ks = jax.random.split(key, 24)

    N_TOK = 32     # num tokens (small demo)
    N_MSA = 8      # num msa rows (small demo; module uses up to 1024)

    def w_init(k, fan_in, fan_out):
        return jax.random.normal(k, (fan_in, fan_out), jnp.float32) / np.sqrt(fan_in)

    raw_params = {
        "w_left": w_init(ks[0], C_TARGET, PAIR_C),
        "w_right": w_init(ks[1], C_TARGET, PAIR_C),
        "w_prev_pair": w_init(ks[2], PAIR_C, PAIR_C),
        "prev_pair_ln_g": 1.0 + 0.1 * jax.random.normal(ks[3], (1, PAIR_C), jnp.float32),
        "prev_pair_ln_b": 0.1 * jax.random.normal(ks[4], (1, PAIR_C), jnp.float32),
        "w_pos": w_init(ks[5], REL_C, PAIR_C),
        "w_bond": w_init(ks[6], 1, PAIR_C),
        "w_single": w_init(ks[7], C_TARGET, SEQ_C),
        "w_prev_single": w_init(ks[8], SEQ_C, SEQ_C),
        "prev_single_ln_g": 1.0 + 0.1 * jax.random.normal(ks[9], (1, SEQ_C), jnp.float32),
        "prev_single_ln_b": 0.1 * jax.random.normal(ks[10], (1, SEQ_C), jnp.float32),
        "w_msa": w_init(ks[11], MSA_F, MSA_C),
        "w_extra_msa": w_init(ks[12], C_TARGET, MSA_C),
    }
    params = prepare_params(raw_params)

    target_feat = jax.random.normal(ks[13], (N_TOK, C_TARGET), jnp.float32)
    prev_pair = jax.random.normal(ks[14], (N_TOK, N_TOK, PAIR_C), jnp.float32)
    prev_single = jax.random.normal(ks[15], (N_TOK, SEQ_C), jnp.float32)
    token_mask = (jax.random.uniform(ks[16], (N_TOK,)) > 0.1).astype(jnp.float32)
    rel_feat = jax.random.normal(ks[17], (N_TOK, N_TOK, REL_C), jnp.float32)
    msa_feat = jax.random.normal(ks[18], (N_MSA, N_TOK, MSA_F), jnp.float32)
    bond_gather_idxs = jnp.array([[1, 3], [4, 7], [2, 9], [0, 0]], dtype=jnp.int32)

    # Small tile caps so the demo exercises multi-step tiled grids.
    out = evoformer_forward(params, target_feat, prev_pair, prev_single,
                            token_mask, rel_feat, msa_feat, bond_gather_idxs,
                            proj_row_cap=16, pair_row_cap=8, pair_col_cap=128,
                            msa_row_cap=8, msa_tok_cap=16)
    jax.block_until_ready(out)

    ref_pair, ref_mask, ref_single, ref_msa = reference_forward(
        raw_params, target_feat, prev_pair, prev_single,
        token_mask, rel_feat, msa_feat, bond_gather_idxs)

    # bf16 MXU operands / bf16 pair output -> 3e-2 tolerance.
    np.testing.assert_allclose(np.asarray(out["pair"].astype(jnp.float32)),
                               np.asarray(ref_pair), rtol=3e-2, atol=3e-2)
    np.testing.assert_allclose(np.asarray(out["pair_mask"]), np.asarray(ref_mask),
                               rtol=1e-5, atol=1e-5)
    np.testing.assert_allclose(np.asarray(out["single"]), np.asarray(ref_single),
                               rtol=3e-2, atol=3e-2)
    np.testing.assert_allclose(np.asarray(out["msa"]), np.asarray(ref_msa),
                               rtol=3e-2, atol=3e-2)
    assert out["pair"].shape == (N_TOK, N_TOK, PAIR_C)
    assert out["single"].shape == (N_TOK, SEQ_C)
    assert out["msa"].shape == (N_MSA, N_TOK, MSA_C)
    print("KERNEL_OK")
</pallas_src>

<mosaic_0001>
module attributes {stable_mosaic.version = 11 : i64} {
  func.func @_proj_single_kernel(%arg0: i32, %arg1: memref<16x447xbf16, #tpu.memory_space<vmem>>, %arg2: memref<447x704xbf16, #tpu.memory_space<vmem>>, %arg3: memref<16x384xf32, #tpu.memory_space<vmem>>, %arg4: memref<1x384xf32, #tpu.memory_space<vmem>>, %arg5: memref<1x384xf32, #tpu.memory_space<vmem>>, %arg6: memref<384x384xbf16, #tpu.memory_space<vmem>>, %arg7: memref<16x704xf32, #tpu.memory_space<vmem>>) attributes {dimension_semantics = [#tpu.dimension_semantics<parallel>], iteration_bounds = array<i64: 2>, scalar_prefetch = 0 : i64, scratch_operands = 0 : i64, tpu.core_type = #tpu.core_type<tc>, window_params = [{transform_indices = @transform_0, window_bounds = array<i64: 16, 447>}, {pipeline_mode = #tpu.pipeline_mode<synchronous>, transform_indices = @transform_1, window_bounds = array<i64: 447, 704>}, {transform_indices = @transform_2, window_bounds = array<i64: 16, 384>}, {pipeline_mode = #tpu.pipeline_mode<synchronous>, transform_indices = @transform_3, window_bounds = array<i64: 1, 384>}, {pipeline_mode = #tpu.pipeline_mode<synchronous>, transform_indices = @transform_4, window_bounds = array<i64: 1, 384>}, {pipeline_mode = #tpu.pipeline_mode<synchronous>, transform_indices = @transform_5, window_bounds = array<i64: 384, 384>}, {transform_indices = @transform_6, window_bounds = array<i64: 16, 704>}]} {
    %c0 = arith.constant 0 : index
    %c0_0 = arith.constant 0 : index
    %0 = vector.load %arg1[%c0, %c0_0] : memref<16x447xbf16, #tpu.memory_space<vmem>>, vector<16x447xbf16>
    %c0_1 = arith.constant 0 : index
    %c0_2 = arith.constant 0 : index
    %1 = vector.load %arg2[%c0_1, %c0_2] : memref<447x704xbf16, #tpu.memory_space<vmem>>, vector<447x704xbf16>
    %cst = arith.constant dense<0.000000e+00> : vector<16x704xf32>
    %2 = tpu.matmul %0, %1, %cst {dimension_numbers = #tpu.dot_dimension_numbers<[1], [0], [0], [1], [0, 0, 1, 1], [], []>} : vector<16x447xbf16>, vector<447x704xbf16>, vector<16x704xf32> -> vector<16x704xf32>
    %c0_3 = arith.constant 0 : index
    %c0_4 = arith.constant 0 : index
    %3 = vector.load %arg3[%c0_3, %c0_4] : memref<16x384xf32, #tpu.memory_space<vmem>>, vector<16x384xf32>
    %c0_5 = arith.constant 0 : index
    %c0_6 = arith.constant 0 : index
    %4 = vector.load %arg4[%c0_5, %c0_6] : memref<1x384xf32, #tpu.memory_space<vmem>>, vector<1x384xf32>
    %c0_7 = arith.constant 0 : index
    %c0_8 = arith.constant 0 : index
    %5 = vector.load %arg5[%c0_7, %c0_8] : memref<1x384xf32, #tpu.memory_space<vmem>>, vector<1x384xf32>
    %cst_9 = arith.constant dense<0.000000e+00> : vector<16xf32>
    %6 = vector.multi_reduction <add>, %3, %cst_9 [1] : vector<16x384xf32> to vector<16xf32>
    %7 = vector.shape_cast %6 : vector<16xf32> to vector<16x1xf32>
    %cst_10 = arith.constant 3.840000e+02 : f32
    %8 = vector.broadcast %cst_10 : f32 to vector<16x1xf32>
    %9 = arith.divf %7, %8 : vector<16x1xf32>
    %10 = arith.mulf %3, %3 : vector<16x384xf32>
    %cst_11 = arith.constant dense<0.000000e+00> : vector<16xf32>
    %11 = vector.multi_reduction <add>, %10, %cst_11 [1] : vector<16x384xf32> to vector<16xf32>
    %12 = vector.shape_cast %11 : vector<16xf32> to vector<16x1xf32>
    %cst_12 = arith.constant 3.840000e+02 : f32
    %13 = vector.broadcast %cst_12 : f32 to vector<16x1xf32>
    %14 = arith.divf %12, %13 : vector<16x1xf32>
    %15 = arith.mulf %9, %9 : vector<16x1xf32>
    %16 = arith.subf %14, %15 : vector<16x1xf32>
    %17 = vector.broadcast %9 : vector<16x1xf32> to vector<16x384xf32>
    %18 = arith.subf %3, %17 : vector<16x384xf32>
    %cst_13 = arith.constant 9.99999974E-6 : f32
    %19 = vector.broadcast %cst_13 : f32 to vector<16x1xf32>
    %20 = arith.addf %16, %19 : vector<16x1xf32>
    %21 = math.rsqrt %20 : vector<16x1xf32>
    %22 = vector.broadcast %21 : vector<16x1xf32> to vector<16x384xf32>
    %23 = arith.mulf %18, %22 : vector<16x384xf32>
    %24 = vector.broadcast %4 : vector<1x384xf32> to vector<16x384xf32>
    %25 = arith.mulf %23, %24 : vector<16x384xf32>
    %26 = vector.broadcast %5 : vector<1x384xf32> to vector<16x384xf32>
    %27 = arith.addf %25, %26 : vector<16x384xf32>
    %28 = arith.truncf %27 : vector<16x384xf32> to vector<16x384xbf16>
    %c0_14 = arith.constant 0 : index
    %c0_15 = arith.constant 0 : index
    %29 = vector.load %arg6[%c0_14, %c0_15] : memref<384x384xbf16, #tpu.memory_space<vmem>>, vector<384x384xbf16>
    %cst_16 = arith.constant dense<0.000000e+00> : vector<16x384xf32>
    %30 = tpu.matmul %28, %29, %cst_16 {dimension_numbers = #tpu.dot_dimension_numbers<[1], [0], [0], [1], [0, 0, 1, 1], [], []>} : vector<16x384xbf16>, vector<384x384xbf16>, vector<16x384xf32> -> vector<16x384xf32>
    %31 = vector.extract_strided_slice %2 {offsets = [0, 0], sizes = [16, 256], strides = [1, 1]} : vector<16x704xf32> to vector<16x256xf32>
    %c0_17 = arith.constant 0 : index
    %c0_18 = arith.constant 0 : index
    %32 = vector.load %arg7[%c0_17, %c0_18] : memref<16x704xf32, #tpu.memory_space<vmem>>, vector<16x256xf32>
    tpu.vector_store %arg7[%c0_17, %c0_18], %31 {strides = array<i32>} : memref<16x704xf32, #tpu.memory_space<vmem>>, vector<16x256xf32>,
    %33 = vector.extract_strided_slice %2 {offsets = [0, 256], sizes = [16, 384], strides = [1, 1]} : vector<16x704xf32> to vector<16x384xf32>
    %34 = arith.addf %33, %30 : vector<16x384xf32>
    %c0_19 = arith.constant 0 : index
    %c256 = arith.constant 256 : index
    %35 = vector.load %arg7[%c0_19, %c256] : memref<16x704xf32, #tpu.memory_space<vmem>>, vector<16x384xf32>
    tpu.vector_store %arg7[%c0_19, %c256], %34 {strides = array<i32>} : memref<16x704xf32, #tpu.memory_space<vmem>>, vector<16x384xf32>,
    %36 = vector.extract_strided_slice %2 {offsets = [0, 640], sizes = [16, 64], strides = [1, 1]} : vector<16x704xf32> to vector<16x64xf32>
    %c0_20 = arith.constant 0 : index
    %c640 = arith.constant 640 : index
    %37 = vector.load %arg7[%c0_20, %c640] : memref<16x704xf32, #tpu.memory_space<vmem>>, vector<16x64xf32>
    tpu.vector_store %arg7[%c0_20, %c640], %36 {strides = array<i32>} : memref<16x704xf32, #tpu.memory_space<vmem>>, vector<16x64xf32>,
    return
  }
  func.func @transform_0(%arg0: i32) -> (i32, i32) {
    %c0_i32 = arith.constant 0 : i32
    %c0_i32_0 = arith.constant 0 : i32
    return %arg0, %c0_i32 : i32, i32
  }
  func.func @transform_1(%arg0: i32) -> (i32, i32) {
    %c0_i32 = arith.constant 0 : i32
    %c0_i32_0 = arith.constant 0 : i32
    %c0_i32_1 = arith.constant 0 : i32
    return %c0_i32, %c0_i32_0 : i32, i32
  }
  func.func @transform_2(%arg0: i32) -> (i32, i32) {
    %c0_i32 = arith.constant 0 : i32
    %c0_i32_0 = arith.constant 0 : i32
    return %arg0, %c0_i32 : i32, i32
  }
  func.func @transform_3(%arg0: i32) -> (i32, i32) {
    %c0_i32 = arith.constant 0 : i32
    %c0_i32_0 = arith.constant 0 : i32
    %c0_i32_1 = arith.constant 0 : i32
    return %c0_i32, %c0_i32_0 : i32, i32
  }
  func.func @transform_4(%arg0: i32) -> (i32, i32) {
    %c0_i32 = arith.constant 0 : i32
    %c0_i32_0 = arith.constant 0 : i32
    %c0_i32_1 = arith.constant 0 : i32
    return %c0_i32, %c0_i32_0 : i32, i32
  }
  func.func @transform_5(%arg0: i32) -> (i32, i32) {
    %c0_i32 = arith.constant 0 : i32
    %c0_i32_0 = arith.constant 0 : i32
    %c0_i32_1 = arith.constant 0 : i32
    return %c0_i32, %c0_i32_0 : i32, i32
  }
  func.func @transform_6(%arg0: i32) -> (i32, i32) {
    %c0_i32 = arith.constant 0 : i32
    %c0_i32_0 = arith.constant 0 : i32
    return %arg0, %c0_i32 : i32, i32
  }
}

module attributes {stable_mosaic.version = 11 : i64} {
  func.func @_msa_embed_kernel(%arg0: i32, %arg1: i32, %arg2: memref<8x16x34xbf16, #tpu.memory_space<vmem>>, %arg3: memref<34x64xbf16, #tpu.memory_space<vmem>>, %arg4: memref<16x64xf32, #tpu.memory_space<vmem>>, %arg5: memref<8x1024xf32, #tpu.memory_space<vmem>>) attributes {dimension_semantics = [#tpu.dimension_semantics<parallel>, #tpu.dimension_semantics<parallel>], iteration_bounds = array<i64: 1, 2>, scalar_prefetch = 0 : i64, scratch_operands = 0 : i64, tpu.core_type = #tpu.core_type<tc>, window_params = [{transform_indices = @transform_0, window_bounds = array<i64: 8, 16, 34>}, {pipeline_mode = #tpu.pipeline_mode<synchronous>, transform_indices = @transform_1, window_bounds = array<i64: 34, 64>}, {transform_indices = @transform_2, window_bounds = array<i64: 16, 64>}, {transform_indices = @transform_3, window_bounds = array<i64: 8, 1024>}]} {
    %c0 = arith.constant 0 : index
    %c0_0 = arith.constant 0 : index
    %c0_1 = arith.constant 0 : index
    %0 = vector.load %arg2[%c0, %c0_0, %c0_1] : memref<8x16x34xbf16, #tpu.memory_space<vmem>>, vector<8x16x34xbf16>
    %1 = vector.shape_cast %0 : vector<8x16x34xbf16> to vector<128x34xbf16>
    %c0_2 = arith.constant 0 : index
    %c0_3 = arith.constant 0 : index
    %2 = vector.load %arg3[%c0_2, %c0_3] : memref<34x64xbf16, #tpu.memory_space<vmem>>, vector<34x64xbf16>
    %cst = arith.constant dense<0.000000e+00> : vector<128x64xf32>
    %3 = tpu.matmul %1, %2, %cst {dimension_numbers = #tpu.dot_dimension_numbers<[1], [0], [0], [1], [0, 0, 1, 1], [], []>} : vector<128x34xbf16>, vector<34x64xbf16>, vector<128x64xf32> -> vector<128x64xf32>
    %4 = vector.shape_cast %3 : vector<128x64xf32> to vector<8x16x64xf32>
    %c0_4 = arith.constant 0 : index
    %c0_5 = arith.constant 0 : index
    %5 = vector.load %arg4[%c0_4, %c0_5] : memref<16x64xf32, #tpu.memory_space<vmem>>, vector<16x64xf32>
    %6 = vector.shape_cast %5 : vector<16x64xf32> to vector<1x16x64xf32>
    %7 = vector.broadcast %6 : vector<1x16x64xf32> to vector<8x16x64xf32>
    %8 = arith.addf %4, %7 : vector<8x16x64xf32>
    %9 = vector.shape_cast %8 : vector<8x16x64xf32> to vector<8x1024xf32>
    %c0_6 = arith.constant 0 : index
    %c0_7 = arith.constant 0 : index
    %10 = vector.load %arg5[%c0_6, %c0_7] : memref<8x1024xf32, #tpu.memory_space<vmem>>, vector<8x1024xf32>
    tpu.vector_store %arg5[%c0_6, %c0_7], %9 {strides = array<i32>} : memref<8x1024xf32, #tpu.memory_space<vmem>>, vector<8x1024xf32>,
    return
  }
  func.func @transform_0(%arg0: i32, %arg1: i32) -> (i32, i32, i32) {
    %c0_i32 = arith.constant 0 : i32
    %c0_i32_0 = arith.constant 0 : i32
    return %arg0, %arg1, %c0_i32 : i32, i32, i32
  }
  func.func @transform_1(%arg0: i32, %arg1: i32) -> (i32, i32) {
    %c0_i32 = arith.constant 0 : i32
    %c0_i32_0 = arith.constant 0 : i32
    %c0_i32_1 = arith.constant 0 : i32
    return %c0_i32, %c0_i32_0 : i32, i32
  }
  func.func @transform_2(%arg0: i32, %arg1: i32) -> (i32, i32) {
    %c0_i32 = arith.constant 0 : i32
    %c0_i32_0 = arith.constant 0 : i32
    return %arg1, %c0_i32 : i32, i32
  }
  func.func @transform_3(%arg0: i32, %arg1: i32) -> (i32, i32) {
    %c0_i32 = arith.constant 0 : i32
    return %arg0, %arg1 : i32, i32
  }
}

module attributes {stable_mosaic.version = 11 : i64} {
  func.func @_pair_embed_kernel(%arg0: i32, %arg1: i32, %arg2: memref<4xi32, #tpu.memory_space<smem>>, %arg3: memref<4xi32, #tpu.memory_space<smem>>, %arg4: memref<8x128xf32, #tpu.memory_space<vmem>>, %arg5: memref<32x128xf32, #tpu.memory_space<vmem>>, %arg6: memref<8x32x128xbf16, #tpu.memory_space<vmem>>, %arg7: memref<1x128xf32, #tpu.memory_space<vmem>>, %arg8: memref<1x128xf32, #tpu.memory_space<vmem>>, %arg9: memref<128x128xbf16, #tpu.memory_space<vmem>>, %arg10: memref<8x32x139xbf16, #tpu.memory_space<vmem>>, %arg11: memref<139x128xbf16, #tpu.memory_space<vmem>>, %arg12: memref<1x128xf32, #tpu.memory_space<vmem>>, %arg13: memref<8x1xf32, #tpu.memory_space<vmem>>, %arg14: memref<1x32xf32, #tpu.memory_space<vmem>>, %arg15: memref<8x32x128xbf16, #tpu.memory_space<vmem>>, %arg16: memref<8x32xf32, #tpu.memory_space<vmem>>) attributes {dimension_semantics = [#tpu.dimension_semantics<parallel>, #tpu.dimension_semantics<parallel>], iteration_bounds = array<i64: 4, 1>, scalar_prefetch = 2 : i64, scratch_operands = 0 : i64, tpu.core_type = #tpu.core_type<tc>, window_params = [{transform_indices = @transform_0, window_bounds = array<i64: 8, 128>}, {transform_indices = @transform_1, window_bounds = array<i64: 32, 128>}, {transform_indices = @transform_2, window_bounds = array<i64: 8, 32, 128>}, {pipeline_mode = #tpu.pipeline_mode<synchronous>, transform_indices = @transform_3, window_bounds = array<i64: 1, 128>}, {pipeline_mode = #tpu.pipeline_mode<synchronous>, transform_indices = @transform_4, window_bounds = array<i64: 1, 128>}, {pipeline_mode = #tpu.pipeline_mode<synchronous>, transform_indices = @transform_5, window_bounds = array<i64: 128, 128>}, {transform_indices = @transform_6, window_bounds = array<i64: 8, 32, 139>}, {pipeline_mode = #tpu.pipeline_mode<synchronous>, transform_indices = @transform_7, window_bounds = array<i64: 139, 128>}, {pipeline_mode = #tpu.pipeline_mode<synchronous>, transform_indices = @transform_8, window_bounds = array<i64: 1, 128>}, {transform_indices = @transform_9, window_bounds = array<i64: 8, 1>}, {transform_indices = @transform_10, window_bounds = array<i64: 1, 32>}, {transform_indices = @transform_11, window_bounds = array<i64: 8, 32, 128>}, {transform_indices = @transform_12, window_bounds = array<i64: 8, 32>}]} {
    %c0 = arith.constant 0 : index
    %c0_0 = arith.constant 0 : index
    %c0_1 = arith.constant 0 : index
    %0 = vector.load %arg6[%c0, %c0_0, %c0_1] : memref<8x32x128xbf16, #tpu.memory_space<vmem>>, vector<8x32x128xbf16>
    %1 = arith.extf %0 : vector<8x32x128xbf16> to vector<8x32x128xf32>
    %c0_2 = arith.constant 0 : index
    %c0_3 = arith.constant 0 : index
    %2 = vector.load %arg7[%c0_2, %c0_3] : memref<1x128xf32, #tpu.memory_space<vmem>>, vector<1x128xf32>
    %c0_4 = arith.constant 0 : index
    %c0_5 = arith.constant 0 : index
    %3 = vector.load %arg8[%c0_4, %c0_5] : memref<1x128xf32, #tpu.memory_space<vmem>>, vector<1x128xf32>
    %cst = arith.constant dense<0.000000e+00> : vector<8x32xf32>
    %4 = vector.multi_reduction <add>, %1, %cst [2] : vector<8x32x128xf32> to vector<8x32xf32>
    %5 = vector.shape_cast %4 : vector<8x32xf32> to vector<8x32x1xf32>
    %cst_6 = arith.constant 1.280000e+02 : f32
    %6 = vector.broadcast %cst_6 : f32 to vector<8x32x1xf32>
    %7 = arith.divf %5, %6 : vector<8x32x1xf32>
    %8 = arith.mulf %1, %1 : vector<8x32x128xf32>
    %cst_7 = arith.constant dense<0.000000e+00> : vector<8x32xf32>
    %9 = vector.multi_reduction <add>, %8, %cst_7 [2] : vector<8x32x128xf32> to vector<8x32xf32>
    %10 = vector.shape_cast %9 : vector<8x32xf32> to vector<8x32x1xf32>
    %cst_8 = arith.constant 1.280000e+02 : f32
    %11 = vector.broadcast %cst_8 : f32 to vector<8x32x1xf32>
    %12 = arith.divf %10, %11 : vector<8x32x1xf32>
    %13 = arith.mulf %7, %7 : vector<8x32x1xf32>
    %14 = arith.subf %12, %13 : vector<8x32x1xf32>
    %15 = vector.broadcast %7 : vector<8x32x1xf32> to vector<8x32x128xf32>
    %16 = arith.subf %1, %15 : vector<8x32x128xf32>
    %cst_9 = arith.constant 9.99999974E-6 : f32
    %17 = vector.broadcast %cst_9 : f32 to vector<8x32x1xf32>
    %18 = arith.addf %14, %17 : vector<8x32x1xf32>
    %19 = math.rsqrt %18 : vector<8x32x1xf32>
    %20 = vector.broadcast %19 : vector<8x32x1xf32> to vector<8x32x128xf32>
    %21 = arith.mulf %16, %20 : vector<8x32x128xf32>
    %22 = vector.shape_cast %2 : vector<1x128xf32> to vector<1x1x128xf32>
    %23 = vector.broadcast %22 : vector<1x1x128xf32> to vector<8x32x128xf32>
    %24 = arith.mulf %21, %23 : vector<8x32x128xf32>
    %25 = vector.shape_cast %3 : vector<1x128xf32> to vector<1x1x128xf32>
    %26 = vector.broadcast %25 : vector<1x1x128xf32> to vector<8x32x128xf32>
    %27 = arith.addf %24, %26 : vector<8x32x128xf32>
    %28 = arith.truncf %27 : vector<8x32x128xf32> to vector<8x32x128xbf16>
    %29 = vector.shape_cast %28 : vector<8x32x128xbf16> to vector<256x128xbf16>
    %c0_10 = arith.constant 0 : index
    %c0_11 = arith.constant 0 : index
    %30 = vector.load %arg9[%c0_10, %c0_11] : memref<128x128xbf16, #tpu.memory_space<vmem>>, vector<128x128xbf16>
    %cst_12 = arith.constant dense<0.000000e+00> : vector<256x128xf32>
    %31 = tpu.matmul %29, %30, %cst_12 {dimension_numbers = #tpu.dot_dimension_numbers<[1], [0], [0], [1], [0, 0, 1, 1], [], []>} : vector<256x128xbf16>, vector<128x128xbf16>, vector<256x128xf32> -> vector<256x128xf32>
    %c0_13 = arith.constant 0 : index
    %c0_14 = arith.constant 0 : index
    %c0_15 = arith.constant 0 : index
    %32 = vector.load %arg10[%c0_13, %c0_14, %c0_15] : memref<8x32x139xbf16, #tpu.memory_space<vmem>>, vector<8x32x139xbf16>
    %33 = vector.shape_cast %32 : vector<8x32x139xbf16> to vector<256x139xbf16>
    %c0_16 = arith.constant 0 : index
    %c0_17 = arith.constant 0 : index
    %34 = vector.load %arg11[%c0_16, %c0_17] : memref<139x128xbf16, #tpu.memory_space<vmem>>, vector<139x128xbf16>
    %cst_18 = arith.constant dense<0.000000e+00> : vector<256x128xf32>
    %35 = tpu.matmul %33, %34, %cst_18 {dimension_numbers = #tpu.dot_dimension_numbers<[1], [0], [0], [1], [0, 0, 1, 1], [], []>} : vector<256x139xbf16>, vector<139x128xbf16>, vector<256x128xf32> -> vector<256x128xf32>
    %36 = arith.addf %31, %35 : vector<256x128xf32>
    %37 = vector.shape_cast %36 : vector<256x128xf32> to vector<8x32x128xf32>
    %c0_19 = arith.constant 0 : index
    %c0_20 = arith.constant 0 : index
    %38 = vector.load %arg4[%c0_19, %c0_20] : memref<8x128xf32, #tpu.memory_space<vmem>>, vector<8x128xf32>
    %39 = vector.shape_cast %38 : vector<8x128xf32> to vector<8x1x128xf32>
    %c0_21 = arith.constant 0 : index
    %c0_22 = arith.constant 0 : index
    %40 = vector.load %arg5[%c0_21, %c0_22] : memref<32x128xf32, #tpu.memory_space<vmem>>, vector<32x128xf32>
    %41 = vector.shape_cast %40 : vector<32x128xf32> to vector<1x32x128xf32>
    %42 = vector.broadcast %39 : vector<8x1x128xf32> to vector<8x32x128xf32>
    %43 = vector.broadcast %41 : vector<1x32x128xf32> to vector<8x32x128xf32>
    %44 = arith.addf %42, %43 : vector<8x32x128xf32>
    %45 = arith.addf %37, %44 : vector<8x32x128xf32>
    %c0_23 = arith.constant 0 : index
    %c0_24 = arith.constant 0 : index
    %46 = vector.load %arg13[%c0_23, %c0_24] : memref<8x1xf32, #tpu.memory_space<vmem>>, vector<8x1xf32>
    %c0_25 = arith.constant 0 : index
    %c0_26 = arith.constant 0 : index
    %47 = vector.load %arg14[%c0_25, %c0_26] : memref<1x32xf32, #tpu.memory_space<vmem>>, vector<1x32xf32>
    %48 = vector.broadcast %46 : vector<8x1xf32> to vector<8x32xf32>
    %49 = vector.broadcast %47 : vector<1x32xf32> to vector<8x32xf32>
    %50 = arith.mulf %48, %49 : vector<8x32xf32>
    %c0_27 = arith.constant 0 : index
    %c0_28 = arith.constant 0 : index
    %51 = vector.load %arg16[%c0_27, %c0_28] : memref<8x32xf32, #tpu.memory_space<vmem>>, vector<8x32xf32>
    tpu.vector_store %arg16[%c0_27, %c0_28], %50 {strides = array<i32>} : memref<8x32xf32, #tpu.memory_space<vmem>>, vector<8x32xf32>,
    %c1_i32 = arith.constant 1 : i32
    %52 = arith.muli %arg0, %c1_i32 : i32
    %53 = arith.addi %52, %arg1 : i32
    %54 = arith.index_cast %53 : i32 to index
    %55 = memref.load %arg3[%54] : memref<4xi32, #tpu.memory_space<smem>>
    %c0_i32 = arith.constant 0 : i32
    %56 = arith.cmpi sgt, %55, %c0_i32 : i32
    %57 = arith.extui %56 : i1 to i32
    %c0_i32_29 = arith.constant 0 : i32
    %58 = arith.cmpi ne, %57, %c0_i32_29 : i32
    scf.if %58 {
      %c8_i32 = arith.constant 8 : i32
      %62 = arith.muli %arg0, %c8_i32 : i32
      %63 = tpu.iota {dimensions = array<i32: 0>} : vector<8x32xi32>
      %64 = vector.broadcast %62 : i32 to vector<8x32xi32>
      %65 = arith.addi %64, %63 : vector<8x32xi32>
      %c32_i32 = arith.constant 32 : i32
      %66 = arith.muli %arg1, %c32_i32 : i32
      %67 = tpu.iota {dimensions = array<i32: 1>} : vector<8x32xi32>
      %68 = vector.broadcast %66 : i32 to vector<8x32xi32>
      %69 = arith.addi %68, %67 : vector<8x32xi32>
      %c32_i32_31 = arith.constant 32 : i32
      %70 = vector.broadcast %c32_i32_31 : i32 to vector<8x32xi32>
      %71 = arith.muli %65, %70 : vector<8x32xi32>
      %72 = arith.addi %71, %69 : vector<8x32xi32>
      %cst_32 = arith.constant 0.000000e+00 : f32
      %73 = vector.broadcast %cst_32 : f32 to vector<8x32xf32>
      %c0_33 = arith.constant 0 : index
      %74 = memref.load %arg2[%c0_33] : memref<4xi32, #tpu.memory_space<smem>>
      %75 = vector.broadcast %74 : i32 to vector<8x32xi32>
      %76 = arith.cmpi eq, %72, %75 : vector<8x32xi32>
      %77 = arith.extui %76 : vector<8x32xi1> to vector<8x32xi32>
      %78 = arith.sitofp %77 : vector<8x32xi32> to vector<8x32xf32>
      %79 = arith.maximumf %73, %78 : vector<8x32xf32>
      %c1 = arith.constant 1 : index
      %80 = memref.load %arg2[%c1] : memref<4xi32, #tpu.memory_space<smem>>
      %81 = vector.broadcast %80 : i32 to vector<8x32xi32>
      %82 = arith.cmpi eq, %72, %81 : vector<8x32xi32>
      %83 = arith.extui %82 : vector<8x32xi1> to vector<8x32xi32>
      %84 = arith.sitofp %83 : vector<8x32xi32> to vector<8x32xf32>
      %85 = arith.maximumf %79, %84 : vector<8x32xf32>
      %c2 = arith.constant 2 : index
      %86 = memref.load %arg2[%c2] : memref<4xi32, #tpu.memory_space<smem>>
      %87 = vector.broadcast %86 : i32 to vector<8x32xi32>
      %88 = arith.cmpi eq, %72, %87 : vector<8x32xi32>
      %89 = arith.extui %88 : vector<8x32xi1> to vector<8x32xi32>
      %90 = arith.sitofp %89 : vector<8x32xi32> to vector<8x32xf32>
      %91 = arith.maximumf %85, %90 : vector<8x32xf32>
      %c3 = arith.constant 3 : index
      %92 = memref.load %arg2[%c3] : memref<4xi32, #tpu.memory_space<smem>>
      %93 = vector.broadcast %92 : i32 to vector<8x32xi32>
      %94 = arith.cmpi eq, %72, %93 : vector<8x32xi32>
      %95 = arith.extui %94 : vector<8x32xi1> to vector<8x32xi32>
      %96 = arith.sitofp %95 : vector<8x32xi32> to vector<8x32xf32>
      %97 = arith.maximumf %91, %96 : vector<8x32xf32>
      %98 = vector.shape_cast %97 : vector<8x32xf32> to vector<8x32x1xf32>
      %c0_34 = arith.constant 0 : index
      %c0_35 = arith.constant 0 : index
      %99 = vector.load %arg12[%c0_34, %c0_35] : memref<1x128xf32, #tpu.memory_space<vmem>>, vector<1x128xf32>
      %100 = vector.shape_cast %99 : vector<1x128xf32> to vector<1x1x128xf32>
      %101 = vector.broadcast %98 : vector<8x32x1xf32> to vector<8x32x128xf32>
      %102 = vector.broadcast %100 : vector<1x1x128xf32> to vector<8x32x128xf32>
      %103 = arith.mulf %101, %102 : vector<8x32x128xf32>
      %104 = arith.addf %45, %103 : vector<8x32x128xf32>
      %105 = arith.truncf %104 : vector<8x32x128xf32> to vector<8x32x128xbf16>
      %c0_36 = arith.constant 0 : index
      %c0_37 = arith.constant 0 : index
      %c0_38 = arith.constant 0 : index
      %106 = vector.load %arg15[%c0_36, %c0_37, %c0_38] : memref<8x32x128xbf16, #tpu.memory_space<vmem>>, vector<8x32x128xbf16>
      tpu.vector_store %arg15[%c0_36, %c0_37, %c0_38], %105 {strides = array<i32>} : memref<8x32x128xbf16, #tpu.memory_space<vmem>>, vector<8x32x128xbf16>,
    } else {
    }
    %true = arith.constant true
    %59 = arith.xori %56, %true : i1
    %60 = arith.extui %59 : i1 to i32
    %c0_i32_30 = arith.constant 0 : i32
    %61 = arith.cmpi ne, %60, %c0_i32_30 : i32
    scf.if %61 {
      %62 = arith.truncf %45 : vector<8x32x128xf32> to vector<8x32x128xbf16>
      %c0_31 = arith.constant 0 : index
      %c0_32 = arith.constant 0 : index
      %c0_33 = arith.constant 0 : index
      %63 = vector.load %arg15[%c0_31, %c0_32, %c0_33] : memref<8x32x128xbf16, #tpu.memory_space<vmem>>, vector<8x32x128xbf16>
      tpu.vector_store %arg15[%c0_31, %c0_32, %c0_33], %62 {strides = array<i32>} : memref<8x32x128xbf16, #tpu.memory_space<vmem>>, vector<8x32x128xbf16>,
    } else {
    }
    return
  }
  func.func @transform_0(%arg0: i32, %arg1: i32, %arg2: memref<4xi32, #tpu.memory_space<smem>>, %arg3: memref<4xi32, #tpu.memory_space<smem>>) -> (i32, i32) {
    %c0_i32 = arith.constant 0 : i32
    %c0_i32_0 = arith.constant 0 : i32
    return %arg0, %c0_i32 : i32, i32
  }
  func.func @transform_1(%arg0: i32, %arg1: i32, %arg2: memref<4xi32, #tpu.memory_space<smem>>, %arg3: memref<4xi32, #tpu.memory_space<smem>>) -> (i32, i32) {
    %c1_i32 = arith.constant 1 : i32
    %c0_i32 = arith.constant 0 : i32
    return %arg1, %c1_i32 : i32, i32
  }
  func.func @transform_2(%arg0: i32, %arg1: i32, %arg2: memref<4xi32, #tpu.memory_space<smem>>, %arg3: memref<4xi32, #tpu.memory_space<smem>>) -> (i32, i32, i32) {
    %c0_i32 = arith.constant 0 : i32
    %c0_i32_0 = arith.constant 0 : i32
    return %arg0, %arg1, %c0_i32 : i32, i32, i32
  }
  func.func @transform_3(%arg0: i32, %arg1: i32, %arg2: memref<4xi32, #tpu.memory_space<smem>>, %arg3: memref<4xi32, #tpu.memory_space<smem>>) -> (i32, i32) {
    %c0_i32 = arith.constant 0 : i32
    %c0_i32_0 = arith.constant 0 : i32
    %c0_i32_1 = arith.constant 0 : i32
    return %c0_i32, %c0_i32_0 : i32, i32
  }
  func.func @transform_4(%arg0: i32, %arg1: i32, %arg2: memref<4xi32, #tpu.memory_space<smem>>, %arg3: memref<4xi32, #tpu.memory_space<smem>>) -> (i32, i32) {
    %c0_i32 = arith.constant 0 : i32
    %c0_i32_0 = arith.constant 0 : i32
    %c0_i32_1 = arith.constant 0 : i32
    return %c0_i32, %c0_i32_0 : i32, i32
  }
  func.func @transform_5(%arg0: i32, %arg1: i32, %arg2: memref<4xi32, #tpu.memory_space<smem>>, %arg3: memref<4xi32, #tpu.memory_space<smem>>) -> (i32, i32) {
    %c0_i32 = arith.constant 0 : i32
    %c0_i32_0 = arith.constant 0 : i32
    %c0_i32_1 = arith.constant 0 : i32
    return %c0_i32, %c0_i32_0 : i32, i32
  }
  func.func @transform_6(%arg0: i32, %arg1: i32, %arg2: memref<4xi32, #tpu.memory_space<smem>>, %arg3: memref<4xi32, #tpu.memory_space<smem>>) -> (i32, i32, i32) {
    %c0_i32 = arith.constant 0 : i32
    %c0_i32_0 = arith.constant 0 : i32
    return %arg0, %arg1, %c0_i32 : i32, i32, i32
  }
  func.func @transform_7(%arg0: i32, %arg1: i32, %arg2: memref<4xi32, #tpu.memory_space<smem>>, %arg3: memref<4xi32, #tpu.memory_space<smem>>) -> (i32, i32) {
    %c0_i32 = arith.constant 0 : i32
    %c0_i32_0 = arith.constant 0 : i32
    %c0_i32_1 = arith.constant 0 : i32
    return %c0_i32, %c0_i32_0 : i32, i32
  }
  func.func @transform_8(%arg0: i32, %arg1: i32, %arg2: memref<4xi32, #tpu.memory_space<smem>>, %arg3: memref<4xi32, #tpu.memory_space<smem>>) -> (i32, i32) {
    %c0_i32 = arith.constant 0 : i32
    %c0_i32_0 = arith.constant 0 : i32
    %c0_i32_1 = arith.constant 0 : i32
    return %c0_i32, %c0_i32_0 : i32, i32
  }
  func.func @transform_9(%arg0: i32, %arg1: i32, %arg2: memref<4xi32, #tpu.memory_space<smem>>, %arg3: memref<4xi32, #tpu.memory_space<smem>>) -> (i32, i32) {
    %c0_i32 = arith.constant 0 : i32
    %c0_i32_0 = arith.constant 0 : i32
    return %arg0, %c0_i32 : i32, i32
  }
  func.func @transform_10(%arg0: i32, %arg1: i32, %arg2: memref<4xi32, #tpu.memory_space<smem>>, %arg3: memref<4xi32, #tpu.memory_space<smem>>) -> (i32, i32) {
    %c0_i32 = arith.constant 0 : i32
    %c0_i32_0 = arith.constant 0 : i32
    return %c0_i32, %arg1 : i32, i32
  }
  func.func @transform_11(%arg0: i32, %arg1: i32, %arg2: memref<4xi32, #tpu.memory_space<smem>>, %arg3: memref<4xi32, #tpu.memory_space<smem>>) -> (i32, i32, i32) {
    %c0_i32 = arith.constant 0 : i32
    %c0_i32_0 = arith.constant 0 : i32
    return %arg0, %arg1, %c0_i32 : i32, i32, i32
  }
  func.func @transform_12(%arg0: i32, %arg1: i32, %arg2: memref<4xi32, #tpu.memory_space<smem>>, %arg3: memref<4xi32, #tpu.memory_space<smem>>) -> (i32, i32) {
    %c0_i32 = arith.constant 0 : i32
    return %arg0, %arg1 : i32, i32
  }
}

</mosaic_0001>

<llo_original>
// kernel: evoformer_forward.5
$region0: #{evoformer_forward.5}
  #allocation0 [shape = 'u32[]', space=smem, size = 0x4, offset = 0x4, fixed_abs, tag = 'smem constant byte address 0x4 - core index']
  #allocation1 [shape = 'u32[72,128]{1,0:T(1,128)}', space=vmem, size = 0x9000, scoped, tag = 'internal scratch']
  %s0 = inlined_call_operand.vmem [shape: bf16[8,32,34], index: 0, kind: input, shape index: {}]
  %s1 = inlined_call_operand.vmem [shape: bf16[34,64], index: 1, kind: input, shape index: {}]
  %s2 = inlined_call_operand.vmem [shape: f32[32,64], index: 2, kind: input, shape index: {}]
  %s3 = inlined_call_operand.vmem [shape: f32[8,2048], index: 3, kind: output, shape index: {}]
  %s4 = sld [smem:[#allocation0]]
  $region86: #{evoformer_forward.5} parent=0
    _
  %s6 = ssub.s32 1, %s4
  %s7 = scalar_select 0, %s6, %s4
  $region1: #{evoformer_forward.5} parent=0
    #allocation2 [shape = 'u8[65536]{0}', space=vmem, size = 0x10000, scoped, tag = 'input window, operand 0']
    loop: start=0, step=1, limit=4
    $region2: #{evoformer_forward.5} parent=1 // loop_pre_header
      _
    $region3: #{evoformer_forward.5} parent=1 // loop_header
      %s9 = sphi 0, %s13
      %p10 = scmp.ge.s32.totalorder %s9, 4
      %s16 = sphi 0, %s28
      %s17 = sphi 0, %s24
      %s18 = sphi 0, %s16
      %s19 = sphi 0, %s17
      %s20 = sphi 0, %s18
      %s21 = sphi 0, %s19
      %s33 = sphi 0, %s35
      %s36 = sphi 0, %s33
      %s37 = sphi 0, %s36
      %s53 = sphi 0, %s37
      %s57 = sphi 0, %s57
      %s59 = sphi 0, %s57
      %s60 = sphi 0, %s59
      %s74 = sphi 0, %s60
      %s80 = sphi 0, %s82
      %s83 = sphi 0, %s80
      %s84 = sphi 0, %s83
      %s100 = sphi 0, %s84
      %s108 = sphi 0, %s110
      %s111 = sphi 0, %s108
      %s112 = sphi 0, %s111
      %s128 = sphi 0, %s112
    $region4: #{evoformer_forward.5} parent=1 // loop_header_branch
      %12 = sbr.rel (%p10) target = $region8
    $region5: #{evoformer_forward.5} parent=1 // loop_body
      %s14 = ssub.s32 %s9, 1
      %s15 = ssub.s32 %s9, 2
      %s22 = sadd.s32 1, %s17
      %p23 = scmp.ge.s32.totalorder %s22, 2
      %s24 = scalar_select %p23, 0, %s22
      %s25 = sadd.s32 1, %s16
      %s26 = scalar_select %p23, %s25, %s16
      %p27 = scmp.ge.s32.totalorder %s26, 1
      %s28 = scalar_select %p27, 0, %s26
      %s29 = ssub.s32 %s16, %s28
      %s30 = ssub.s32 %s17, %s24
      %s31 = sor.u32 %s29, %s30
      %p32 = scmp.eq.s32.totalorder %s31, 0
      %s34 = sadd.s32 %s33, 1
      %s35 = scalar_select %p32, %s33, %s34
      %p38 = pneg %p32
      %p39 = scmp.eq.s32.totalorder %s9, 1
      %p40 = por %p38, %p39
      %p41 = scmp.ne.s32.totalorder %s33, %s36
      %p42 = scmp.eq.s32.totalorder %s9, 0
      %p43 = por %p41, %p42
      %p44 = scmp.ne.s32.totalorder %s33, %s36
      %p45 = scmp.eq.s32.totalorder %s14, 1
      %p46 = por %p44, %p45
      %p47 = scmp.ne.s32.totalorder %s36, %s37
      %p48 = scmp.eq.s32.totalorder %s14, 0
      %p49 = por %p47, %p48
      %p50 = scmp.ne.s32.totalorder %s36, %s37
      %p51 = scmp.eq.s32.totalorder %s15, 1
      %p52 = por %p50, %p51
      %p54 = scmp.ne.s32.totalorder %s37, %s53
      %p55 = scmp.eq.s32.totalorder %s15, 0
      %p56 = por %p54, %p55
      %s58 = sadd.s32 %s57, 1
      %p61 = scmp.eq.s32.totalorder %s9, 1
      %p62 = scmp.ne.s32.totalorder %s57, %s59
      %p63 = scmp.eq.s32.totalorder %s9, 0
      %p64 = por %p62, %p63
      %p65 = scmp.ne.s32.totalorder %s57, %s59
      %p66 = scmp.eq.s32.totalorder %s14, 1
      %p67 = por %p65, %p66
      %p68 = scmp.ne.s32.totalorder %s59, %s60
      %p69 = scmp.eq.s32.totalorder %s14, 0
      %p70 = por %p68, %p69
      %p71 = scmp.ne.s32.totalorder %s59, %s60
      %p72 = scmp.eq.s32.totalorder %s15, 1
      %p73 = por %p71, %p72
      %p75 = scmp.ne.s32.totalorder %s60, %s74
      %p76 = scmp.eq.s32.totalorder %s15, 0
      %p77 = por %p75, %p76
      %s78 = ssub.s32 %s17, %s24
      %p79 = scmp.eq.s32.totalorder %s78, 0
      %s81 = sadd.s32 %s80, 1
      %s82 = scalar_select %p79, %s80, %s81
      %p85 = pneg %p79
      %p86 = scmp.eq.s32.totalorder %s9, 1
      %p87 = por %p85, %p86
      %p88 = scmp.ne.s32.totalorder %s80, %s83
      %p89 = scmp.eq.s32.totalorder %s9, 0
      %p90 = por %p88, %p89
      %p91 = scmp.ne.s32.totalorder %s80, %s83
      %p92 = scmp.eq.s32.totalorder %s14, 1
      %p93 = por %p91, %p92
      %p94 = scmp.ne.s32.totalorder %s83, %s84
      %p95 = scmp.eq.s32.totalorder %s14, 0
      %p96 = por %p94, %p95
      %p97 = scmp.ne.s32.totalorder %s83, %s84
      %p98 = scmp.eq.s32.totalorder %s15, 1
      %p99 = por %p97, %p98
      %p101 = scmp.ne.s32.totalorder %s84, %s100
      %p102 = scmp.eq.s32.totalorder %s15, 0
      %p103 = por %p101, %p102
      %s104 = ssub.s32 %s16, %s28
      %s105 = ssub.s32 %s17, %s24
      %s106 = sor.u32 %s104, %s105
      %p107 = scmp.eq.s32.totalorder %s106, 0
      %s109 = sadd.s32 %s108, 1
      %s110 = scalar_select %p107, %s108, %s109
      %p113 = pneg %p107
      %p114 = scmp.eq.s32.totalorder %s9, 1
      %p115 = por %p113, %p114
      %p116 = scmp.ne.s32.totalorder %s108, %s111
      %p117 = scmp.eq.s32.totalorder %s9, 0
      %p118 = por %p116, %p117
      %p119 = scmp.ne.s32.totalorder %s108, %s111
      %p120 = scmp.eq.s32.totalorder %s14, 1
      %p121 = por %p119, %p120
      %p122 = scmp.ne.s32.totalorder %s111, %s112
      %p123 = scmp.eq.s32.totalorder %s14, 0
      %p124 = por %p122, %p123
      %p125 = scmp.ne.s32.totalorder %s111, %s112
      %p126 = scmp.eq.s32.totalorder %s15, 1
      %p127 = por %p125, %p126
      %p129 = scmp.ne.s32.totalorder %s112, %s128
      %p130 = scmp.eq.s32.totalorder %s15, 0
      %p131 = por %p129, %p130
      %p132 = scmp.le.s32.totalorder 1, %s9
      %p133 = scmp.lt.s32.totalorder %s9, 3
      %p134 = pnand %p132, %p133
      %p135 = pneg %p134
      // Predicated region
      $region9: #{evoformer_forward.5} parent=5 // pred_check
        _
      $region10: #{evoformer_forward.5} parent=5 // pred_check_branch
        %137 = sbr.rel (%p134) target = $region12
      $region11: #{evoformer_forward.5} parent=5 // pred_region
        %s138 = ssub.s32 %s9, 1
        // Predicated region
        $region13: #{evoformer_forward.5} parent=11 // pred_check
          %p139 = pneg %p70
        $region14: #{evoformer_forward.5} parent=11 // pred_check_branch
          %141 = sbr.rel (%p139) target = $region16
        $region15: #{evoformer_forward.5} parent=11 // pred_region
          _
        $region16: #{evoformer_forward.5} parent=11 // pred_fallthru
          _
      $region12: #{evoformer_forward.5} parent=5 // pred_fallthru
        _
      %p142 = scmp.lt.s32.totalorder %s9, 2
      // Predicated region
      $region17: #{evoformer_forward.5} parent=5 // pred_check
        %p143 = pneg %p142
      $region18: #{evoformer_forward.5} parent=5 // pred_check_branch
        %145 = sbr.rel (%p143) target = $region20
      $region19: #{evoformer_forward.5} parent=5 // pred_region
        // Predicated region
        $region21: #{evoformer_forward.5} parent=19 // pred_check
          %p146 = pneg %p43
        $region22: #{evoformer_forward.5} parent=19 // pred_check_branch
          %148 = sbr.rel (%p146) target = $region24
        $region23: #{evoformer_forward.5} parent=19 // pred_region
          %s149 = sand.u32 %s33, 1
          %s150 = sand.u32 %s33, 1
          %s151 = smul.addr %s150, 64
          %s152 = scalar_lea.vmem [#allocation2], %s151
          %s153 = smul.u32 8, %s16
          %s154 = smul.u32 2, %s17
          %s155 = smul.addr %s153, 4
          %s156 = sadd.s32 %s154, %s155
          %s157 = smul.addr %s156, 4
          %s158 = scalar_lea.vmem %s0, %s157
          // Predicated region
          $region25: #{evoformer_forward.5} parent=23 // pred_check
            _
          $region26: #{evoformer_forward.5} parent=23 // pred_check_branch
            %160 = sbr.rel (0) target = $region28
          $region27: #{evoformer_forward.5} parent=23 // pred_region
            // Predicated region
            $region29: #{evoformer_forward.5} parent=27 // pred_check
              _
            $region30: #{evoformer_forward.5} parent=27 // pred_check_branch
              %162 = sbr.rel target = $region32
            $region31: #{evoformer_forward.5} parent=27 // pred_region
              // Predicated region
              $region44: #{evoformer_forward.5} parent=31 // pred_check
                _
              $region45: #{evoformer_forward.5} parent=31 // pred_check_branch
                %208 = sbr.rel (0) target = $region47
              $region46: #{evoformer_forward.5} parent=31 // pred_region
                loop: start=0, step=1, limit=1
                $region48: #{evoformer_forward.5} parent=46 // loop_pre_header
                  _
                $region49: #{evoformer_forward.5} parent=46 // loop_header
                  %s210 = sphi 0, %s214
                  %p211 = scmp.ge.s32.totalorder %s210, 1
                  %s215 = sphi %s158, %s158
                  %s216 = sphi %s152, %s152
                $region50: #{evoformer_forward.5} parent=46 // loop_header_branch
                  %213 = sbr.rel (%p211) target = $region54
                $region51: #{evoformer_forward.5} parent=46 // loop_body
                  _
                $region52: #{evoformer_forward.5} parent=46 // loop_footer
                  %s214 = sadd.s32 1, %s210
                $region53: #{evoformer_forward.5} parent=46 // loop_footer_branch
                  %209 = sbr.rel target = $region49
                $region54: #{evoformer_forward.5} parent=46 // loop_exit
                  _
                %s218 = ssub.s32 16, 1
                loop: start=0, step=1, limit=1
                $region55: #{evoformer_forward.5} parent=46 // loop_pre_header
                  _
                $region56: #{evoformer_forward.5} parent=46 // loop_header
                  %s220 = sphi 0, %s224
                  %p221 = scmp.ge.s32.totalorder %s220, 1
                  %s225 = sphi %s158, %s158
                  %s226 = sphi %s152, %s152
                $region57: #{evoformer_forward.5} parent=46 // loop_header_branch
                  %223 = sbr.rel (%p221) target = $region61
                $region58: #{evoformer_forward.5} parent=46 // loop_body
                  %v227 = vld [vmem:[%s225] sm:%s218]
                  %228 = vst [vmem:[%s226] sm:%s218] %v227
                  %v229 = vld [vmem:[%s225 + $0x4] sm:%s218]
                  %230 = vst [vmem:[%s226 + $0x4] sm:%s218] %v229
                  %v231 = vld [vmem:[%s225 + $0x10] sm:%s218]
                  %232 = vst [vmem:[%s226 + $0x8] sm:%s218] %v231
                  %v233 = vld [vmem:[%s225 + $0x14] sm:%s218]
                  %234 = vst [vmem:[%s226 + $0xc] sm:%s218] %v233
                  %v235 = vld [vmem:[%s225 + $0x20] sm:%s218]
                  %236 = vst [vmem:[%s226 + $0x10] sm:%s218] %v235
                  %v237 = vld [vmem:[%s225 + $0x24] sm:%s218]
                  %238 = vst [vmem:[%s226 + $0x14] sm:%s218] %v237
                  %v239 = vld [vmem:[%s225 + $0x30] sm:%s218]
                  %240 = vst [vmem:[%s226 + $0x18] sm:%s218] %v239
                  %v241 = vld [vmem:[%s225 + $0x34] sm:%s218]
                  %242 = vst [vmem:[%s226 + $0x1c] sm:%s218] %v241
                  %v243 = vld [vmem:[%s225 + $0x40] sm:%s218]
                  %244 = vst [vmem:[%s226 + $0x20] sm:%s218] %v243
                  %v245 = vld [vmem:[%s225 + $0x44] sm:%s218]
                  %246 = vst [vmem:[%s226 + $0x24] sm:%s218] %v245
                  %v247 = vld [vmem:[%s225 + $0x50] sm:%s218]
                  %248 = vst [vmem:[%s226 + $0x28] sm:%s218] %v247
                  %v249 = vld [vmem:[%s225 + $0x54] sm:%s218]
                  %250 = vst [vmem:[%s226 + $0x2c] sm:%s218] %v249
                  %v251 = vld [vmem:[%s225 + $0x60] sm:%s218]
                  %252 = vst [vmem:[%s226 + $0x30] sm:%s218] %v251
                  %v253 = vld [vmem:[%s225 + $0x64] sm:%s218]
                  %254 = vst [vmem:[%s226 + $0x34] sm:%s218] %v253
                  %v255 = vld [vmem:[%s225 + $0x70] sm:%s218]
                  %256 = vst [vmem:[%s226 + $0x38] sm:%s218] %v255
                  %v257 = vld [vmem:[%s225 + $0x74] sm:%s218]
                  %258 = vst [vmem:[%s226 + $0x3c] sm:%s218] %v257
                $region59: #{evoformer_forward.5} parent=46 // loop_footer
                  %s224 = sadd.s32 1, %s220
                $region60: #{evoformer_forward.5} parent=46 // loop_footer_branch
                  %219 = sbr.rel target = $region56
                $region61: #{evoformer_forward.5} parent=46 // loop_exit
                  _
              $region47: #{evoformer_forward.5} parent=31 // pred_fallthru
                _
            $region32: #{evoformer_forward.5} parent=27 // pred_fallthru
              _
            // Predicated region
            $region33: #{evoformer_forward.5} parent=27 // pred_check
              _
            $region34: #{evoformer_forward.5} parent=27 // pred_check_branch
              %164 = sbr.rel (0) target = $region36
            $region35: #{evoformer_forward.5} parent=27 // pred_region
              %s166 = ssub.s32 16, 1
              loop: start=0, step=1, limit=1
              $region37: #{evoformer_forward.5} parent=35 // loop_pre_header
                _
              $region38: #{evoformer_forward.5} parent=35 // loop_header
                %s168 = sphi 0, %s172
                %p169 = scmp.ge.s32.totalorder %s168, 1
                %s173 = sphi %s158, %s158
                %s174 = sphi %s152, %s152
              $region39: #{evoformer_forward.5} parent=35 // loop_header_branch
                %171 = sbr.rel (%p169) target = $region43
              $region40: #{evoformer_forward.5} parent=35 // loop_body
                %v175 = vld [vmem:[%s173] sm:%s166]
                %176 = vst [vmem:[%s174] sm:%s166] %v175
                %v177 = vld [vmem:[%s173 + $0x4] sm:%s166]
                %178 = vst [vmem:[%s174 + $0x4] sm:%s166] %v177
                %v179 = vld [vmem:[%s173 + $0x10] sm:%s166]
                %180 = vst [vmem:[%s174 + $0x8] sm:%s166] %v179
                %v181 = vld [vmem:[%s173 + $0x14] sm:%s166]
                %182 = vst [vmem:[%s174 + $0xc] sm:%s166] %v181
                %v183 = vld [vmem:[%s173 + $0x20] sm:%s166]
                %184 = vst [vmem:[%s174 + $0x10] sm:%s166] %v183
                %v185 = vld [vmem:[%s173 + $0x24] sm:%s166]
                %186 = vst [vmem:[%s174 + $0x14] sm:%s166] %v185
                %v187 = vld [vmem:[%s173 + $0x30] sm:%s166]
                %188 = vst [vmem:[%s174 + $0x18] sm:%s166] %v187
                %v189 = vld [vmem:[%s173 + $0x34] sm:%s166]
                %190 = vst [vmem:[%s174 + $0x1c] sm:%s166] %v189
                %v191 = vld [vmem:[%s173 + $0x40] sm:%s166]
                %192 = vst [vmem:[%s174 + $0x20] sm:%s166] %v191
                %v193 = vld [vmem:[%s173 + $0x44] sm:%s166]
                %194 = vst [vmem:[%s174 + $0x24] sm:%s166] %v193
                %v195 = vld [vmem:[%s173 + $0x50] sm:%s166]
                %196 = vst [vmem:[%s174 + $0x28] sm:%s166] %v195
                %v197 = vld [vmem:[%s173 + $0x54] sm:%s166]
                %198 = vst [vmem:[%s174 + $0x2c] sm:%s166] %v197
                %v199 = vld [vmem:[%s173 + $0x60] sm:%s166]
                %200 = vst [vmem:[%s174 + $0x30] sm:%s166] %v199
                %v201 = vld [vmem:[%s173 + $0x64] sm:%s166]
                %202 = vst [vmem:[%s174 + $0x34] sm:%s166] %v201
                %v203 = vld [vmem:[%s173 + $0x70] sm:%s166]
                %204 = vst [vmem:[%s174 + $0x38] sm:%s166] %v203
                %v205 = vld [vmem:[%s173 + $0x74] sm:%s166]
                %206 = vst [vmem:[%s174 + $0x3c] sm:%s166] %v205
              $region41: #{evoformer_forward.5} parent=35 // loop_footer
                %s172 = sadd.s32 1, %s168
              $region42: #{evoformer_forward.5} parent=35 // loop_footer_branch
                %167 = sbr.rel target = $region38
              $region43: #{evoformer_forward.5} parent=35 // loop_exit
                _
            $region36: #{evoformer_forward.5} parent=27 // pred_fallthru
              _
          $region28: #{evoformer_forward.5} parent=23 // pred_fallthru
            _
          %259 = vnop
        $region24: #{evoformer_forward.5} parent=19 // pred_fallthru
          _
        // Predicated region
        $region62: #{evoformer_forward.5} parent=19 // pred_check
          %p260 = pneg %p90
        $region63: #{evoformer_forward.5} parent=19 // pred_check_branch
          %262 = sbr.rel (%p260) target = $region65
        $region64: #{evoformer_forward.5} parent=19 // pred_region
          %s263 = smul.u32 2, %s17
          %p264 = scmp.lt.s32.totalorder %s263, 3
          %s265 = scalar_select %p264, %s263, 3
          %s266 = smul.addr %s265, 8
          %s267 = scalar_lea.vmem %s2, %s266
          %s268 = smul.u32 2, %s17
        $region65: #{evoformer_forward.5} parent=19 // pred_fallthru
          _
      $region20: #{evoformer_forward.5} parent=5 // pred_fallthru
        _
      %p269 = scmp.le.s32.totalorder 1, %s9
      %p270 = scmp.lt.s32.totalorder %s9, 3
      %p271 = pnand %p269, %p270
      %p272 = pneg %p271
      // Predicated region
      $region66: #{evoformer_forward.5} parent=5 // pred_check
        _
      $region67: #{evoformer_forward.5} parent=5 // pred_check_branch
        %274 = sbr.rel (%p271) target = $region69
      $region68: #{evoformer_forward.5} parent=5 // pred_region
        %s275 = ssub.s32 %s9, 1
        %s276 = sand.u32 %s36, 1
        %s277 = sand.u32 %s36, 1
        %s278 = smul.addr %s277, 64
        %s279 = scalar_lea.vmem [#allocation2], %s278
        // Predicated region
        $region70: #{evoformer_forward.5} parent=68 // pred_check
          %p280 = pneg %p49
        $region71: #{evoformer_forward.5} parent=68 // pred_check_branch
          %282 = sbr.rel (%p280) target = $region73
        $region72: #{evoformer_forward.5} parent=68 // pred_region
          _
        $region73: #{evoformer_forward.5} parent=68 // pred_fallthru
          _
        %s283 = sand.u32 %s36, 1
        %s284 = sand.u32 %s36, 1
        %s285 = smul.addr %s284, 64
        %s286 = scalar_lea.vmem [#allocation2], %s285
        %p287 = pneg %p49
        %p288 = pneg %p46
        %p289 = pneg %p70
        %p290 = pneg %p67
        %s291 = smul.u32 2, %s19
        %p292 = scmp.lt.s32.totalorder %s291, 3
        %s293 = scalar_select %p292, %s291, 3
        %s294 = smul.addr %s293, 8
        %s295 = scalar_lea.vmem %s2, %s294
        %p296 = pneg %p96
        %p297 = pneg %p93
        %p298 = pneg %p124
        %p299 = pneg %p121
        %s300 = smul.u32 8, %s19
        %p301 = scmp.lt.s32.totalorder %s18, 0
        %s302 = scalar_select %p301, %s18, 0
        %p303 = scmp.lt.s32.totalorder %s300, 15
        %s304 = scalar_select %p303, %s300, 15
        %s305 = smul.addr %s302, 16
        %s306 = sadd.s32 %s304, %s305
        %s307 = smul.addr %s306, 8
        %s308 = scalar_lea.vmem %s3, %s307
        %s309 = smul.u32 8, %s18
        %s310 = smul.u32 2, %s19
        %s311 = smul.u32 2, %s19
        %p312 = scmp.lt.s32.totalorder %s311, 3
        %s313 = scalar_select %p312, %s311, 3
        %s314 = smul.addr %s313, 8
        %s315 = scalar_lea.vmem %s2, %s314
        %s316 = smul.u32 2, %s19
        %s317 = smul.u32 8, %s19
        %p318 = scmp.lt.s32.totalorder %s18, 0
        %s319 = scalar_select %p318, %s18, 0
        %p320 = scmp.lt.s32.totalorder %s317, 15
        %s321 = scalar_select %p320, %s317, 15
        %s322 = smul.addr %s319, 16
        %s323 = sadd.s32 %s321, %s322
        %s324 = smul.addr %s323, 8
        %s325 = scalar_lea.vmem %s3, %s324
        %s326 = smul.u32 8, %s19
        %v328 = vld [vmem:[%s279] sm:$0xf]
        %v329 = vld [vmem:[%s279 + $0x4] sm:$0xf]
        %v330 = vld [vmem:[%s279 + $0x8] sm:$0xf]
        %v331 = vld [vmem:[%s279 + $0xc] sm:$0xf]
        %v332 = vld [vmem:[%s279 + $0x10] sm:$0xf]
        %v333 = vld [vmem:[%s279 + $0x14] sm:$0xf]
        %v334 = vld [vmem:[%s279 + $0x18] sm:$0xf]
        %v335 = vld [vmem:[%s279 + $0x1c] sm:$0xf]
        %v336 = vld [vmem:[%s279 + $0x20] sm:$0xf]
        %v337 = vld [vmem:[%s279 + $0x24] sm:$0xf]
        %v338 = vld [vmem:[%s279 + $0x28] sm:$0xf]
        %v339 = vld [vmem:[%s279 + $0x2c] sm:$0xf]
        %v340 = vld [vmem:[%s279 + $0x30] sm:$0xf]
        %v341 = vld [vmem:[%s279 + $0x34] sm:$0xf]
        %v342 = vld [vmem:[%s279 + $0x38] sm:$0xf]
        %v343 = vld [vmem:[%s279 + $0x3c] sm:$0xf]
        %v344 = vld [vmem:[%s1] sm:$0xf]
        %v345 = vld [vmem:[%s1 + $0x4] sm:$0xf]
        %v346 = vld [vmem:[%s1 + $0x8] sm:$0xf]
        %v347 = vld [vmem:[%s1 + $0xc] sm:$0xf]
        %v348 = vld [vmem:[%s1 + $0x10] sm:$0x1]
        %v365 = vunpack.c.l.b16 %v328
        %v366 = vunpack.c.l.b16 %v329
        %v367 = vunpack.c.l.b16 %v330
        %v368 = vunpack.c.l.b16 %v331
        %v369 = vunpack.c.l.b16 %v332
        %v370 = vunpack.c.l.b16 %v333
        %v371 = vunpack.c.l.b16 %v334
        %v372 = vunpack.c.l.b16 %v335
        %v373 = vunpack.c.l.b16 %v336
        %v374 = vunpack.c.l.b16 %v337
        %v375 = vunpack.c.l.b16 %v338
        %v376 = vunpack.c.l.b16 %v339
        %v377 = vunpack.c.l.b16 %v340
        %v378 = vunpack.c.l.b16 %v341
        %v379 = vunpack.c.l.b16 %v342
        %v380 = vunpack.c.l.b16 %v343
        %v381 = vpack.c.b16 %v366, %v365
        %v382 = vpack.c.b16 %v368, %v367
        %v383 = vpack.c.b16 %v370, %v369
        %v384 = vpack.c.b16 %v372, %v371
        %v385 = vpack.c.b16 %v374, %v373
        %v386 = vpack.c.b16 %v376, %v375
        %v387 = vpack.c.b16 %v378, %v377
        %v388 = vpack.c.b16 %v380, %v379
        %v394 = vunpack.c.l.b16 %v344
        %v395 = vunpack.c.l.b16 %v345
        %v396 = vunpack.c.l.b16 %v346
        %v397 = vunpack.c.l.b16 %v347
        %v398 = vunpack.c.l.b16 %v348
        %v399 = vpack.c.b16 %v395, %v394
        %v400 = vpack.c.b16 %v397, %v396
        %v401 = vpack.c.b16 %v398, %v398
        %vm404 = vcmask 277504
        %v406 = vsel %vm404, %v381, 0
        %v409 = vsel %vm404, %v382, 0
        %v412 = vsel %vm404, %v383, 0
        %v415 = vsel %vm404, %v384, 0
        %v418 = vsel %vm404, %v385, 0
        %v421 = vsel %vm404, %v386, 0
        %v424 = vsel %vm404, %v387, 0
        %v427 = vsel %vm404, %v388, 0
        %vm429 = vcmask 1040384
        %v431 = vsel %vm429, %v401, 0
        %433 = vmatpush.bf16.msra.mxu0 0
        %434 = vmatpush.bf16.msra.mxu0 0
        %435 = vmatpush.bf16.msra.mxu0 0
        %436 = vmatpush.bf16.msra.mxu0 0
        %437 = vmatpush.bf16.msra.mxu0 0
        %438 = vmatpush.bf16.msra.mxu0 %v431
        %439 = vmatpush.bf16.msra.mxu0 %v400
        %440 = vmatpush.bf16.msra.mxu0 %v399
        %441 = vmatmul.bf16.gmra.mxu0 %v406
        %v442 = vpop.f32.mrf.mxu0
        %v443 = vadd.f32 0.0, %v442
        %v444 = vpop.f32.mrf.mxu0
        %v445 = vadd.f32 0.0, %v444
        %446 = vmatmul.bf16.gmra.mxu0 %v409
        %v447 = vpop.f32.mrf.mxu0
        %v448 = vadd.f32 0.0, %v447
        %v449 = vpop.f32.mrf.mxu0
        %v450 = vadd.f32 0.0, %v449
        %451 = vmatmul.bf16.gmra.mxu0 %v412
        %v452 = vpop.f32.mrf.mxu0
        %v453 = vadd.f32 0.0, %v452
        %v454 = vpop.f32.mrf.mxu0
        %v455 = vadd.f32 0.0, %v454
        %456 = vmatmul.bf16.gmra.mxu0 %v415
        %v457 = vpop.f32.mrf.mxu0
        %v458 = vadd.f32 0.0, %v457
        %v459 = vpop.f32.mrf.mxu0
        %v460 = vadd.f32 0.0, %v459
        %461 = vmatmul.bf16.gmra.mxu0 %v418
        %v462 = vpop.f32.mrf.mxu0
        %v463 = vadd.f32 0.0, %v462
        %v464 = vpop.f32.mrf.mxu0
        %v465 = vadd.f32 0.0, %v464
        %466 = vmatmul.bf16.gmra.mxu0 %v421
        %v467 = vpop.f32.mrf.mxu0
        %v468 = vadd.f32 0.0, %v467
        %v469 = vpop.f32.mrf.mxu0
        %v470 = vadd.f32 0.0, %v469
        %471 = vmatmul.bf16.gmra.mxu0 %v424
        %v472 = vpop.f32.mrf.mxu0
        %v473 = vadd.f32 0.0, %v472
        %v474 = vpop.f32.mrf.mxu0
        %v475 = vadd.f32 0.0, %v474
        %476 = vmatmul.bf16.gmra.mxu0 %v427
        %v477 = vpop.f32.mrf.mxu0
        %v478 = vadd.f32 0.0, %v477
        %v479 = vpop.f32.mrf.mxu0
        %v480 = vadd.f32 0.0, %v479
        %481 = vdwg.mxu0
        %v482 = vld [vmem:[%s315] sm:$0xff]
        %v483 = vld [vmem:[%s315 + $0x8] sm:$0xff]
        %v484 = vadd.f32 %v443, %v482
        %v485 = vadd.f32 %v445, %v483
        %v486 = vadd.f32 %v448, %v482
        %v487 = vadd.f32 %v450, %v483
        %v488 = vadd.f32 %v453, %v482
        %v489 = vadd.f32 %v455, %v483
        %v490 = vadd.f32 %v458, %v482
        %v491 = vadd.f32 %v460, %v483
        %v492 = vadd.f32 %v463, %v482
        %v493 = vadd.f32 %v465, %v483
        %v494 = vadd.f32 %v468, %v482
        %v495 = vadd.f32 %v470, %v483
        %v496 = vadd.f32 %v473, %v482
        %v497 = vadd.f32 %v475, %v483
        %v498 = vadd.f32 %v478, %v482
        %v499 = vadd.f32 %v480, %v483
        %v500 = vrot.slane %v488, 4
        %vm501 = vcmask 1047556
        %v502 = vsel %vm501, %v500, %v484
        %v503 = vrot.slane %v484, 4
        %v504 = vsel %vm501, %v488, %v503
        %v506 = vunpack.c.l.s4 1983009808
        %v507 = vunpack.c.0.s8 %v506
        %v508 = vperm.slane %v502, %v507
        %v510 = vunpack.c.l.s4 1983009808
        %v511 = vunpack.c.0.s8 %v510
        %v512 = vperm.slane %v504, %v511
        %v513 = vrot.slane %v490, 4
        %v514 = vsel %vm501, %v513, %v486
        %v515 = vrot.slane %v486, 4
        %v516 = vsel %vm501, %v490, %v515
        %v518 = vunpack.c.l.s4 1983009808
        %v519 = vunpack.c.0.s8 %v518
        %v520 = vperm.slane %v514, %v519
        %v522 = vunpack.c.l.s4 1983009808
        %v523 = vunpack.c.0.s8 %v522
        %v524 = vperm.slane %v516, %v523
        %v525 = vrot.slane %v496, 4
        %v526 = vsel %vm501, %v525, %v492
        %v527 = vrot.slane %v492, 4
        %v528 = vsel %vm501, %v496, %v527
        %v530 = vunpack.c.l.s4 1983009808
        %v531 = vunpack.c.0.s8 %v530
        %v532 = vperm.slane %v526, %v531
        %v534 = vunpack.c.l.s4 1983009808
        %v535 = vunpack.c.0.s8 %v534
        %v536 = vperm.slane %v528, %v535
        %v537 = vrot.slane %v498, 4
        %v538 = vsel %vm501, %v537, %v494
        %v539 = vrot.slane %v494, 4
        %v540 = vsel %vm501, %v498, %v539
        %v542 = vunpack.c.l.s4 1983009808
        %v543 = vunpack.c.0.s8 %v542
        %v544 = vperm.slane %v538, %v543
        %v546 = vunpack.c.l.s4 1983009808
        %v547 = vunpack.c.0.s8 %v546
        %v548 = vperm.slane %v540, %v547
        %v549 = vrot.slane %v520, 4
        %v550 = vsel %vm501, %v549, %v508
        %v551 = vrot.slane %v508, 4
        %v552 = vsel %vm501, %v520, %v551
        %v554 = vunpack.c.l.s4 1934713408
        %v555 = vunpack.c.0.s8 %v554
        %v556 = vperm.slane %v550, %v555
        %v558 = vunpack.c.l.s4 1934713408
        %v559 = vunpack.c.0.s8 %v558
        %v560 = vperm.slane %v552, %v559
        %v561 = vrot.slane %v524, 4
        %v562 = vsel %vm501, %v561, %v512
        %v563 = vrot.slane %v512, 4
        %v564 = vsel %vm501, %v524, %v563
        %v566 = vunpack.c.l.s4 1934713408
        %v567 = vunpack.c.0.s8 %v566
        %v568 = vperm.slane %v562, %v567
        %v570 = vunpack.c.l.s4 1934713408
        %v571 = vunpack.c.0.s8 %v570
        %v572 = vperm.slane %v564, %v571
        %v573 = vrot.slane %v544, 4
        %v574 = vsel %vm501, %v573, %v532
        %v575 = vrot.slane %v532, 4
        %v576 = vsel %vm501, %v544, %v575
        %v578 = vunpack.c.l.s4 1934713408
        %v579 = vunpack.c.0.s8 %v578
        %v580 = vperm.slane %v574, %v579
        %v582 = vunpack.c.l.s4 1934713408
        %v583 = vunpack.c.0.s8 %v582
        %v584 = vperm.slane %v576, %v583
        %v585 = vrot.slane %v548, 4
        %v586 = vsel %vm501, %v585, %v536
        %v587 = vrot.slane %v536, 4
        %v588 = vsel %vm501, %v548, %v587
        %v590 = vunpack.c.l.s4 1934713408
        %v591 = vunpack.c.0.s8 %v590
        %v592 = vperm.slane %v586, %v591
        %v594 = vunpack.c.l.s4 1934713408
        %v595 = vunpack.c.0.s8 %v594
        %v596 = vperm.slane %v588, %v595
        %v597 = vrot.slane %v580, 4
        %v598 = vsel %vm501, %v597, %v556
        %v599 = vrot.slane %v556, 4
        %v600 = vsel %vm501, %v580, %v599
        %v601 = vrot.slane %v584, 4
        %v602 = vsel %vm501, %v601, %v560
        %v603 = vrot.slane %v560, 4
        %v604 = vsel %vm501, %v584, %v603
        %v605 = vrot.slane %v592, 4
        %v606 = vsel %vm501, %v605, %v568
        %v607 = vrot.slane %v568, 4
        %v608 = vsel %vm501, %v592, %v607
        %v609 = vrot.slane %v596, 4
        %v610 = vsel %vm501, %v609, %v572
        %v611 = vrot.slane %v572, 4
        %v612 = vsel %vm501, %v596, %v611
        %v613 = vrot.slane %v489, 4
        %v614 = vsel %vm501, %v613, %v485
        %v615 = vrot.slane %v485, 4
        %v616 = vsel %vm501, %v489, %v615
        %v618 = vunpack.c.l.s4 1983009808
        %v619 = vunpack.c.0.s8 %v618
        %v620 = vperm.slane %v614, %v619
        %v622 = vunpack.c.l.s4 1983009808
        %v623 = vunpack.c.0.s8 %v622
        %v624 = vperm.slane %v616, %v623
        %v625 = vrot.slane %v491, 4
        %v626 = vsel %vm501, %v625, %v487
        %v627 = vrot.slane %v487, 4
        %v628 = vsel %vm501, %v491, %v627
        %v630 = vunpack.c.l.s4 1983009808
        %v631 = vunpack.c.0.s8 %v630
        %v632 = vperm.slane %v626, %v631
        %v634 = vunpack.c.l.s4 1983009808
        %v635 = vunpack.c.0.s8 %v634
        %v636 = vperm.slane %v628, %v635
        %v637 = vrot.slane %v497, 4
        %v638 = vsel %vm501, %v637, %v493
        %v639 = vrot.slane %v493, 4
        %v640 = vsel %vm501, %v497, %v639
        %v642 = vunpack.c.l.s4 1983009808
        %v643 = vunpack.c.0.s8 %v642
        %v644 = vperm.slane %v638, %v643
        %v646 = vunpack.c.l.s4 1983009808
        %v647 = vunpack.c.0.s8 %v646
        %v648 = vperm.slane %v640, %v647
        %v649 = vrot.slane %v499, 4
        %v650 = vsel %vm501, %v649, %v495
        %v651 = vrot.slane %v495, 4
        %v652 = vsel %vm501, %v499, %v651
        %v654 = vunpack.c.l.s4 1983009808
        %v655 = vunpack.c.0.s8 %v654
        %v656 = vperm.slane %v650, %v655
        %v658 = vunpack.c.l.s4 1983009808
        %v659 = vunpack.c.0.s8 %v658
        %v660 = vperm.slane %v652, %v659
        %v661 = vrot.slane %v632, 4
        %v662 = vsel %vm501, %v661, %v620
        %v663 = vrot.slane %v620, 4
        %v664 = vsel %vm501, %v632, %v663
        %v666 = vunpack.c.l.s4 1934713408
        %v667 = vunpack.c.0.s8 %v666
        %v668 = vperm.slane %v662, %v667
        %v670 = vunpack.c.l.s4 1934713408
        %v671 = vunpack.c.0.s8 %v670
        %v672 = vperm.slane %v664, %v671
        %v673 = vrot.slane %v636, 4
        %v674 = vsel %vm501, %v673, %v624
        %v675 = vrot.slane %v624, 4
        %v676 = vsel %vm501, %v636, %v675
        %v678 = vunpack.c.l.s4 1934713408
        %v679 = vunpack.c.0.s8 %v678
        %v680 = vperm.slane %v674, %v679
        %v682 = vunpack.c.l.s4 1934713408
        %v683 = vunpack.c.0.s8 %v682
        %v684 = vperm.slane %v676, %v683
        %v685 = vrot.slane %v656, 4
        %v686 = vsel %vm501, %v685, %v644
        %v687 = vrot.slane %v644, 4
        %v688 = vsel %vm501, %v656, %v687
        %v690 = vunpack.c.l.s4 1934713408
        %v691 = vunpack.c.0.s8 %v690
        %v692 = vperm.slane %v686, %v691
        %v694 = vunpack.c.l.s4 1934713408
        %v695 = vunpack.c.0.s8 %v694
        %v696 = vperm.slane %v688, %v695
        %v697 = vrot.slane %v660, 4
        %v698 = vsel %vm501, %v697, %v648
        %v699 = vrot.slane %v648, 4
        %v700 = vsel %vm501, %v660, %v699
        %v702 = vunpack.c.l.s4 1934713408
        %v703 = vunpack.c.0.s8 %v702
        %v704 = vperm.slane %v698, %v703
        %v706 = vunpack.c.l.s4 1934713408
        %v707 = vunpack.c.0.s8 %v706
        %v708 = vperm.slane %v700, %v707
        %v709 = vrot.slane %v692, 4
        %v710 = vsel %vm501, %v709, %v668
        %v711 = vrot.slane %v668, 4
        %v712 = vsel %vm501, %v692, %v711
        %v713 = vrot.slane %v696, 4
        %v714 = vsel %vm501, %v713, %v672
        %v715 = vrot.slane %v672, 4
        %v716 = vsel %vm501, %v696, %v715
        %v717 = vrot.slane %v704, 4
        %v718 = vsel %vm501, %v717, %v680
        %v719 = vrot.slane %v680, 4
        %v720 = vsel %vm501, %v704, %v719
        %v721 = vrot.slane %v708, 4
        %v722 = vsel %vm501, %v721, %v684
        %v723 = vrot.slane %v684, 4
        %v724 = vsel %vm501, %v708, %v723
        %726 = vrot.lane.b32.xlu0 %v600, 64
        %v727 = vpop.permute.xlu0 %726
        %730 = vrot.lane.b32.xlu0 %v604, 64
        %v731 = vpop.permute.xlu0 %730
        %734 = vrot.lane.b32.xlu0 %v608, 64
        %v735 = vpop.permute.xlu0 %734
        %738 = vrot.lane.b32.xlu0 %v612, 64
        %v739 = vpop.permute.xlu0 %738
        %742 = vrot.lane.b32.xlu0 %v712, 64
        %v743 = vpop.permute.xlu0 %742
        %746 = vrot.lane.b32.xlu0 %v716, 64
        %v747 = vpop.permute.xlu0 %746
        %750 = vrot.lane.b32.xlu0 %v720, 64
        %v751 = vpop.permute.xlu0 %750
        %754 = vrot.lane.b32.xlu0 %v724, 64
        %v755 = vpop.permute.xlu0 %754
        %vm757 = vcmask 523264
        %v758 = vsel %vm757, %v598, %v727
        %v759 = vsel %vm757, %v602, %v731
        %v760 = vsel %vm757, %v606, %v735
        %v761 = vsel %vm757, %v610, %v739
        %v762 = vsel %vm757, %v710, %v743
        %v763 = vsel %vm757, %v714, %v747
        %v764 = vsel %vm757, %v718, %v751
        %v765 = vsel %vm757, %v722, %v755
        %766 = vst [vmem:[%s325] sm:$0xff] %v758
        %767 = vst [vmem:[%s325 + $0x8] sm:$0xff] %v759
        %768 = vst [vmem:[%s325 + $0x10] sm:$0xff] %v760
        %769 = vst [vmem:[%s325 + $0x18] sm:$0xff] %v761
        %770 = vst [vmem:[%s325 + $0x20] sm:$0xff] %v762
        %771 = vst [vmem:[%s325 + $0x28] sm:$0xff] %v763
        %772 = vst [vmem:[%s325 + $0x30] sm:$0xff] %v764
        %773 = vst [vmem:[%s325 + $0x38] sm:$0xff] %v765
        %s774 = smul.u32 8, %s19
        %p775 = scmp.lt.s32.totalorder %s18, 0
        %s776 = scalar_select %p775, %s18, 0
        %p777 = scmp.lt.s32.totalorder %s774, 15
        %s778 = scalar_select %p777, %s774, 15
        %s779 = smul.addr %s776, 16
        %s780 = sadd.s32 %s778, %s779
        %s781 = smul.addr %s780, 8
        %s782 = scalar_lea.vmem %s3, %s781
        // Predicated region
        $region74: #{evoformer_forward.5} parent=68 // pred_check
          %p783 = pneg %p121
        $region75: #{evoformer_forward.5} parent=68 // pred_check_branch
          %785 = sbr.rel (%p783) target = $region77
        $region76: #{evoformer_forward.5} parent=68 // pred_region
          %s786 = smul.u32 8, %s19
        $region77: #{evoformer_forward.5} parent=68 // pred_fallthru
          _
      $region69: #{evoformer_forward.5} parent=5 // pred_fallthru
        _
      %p787 = scmp.le.s32.totalorder 2, %s9
      // Predicated region
      $region78: #{evoformer_forward.5} parent=5 // pred_check
        %p788 = pneg %p787
      $region79: #{evoformer_forward.5} parent=5 // pred_check_branch
        %790 = sbr.rel (%p788) target = $region81
      $region80: #{evoformer_forward.5} parent=5 // pred_region
        %s791 = ssub.s32 %s9, 2
        // Predicated region
        $region82: #{evoformer_forward.5} parent=80 // pred_check
          %p792 = pneg %p127
        $region83: #{evoformer_forward.5} parent=80 // pred_check_branch
          %794 = sbr.rel (%p792) target = $region85
        $region84: #{evoformer_forward.5} parent=80 // pred_region
          %s795 = smul.u32 8, %s21
          %p796 = scmp.lt.s32.totalorder %s20, 0
          %s797 = scalar_select %p796, %s20, 0
          %p798 = scmp.lt.s32.totalorder %s795, 15
          %s799 = scalar_select %p798, %s795, 15
          %s800 = smul.addr %s797, 16
          %s801 = sadd.s32 %s799, %s800
          %s802 = smul.addr %s801, 8
          %s803 = scalar_lea.vmem %s3, %s802
        $region85: #{evoformer_forward.5} parent=80 // pred_fallthru
          _
      $region81: #{evoformer_forward.5} parent=5 // pred_fallthru
        _
    $region6: #{evoformer_forward.5} parent=1 // loop_footer
      %s13 = sadd.s32 1, %s9
    $region7: #{evoformer_forward.5} parent=1 // loop_footer_branch
      %8 = sbr.rel target = $region3
    $region8: #{evoformer_forward.5} parent=1 // loop_exit
      _

// kernel: evoformer_forward.3
$region0: #{evoformer_forward.3}
  #allocation0 [shape = 'u32[]', space=smem, size = 0x4, offset = 0x4, fixed_abs, tag = 'smem constant byte address 0x4 - core index']
  #allocation1 [shape = 'u32[72,128]{1,0:T(1,128)}', space=vmem, size = 0x9000, scoped, tag = 'internal scratch']
  %s0 = inlined_call_operand.vmem [shape: bf16[32,447], index: 0, kind: input, shape index: {}]
  %s1 = inlined_call_operand.hbm [shape: bf16[447,704], index: 1, kind: input, shape index: {}]
  %s2 = inlined_call_operand.vmem [shape: f32[32,384], index: 2, kind: input, shape index: {}]
  %s3 = inlined_call_operand.vmem [shape: f32[1,384], index: 3, kind: input, shape index: {}]
  %s4 = inlined_call_operand.vmem [shape: f32[1,384], index: 4, kind: input, shape index: {}]
  %s5 = inlined_call_operand.hbm [shape: bf16[384,384], index: 5, kind: input, shape index: {}]
  %s6 = inlined_call_operand.vmem [shape: f32[32,704], index: 6, kind: output, shape index: {}]
  %s7 = sld [smem:[#allocation0]]
  $region65: #{evoformer_forward.3} parent=0
    _
  %s9 = ssub.s32 1, %s7
  %s10 = scalar_select 0, %s9, %s7
  $region1: #{evoformer_forward.3} parent=0
    #allocation2 [shape = 'u8[688128]{0}', space=vmem, size = 0xa8000, scoped, tag = 'input window, operand 1, single buffered']
    #allocation3 [shape = 's32[2]{0}', space=sflag, size = 0x8, scoped, tag = 'scoped memory for evoformer_forward.3']
    #allocation4 [shape = 'u8[294912]{0}', space=vmem, size = 0x48000, scoped, tag = 'input window, operand 5, single buffered']
    #allocation5 [shape = 's32[1]{0}', space=sflag, size = 0x4, scoped, tag = 'scoped memory for evoformer_forward.3']
    %11 = vsyncpa [#allocation3], 0
    %12 = vsyncpa [#allocation5], 0
    loop: start=0, step=1, limit=4
    $region2: #{evoformer_forward.3} parent=1 // loop_pre_header
      _
    $region3: #{evoformer_forward.3} parent=1 // loop_header
      %s14 = sphi 0, %s18
      %p15 = scmp.ge.s32.totalorder %s14, 4
      %s24 = sphi 0, %s26
      %s27 = sphi 0, %s24
      %s28 = sphi 0, %s27
      %s44 = sphi 0, %s28
      %s48 = sphi 0, %s48
      %s50 = sphi 0, %s48
      %s51 = sphi 0, %s50
      %s65 = sphi 0, %s51
      %s71 = sphi 0, %s73
      %s74 = sphi 0, %s71
      %s75 = sphi 0, %s74
      %s91 = sphi 0, %s75
      %s95 = sphi 0, %s95
      %s97 = sphi 0, %s95
      %s98 = sphi 0, %s97
      %s112 = sphi 0, %s98
      %s116 = sphi 0, %s116
      %s118 = sphi 0, %s116
      %s119 = sphi 0, %s118
      %s133 = sphi 0, %s119
      %s137 = sphi 0, %s137
      %s139 = sphi 0, %s137
      %s140 = sphi 0, %s139
      %s154 = sphi 0, %s140
      %s160 = sphi 0, %s162
      %s163 = sphi 0, %s160
      %s164 = sphi 0, %s163
      %s180 = sphi 0, %s164
    $region4: #{evoformer_forward.3} parent=1 // loop_header_branch
      %17 = sbr.rel (%p15) target = $region8
    $region5: #{evoformer_forward.3} parent=1 // loop_body
      %s19 = ssub.s32 %s14, 1
      %s20 = ssub.s32 %s14, 2
      %s21 = sadd.s32 %s14, 1
      %s22 = ssub.s32 %s14, %s21
      %p23 = scmp.eq.s32.totalorder %s22, 0
      %s25 = sadd.s32 %s24, 1
      %s26 = scalar_select %p23, %s24, %s25
      %p29 = pneg %p23
      %p30 = scmp.eq.s32.totalorder %s14, 1
      %p31 = por %p29, %p30
      %p32 = scmp.ne.s32.totalorder %s24, %s27
      %p33 = scmp.eq.s32.totalorder %s14, 0
      %p34 = por %p32, %p33
      %p35 = scmp.ne.s32.totalorder %s24, %s27
      %p36 = scmp.eq.s32.totalorder %s19, 1
      %p37 = por %p35, %p36
      %p38 = scmp.ne.s32.totalorder %s27, %s28
      %p39 = scmp.eq.s32.totalorder %s19, 0
      %p40 = por %p38, %p39
      %p41 = scmp.ne.s32.totalorder %s27, %s28
      %p42 = scmp.eq.s32.totalorder %s20, 1
      %p43 = por %p41, %p42
      %p45 = scmp.ne.s32.totalorder %s28, %s44
      %p46 = scmp.eq.s32.totalorder %s20, 0
      %p47 = por %p45, %p46
      %s49 = sadd.s32 %s48, 1
      %p52 = scmp.eq.s32.totalorder %s14, 1
      %p53 = scmp.ne.s32.totalorder %s48, %s50
      %p54 = scmp.eq.s32.totalorder %s14, 0
      %p55 = por %p53, %p54
      %p56 = scmp.ne.s32.totalorder %s48, %s50
      %p57 = scmp.eq.s32.totalorder %s19, 1
      %p58 = por %p56, %p57
      %p59 = scmp.ne.s32.totalorder %s50, %s51
      %p60 = scmp.eq.s32.totalorder %s19, 0
      %p61 = por %p59, %p60
      %p62 = scmp.ne.s32.totalorder %s50, %s51
      %p63 = scmp.eq.s32.totalorder %s20, 1
      %p64 = por %p62, %p63
      %p66 = scmp.ne.s32.totalorder %s51, %s65
      %p67 = scmp.eq.s32.totalorder %s20, 0
      %p68 = por %p66, %p67
      %s69 = ssub.s32 %s14, %s21
      %p70 = scmp.eq.s32.totalorder %s69, 0
      %s72 = sadd.s32 %s71, 1
      %s73 = scalar_select %p70, %s71, %s72
      %p76 = pneg %p70
      %p77 = scmp.eq.s32.totalorder %s14, 1
      %p78 = por %p76, %p77
      %p79 = scmp.ne.s32.totalorder %s71, %s74
      %p80 = scmp.eq.s32.totalorder %s14, 0
      %p81 = por %p79, %p80
      %p82 = scmp.ne.s32.totalorder %s71, %s74
      %p83 = scmp.eq.s32.totalorder %s19, 1
      %p84 = por %p82, %p83
      %p85 = scmp.ne.s32.totalorder %s74, %s75
      %p86 = scmp.eq.s32.totalorder %s19, 0
      %p87 = por %p85, %p86
      %p88 = scmp.ne.s32.totalorder %s74, %s75
      %p89 = scmp.eq.s32.totalorder %s20, 1
      %p90 = por %p88, %p89
      %p92 = scmp.ne.s32.totalorder %s75, %s91
      %p93 = scmp.eq.s32.totalorder %s20, 0
      %p94 = por %p92, %p93
      %s96 = sadd.s32 %s95, 1
      %p99 = scmp.eq.s32.totalorder %s14, 1
      %p100 = scmp.ne.s32.totalorder %s95, %s97
      %p101 = scmp.eq.s32.totalorder %s14, 0
      %p102 = por %p100, %p101
      %p103 = scmp.ne.s32.totalorder %s95, %s97
      %p104 = scmp.eq.s32.totalorder %s19, 1
      %p105 = por %p103, %p104
      %p106 = scmp.ne.s32.totalorder %s97, %s98
      %p107 = scmp.eq.s32.totalorder %s19, 0
      %p108 = por %p106, %p107
      %p109 = scmp.ne.s32.totalorder %s97, %s98
      %p110 = scmp.eq.s32.totalorder %s20, 1
      %p111 = por %p109, %p110
      %p113 = scmp.ne.s32.totalorder %s98, %s112
      %p114 = scmp.eq.s32.totalorder %s20, 0
      %p115 = por %p113, %p114
      %s117 = sadd.s32 %s116, 1
      %p120 = scmp.eq.s32.totalorder %s14, 1
      %p121 = scmp.ne.s32.totalorder %s116, %s118
      %p122 = scmp.eq.s32.totalorder %s14, 0
      %p123 = por %p121, %p122
      %p124 = scmp.ne.s32.totalorder %s116, %s118
      %p125 = scmp.eq.s32.totalorder %s19, 1
      %p126 = por %p124, %p125
      %p127 = scmp.ne.s32.totalorder %s118, %s119
      %p128 = scmp.eq.s32.totalorder %s19, 0
      %p129 = por %p127, %p128
      %p130 = scmp.ne.s32.totalorder %s118, %s119
      %p131 = scmp.eq.s32.totalorder %s20, 1
      %p132 = por %p130, %p131
      %p134 = scmp.ne.s32.totalorder %s119, %s133
      %p135 = scmp.eq.s32.totalorder %s20, 0
      %p136 = por %p134, %p135
      %s138 = sadd.s32 %s137, 1
      %p141 = scmp.eq.s32.totalorder %s14, 1
      %p142 = scmp.ne.s32.totalorder %s137, %s139
      %p143 = scmp.eq.s32.totalorder %s14, 0
      %p144 = por %p142, %p143
      %p145 = scmp.ne.s32.totalorder %s137, %s139
      %p146 = scmp.eq.s32.totalorder %s19, 1
      %p147 = por %p145, %p146
      %p148 = scmp.ne.s32.totalorder %s139, %s140
      %p149 = scmp.eq.s32.totalorder %s19, 0
      %p150 = por %p148, %p149
      %p151 = scmp.ne.s32.totalorder %s139, %s140
      %p152 = scmp.eq.s32.totalorder %s20, 1
      %p153 = por %p151, %p152
      %p155 = scmp.ne.s32.totalorder %s140, %s154
      %p156 = scmp.eq.s32.totalorder %s20, 0
      %p157 = por %p155, %p156
      %s158 = ssub.s32 %s14, %s21
      %p159 = scmp.eq.s32.totalorder %s158, 0
      %s161 = sadd.s32 %s160, 1
      %s162 = scalar_select %p159, %s160, %s161
      %p165 = pneg %p159
      %p166 = scmp.eq.s32.totalorder %s14, 1
      %p167 = por %p165, %p166
      %p168 = scmp.ne.s32.totalorder %s160, %s163
      %p169 = scmp.eq.s32.totalorder %s14, 0
      %p170 = por %p168, %p169
      %p171 = scmp.ne.s32.totalorder %s160, %s163
      %p172 = scmp.eq.s32.totalorder %s19, 1
      %p173 = por %p171, %p172
      %p174 = scmp.ne.s32.totalorder %s163, %s164
      %p175 = scmp.eq.s32.totalorder %s19, 0
      %p176 = por %p174, %p175
      %p177 = scmp.ne.s32.totalorder %s163, %s164
      %p178 = scmp.eq.s32.totalorder %s20, 1
      %p179 = por %p177, %p178
      %p181 = scmp.ne.s32.totalorder %s164, %s180
      %p182 = scmp.eq.s32.totalorder %s20, 0
      %p183 = por %p181, %p182
      %p184 = scmp.le.s32.totalorder 1, %s14
      %p185 = scmp.lt.s32.totalorder %s14, 3
      %p186 = pnand %p184, %p185
      %p187 = pneg %p186
      // Predicated region
      $region9: #{evoformer_forward.3} parent=5 // pred_check
        _
      $region10: #{evoformer_forward.3} parent=5 // pred_check_branch
        %189 = sbr.rel (%p186) target = $region12
      $region11: #{evoformer_forward.3} parent=5 // pred_region
        %s190 = ssub.s32 %s14, 1
        // Predicated region
        $region13: #{evoformer_forward.3} parent=11 // pred_check
          %p191 = pneg %p61
        $region14: #{evoformer_forward.3} parent=11 // pred_check_branch
          %193 = sbr.rel (%p191) target = $region16
        $region15: #{evoformer_forward.3} parent=11 // pred_region
          %195 = vsyncadd [#allocation3], 0
          %s196 = sshll.u32 %s1, 4
          %s197 = int_to_ptr.hbm [resolvable:$true] %s196
          %s198 = sshll.u32 [#allocation2], 4
          %s199 = int_to_ptr.vmem [resolvable:$true] %s198
          %204 = dma.hbm_to_vmem [thread:$0]  %s197, 21504, %s199, [#allocation3], 384, 384, 24
        $region16: #{evoformer_forward.3} parent=11 // pred_fallthru
          _
        // Predicated region
        $region17: #{evoformer_forward.3} parent=11 // pred_check
          %p205 = pneg %p108
        $region18: #{evoformer_forward.3} parent=11 // pred_check_branch
          %207 = sbr.rel (%p205) target = $region20
        $region19: #{evoformer_forward.3} parent=11 // pred_region
          _
        $region20: #{evoformer_forward.3} parent=11 // pred_fallthru
          _
        // Predicated region
        $region21: #{evoformer_forward.3} parent=11 // pred_check
          %p208 = pneg %p129
        $region22: #{evoformer_forward.3} parent=11 // pred_check_branch
          %210 = sbr.rel (%p208) target = $region24
        $region23: #{evoformer_forward.3} parent=11 // pred_region
          _
        $region24: #{evoformer_forward.3} parent=11 // pred_fallthru
          _
        // Predicated region
        $region25: #{evoformer_forward.3} parent=11 // pred_check
          %p211 = pneg %p150
        $region26: #{evoformer_forward.3} parent=11 // pred_check_branch
          %213 = sbr.rel (%p211) target = $region28
        $region27: #{evoformer_forward.3} parent=11 // pred_region
          %215 = vsyncadd [#allocation5], 0
          %s216 = sshll.u32 %s5, 4
          %s217 = int_to_ptr.hbm [resolvable:$true] %s216
          %s218 = sshll.u32 [#allocation4], 4
          %s219 = int_to_ptr.vmem [resolvable:$true] %s218
          %224 = dma.hbm_to_vmem [thread:$0]  %s217, 9216, %s219, [#allocation5], 192, 192, 12
        $region28: #{evoformer_forward.3} parent=11 // pred_fallthru
          _
      $region12: #{evoformer_forward.3} parent=5 // pred_fallthru
        _
      %p225 = scmp.lt.s32.totalorder %s14, 2
      // Predicated region
      $region29: #{evoformer_forward.3} parent=5 // pred_check
        %p226 = pneg %p225
      $region30: #{evoformer_forward.3} parent=5 // pred_check_branch
        %228 = sbr.rel (%p226) target = $region32
      $region31: #{evoformer_forward.3} parent=5 // pred_region
        // Predicated region
        $region33: #{evoformer_forward.3} parent=31 // pred_check
          %p229 = pneg %p34
        $region34: #{evoformer_forward.3} parent=31 // pred_check_branch
          %231 = sbr.rel (%p229) target = $region36
        $region35: #{evoformer_forward.3} parent=31 // pred_region
          %s232 = smul.u32 2, %s14
          %p233 = scmp.lt.s32.totalorder %s232, 3
          %s234 = scalar_select %p233, %s232, 3
          %s235 = smul.addr %s234, 4
          %s236 = smul.addr %s235, 4
          %s237 = scalar_lea.vmem %s0, %s236
          %s238 = smul.u32 2, %s14
        $region36: #{evoformer_forward.3} parent=31 // pred_fallthru
          _
        // Predicated region
        $region37: #{evoformer_forward.3} parent=31 // pred_check
          %p239 = pneg %p81
        $region38: #{evoformer_forward.3} parent=31 // pred_check_branch
          %241 = sbr.rel (%p239) target = $region40
        $region39: #{evoformer_forward.3} parent=31 // pred_region
          %s242 = smul.u32 2, %s14
          %p243 = scmp.lt.s32.totalorder %s242, 3
          %s244 = scalar_select %p243, %s242, 3
          %s245 = smul.addr %s244, 3
          %s246 = smul.addr %s245, 8
          %s247 = scalar_lea.vmem %s2, %s246
          %s248 = smul.u32 2, %s14
        $region40: #{evoformer_forward.3} parent=31 // pred_fallthru
          _
      $region32: #{evoformer_forward.3} parent=5 // pred_fallthru
        _
      %p249 = scmp.le.s32.totalorder 1, %s14
      %p250 = scmp.lt.s32.totalorder %s14, 3
      %p251 = pnand %p249, %p250
      %p252 = pneg %p251
      // Predicated region
      $region41: #{evoformer_forward.3} parent=5 // pred_check
        _
      $region42: #{evoformer_forward.3} parent=5 // pred_check_branch
        %254 = sbr.rel (%p251) target = $region44
      $region43: #{evoformer_forward.3} parent=5 // pred_region
        %s255 = ssub.s32 %s14, 1
        // Predicated region
        $region45: #{evoformer_forward.3} parent=43 // pred_check
          %p256 = pneg %p61
        $region46: #{evoformer_forward.3} parent=43 // pred_check_branch
          %258 = sbr.rel (%p256) target = $region48
        $region47: #{evoformer_forward.3} parent=43 // pred_region
          %260 = dma.done [#allocation3], 21504
        $region48: #{evoformer_forward.3} parent=43 // pred_fallthru
          _
        // Predicated region
        $region49: #{evoformer_forward.3} parent=43 // pred_check
          %p261 = pneg %p150
        $region50: #{evoformer_forward.3} parent=43 // pred_check_branch
          %263 = sbr.rel (%p261) target = $region52
        $region51: #{evoformer_forward.3} parent=43 // pred_region
          %265 = dma.done [#allocation5], 9216
        $region52: #{evoformer_forward.3} parent=43 // pred_fallthru
          _
        %s266 = smul.u32 2, %s19
        %p267 = scmp.lt.s32.totalorder %s266, 3
        %s268 = scalar_select %p267, %s266, 3
        %s269 = smul.addr %s268, 4
        %s270 = smul.addr %s269, 4
        %s271 = scalar_lea.vmem %s0, %s270
        %p272 = pneg %p40
        %p273 = pneg %p37
        %p274 = pneg %p61
        %p275 = pneg %p58
        %s276 = smul.u32 2, %s19
        %p277 = scmp.lt.s32.totalorder %s276, 3
        %s278 = scalar_select %p277, %s276, 3
        %s279 = smul.addr %s278, 3
        %s280 = smul.addr %s279, 8
        %s281 = scalar_lea.vmem %s2, %s280
        %p282 = pneg %p87
        %p283 = pneg %p84
        %p284 = pneg %p108
        %p285 = pneg %p105
        %p286 = pneg %p129
        %p287 = pneg %p126
        %p288 = pneg %p150
        %p289 = pneg %p147
        %p290 = pneg %p176
        %p291 = pneg %p173
        %s292 = smul.u32 2, %s19
        %p293 = scmp.lt.s32.totalorder %s292, 3
        %s294 = scalar_select %p293, %s292, 3
        %s295 = smul.addr %s294, 6
        %s296 = smul.addr %s295, 8
        %s297 = scalar_lea.vmem %s6, %s296
        %s298 = smul.u32 2, %s19
        %p299 = scmp.lt.s32.totalorder %s298, 3
        %s300 = scalar_select %p299, %s298, 3
        %s301 = smul.addr %s300, 4
        %s302 = smul.addr %s301, 4
        %s303 = scalar_lea.vmem %s0, %s302
        %s304 = smul.u32 2, %s19
        %s305 = smul.u32 2, %s19
        %p306 = scmp.lt.s32.totalorder %s305, 3
        %s307 = scalar_select %p306, %s305, 3
        %s308 = smul.addr %s307, 3
        %s309 = smul.addr %s308, 8
        %s310 = scalar_lea.vmem %s2, %s309
        %s311 = smul.u32 2, %s19
        %s312 = smul.u32 2, %s19
        %p313 = scmp.lt.s32.totalorder %s312, 3
        %s314 = scalar_select %p313, %s312, 3
        %s315 = smul.addr %s314, 6
        %s316 = smul.addr %s315, 8
        %s317 = scalar_lea.vmem %s6, %s316
        %s318 = smul.u32 2, %s19
        %v320 = vld [vmem:[%s303] sm:$0xff]
        %v321 = vld [vmem:[%s303 + $0x8] sm:$0xff]
        %v322 = vld [vmem:[%s303 + $0x10] sm:$0xff]
        %v323 = vld [vmem:[%s303 + $0x18] sm:$0xff]
        %v324 = vld [vmem:[#allocation2] sm:$0xff]
        %v325 = vld [vmem:[#allocation2 + $0x8] sm:$0xff]
        %v326 = vld [vmem:[#allocation2 + $0x10] sm:$0xff]
        %v327 = vld [vmem:[#allocation2 + $0x18] sm:$0xff]
        %v328 = vld [vmem:[#allocation2 + $0x20] sm:$0xff]
        %v329 = vld [vmem:[#allocation2 + $0x28] sm:$0xff]
        %v330 = vld [vmem:[#allocation2 + $0x30] sm:$0xff]
        %v331 = vld [vmem:[#allocation2 + $0x38] sm:$0xff]
        %v332 = vld [vmem:[#allocation2 + $0x40] sm:$0xff]
        %v333 = vld [vmem:[#allocation2 + $0x48] sm:$0xff]
        %v334 = vld [vmem:[#allocation2 + $0x50] sm:$0xff]
        %v335 = vld [vmem:[#allocation2 + $0x58] sm:$0xff]
        %v336 = vld [vmem:[#allocation2 + $0x60] sm:$0xff]
        %v337 = vld [vmem:[#allocation2 + $0x68] sm:$0xff]
        %v338 = vld [vmem:[#allocation2 + $0x70] sm:$0xff]
        %v339 = vld [vmem:[#allocation2 + $0x78] sm:$0xff]
        %v340 = vld [vmem:[#allocation2 + $0x80] sm:$0xff]
        %v341 = vld [vmem:[#allocation2 + $0x88] sm:$0xff]
        %v342 = vld [vmem:[#allocation2 + $0x90] sm:$0xff]
        %v343 = vld [vmem:[#allocation2 + $0x98] sm:$0xff]
        %v344 = vld [vmem:[#allocation2 + $0xa0] sm:$0xff]
        %v345 = vld [vmem:[#allocation2 + $0xa8] sm:$0xff]
        %v346 = vld [vmem:[#allocation2 + $0xb0] sm:$0xff]
        %v347 = vld [vmem:[#allocation2 + $0xb8] sm:$0xff]
        %v348 = vld [vmem:[#allocation2 + $0xc0] sm:$0xff]
        %v349 = vld [vmem:[#allocation2 + $0xc8] sm:$0xff]
        %v350 = vld [vmem:[#allocation2 + $0xd0] sm:$0xff]
        %v351 = vld [vmem:[#allocation2 + $0xd8] sm:$0xff]
        %v352 = vld [vmem:[#allocation2 + $0xe0] sm:$0xff]
        %v353 = vld [vmem:[#allocation2 + $0xe8] sm:$0xff]
        %v354 = vld [vmem:[#allocation2 + $0xf0] sm:$0xff]
        %v355 = vld [vmem:[#allocation2 + $0xf8] sm:$0xff]
        %v356 = vld [vmem:[#allocation2 + $0x100] sm:$0xff]
        %v357 = vld [vmem:[#allocation2 + $0x108] sm:$0xff]
        %v358 = vld [vmem:[#allocation2 + $0x110] sm:$0xff]
        %v359 = vld [vmem:[#allocation2 + $0x118] sm:$0xff]
        %v360 = vld [vmem:[#allocation2 + $0x120] sm:$0xff]
        %v361 = vld [vmem:[#allocation2 + $0x128] sm:$0xff]
        %v362 = vld [vmem:[#allocation2 + $0x130] sm:$0xff]
        %v363 = vld [vmem:[#allocation2 + $0x138] sm:$0xff]
        %v364 = vld [vmem:[#allocation2 + $0x140] sm:$0xff]
        %v365 = vld [vmem:[#allocation2 + $0x148] sm:$0xff]
        %v366 = vld [vmem:[#allocation2 + $0x150] sm:$0xff]
        %v367 = vld [vmem:[#allocation2 + $0x158] sm:$0xff]
        %v368 = vld [vmem:[#allocation2 + $0x160] sm:$0xff]
        %v369 = vld [vmem:[#allocation2 + $0x168] sm:$0xff]
        %v370 = vld [vmem:[#allocation2 + $0x170] sm:$0xff]
        %v371 = vld [vmem:[#allocation2 + $0x178] sm:$0xff]
        %v372 = vld [vmem:[#allocation2 + $0x180] sm:$0xff]
        %v373 = vld [vmem:[#allocation2 + $0x188] sm:$0xff]
        %v374 = vld [vmem:[#allocation2 + $0x190] sm:$0xff]
        %v375 = vld [vmem:[#allocation2 + $0x198] sm:$0xff]
        %v376 = vld [vmem:[#allocation2 + $0x1a0] sm:$0xff]
        %v377 = vld [vmem:[#allocation2 + $0x1a8] sm:$0xff]
        %v378 = vld [vmem:[#allocation2 + $0x1b0] sm:$0xff]
        %v379 = vld [vmem:[#allocation2 + $0x1b8] sm:$0xff]
        %v380 = vld [vmem:[#allocation2 + $0x1c0] sm:$0xff]
        %v381 = vld [vmem:[#allocation2 + $0x1c8] sm:$0xff]
        %v382 = vld [vmem:[#allocation2 + $0x1d0] sm:$0xff]
        %v383 = vld [vmem:[#allocation2 + $0x1d8] sm:$0xff]
        %v384 = vld [vmem:[#allocation2 + $0x1e0] sm:$0xff]
        %v385 = vld [vmem:[#allocation2 + $0x1e8] sm:$0xff]
        %v386 = vld [vmem:[#allocation2 + $0x1f0] sm:$0xff]
        %v387 = vld [vmem:[#allocation2 + $0x1f8] sm:$0xff]
        %v388 = vld [vmem:[#allocation2 + $0x200] sm:$0xff]
        %v389 = vld [vmem:[#allocation2 + $0x208] sm:$0xff]
        %v390 = vld [vmem:[#allocation2 + $0x210] sm:$0xff]
        %v391 = vld [vmem:[#allocation2 + $0x218] sm:$0xff]
        %v392 = vld [vmem:[#allocation2 + $0x220] sm:$0xff]
        %v393 = vld [vmem:[#allocation2 + $0x228] sm:$0xff]
        %v394 = vld [vmem:[#allocation2 + $0x230] sm:$0xff]
        %v395 = vld [vmem:[#allocation2 + $0x238] sm:$0xff]
        %v396 = vld [vmem:[#allocation2 + $0x240] sm:$0xff]
        %v397 = vld [vmem:[#allocation2 + $0x248] sm:$0xff]
        %v398 = vld [vmem:[#allocation2 + $0x250] sm:$0xff]
        %v399 = vld [vmem:[#allocation2 + $0x258] sm:$0xff]
        %v400 = vld [vmem:[#allocation2 + $0x260] sm:$0xff]
        %v401 = vld [vmem:[#allocation2 + $0x268] sm:$0xff]
        %v402 = vld [vmem:[#allocation2 + $0x270] sm:$0xff]
        %v403 = vld [vmem:[#allocation2 + $0x278] sm:$0xff]
        %v404 = vld [vmem:[#allocation2 + $0x280] sm:$0xff]
        %v405 = vld [vmem:[#allocation2 + $0x288] sm:$0xff]
        %v406 = vld [vmem:[#allocation2 + $0x290] sm:$0xff]
        %v407 = vld [vmem:[#allocation2 + $0x298] sm:$0xff]
        %v408 = vld [vmem:[#allocation2 + $0x2a0] sm:$0xff]
        %v409 = vld [vmem:[#allocation2 + $0x2a8] sm:$0xff]
        %v410 = vld [vmem:[#allocation2 + $0x2b0] sm:$0xff]
        %v411 = vld [vmem:[#allocation2 + $0x2b8] sm:$0xff]
        %v412 = vld [vmem:[#allocation2 + $0x2c0] sm:$0xff]
        %v413 = vld [vmem:[#allocation2 + $0x2c8] sm:$0xff]
        %v414 = vld [vmem:[#allocation2 + $0x2d0] sm:$0xff]
        %v415 = vld [vmem:[#allocation2 + $0x2d8] sm:$0xff]
        %v416 = vld [vmem:[#allocation2 + $0x2e0] sm:$0xff]
        %v417 = vld [vmem:[#allocation2 + $0x2e8] sm:$0xff]
        %v418 = vld [vmem:[#allocation2 + $0x2f0] sm:$0xff]
        %v419 = vld [vmem:[#allocation2 + $0x2f8] sm:$0xff]
        %v420 = vld [vmem:[#allocation2 + $0x300] sm:$0xff]
        %v421 = vld [vmem:[#allocation2 + $0x308] sm:$0xff]
        %v422 = vld [vmem:[#allocation2 + $0x310] sm:$0xff]
        %v423 = vld [vmem:[#allocation2 + $0x318] sm:$0xff]
        %v424 = vld [vmem:[#allocation2 + $0x320] sm:$0xff]
        %v425 = vld [vmem:[#allocation2 + $0x328] sm:$0xff]
        %v426 = vld [vmem:[#allocation2 + $0x330] sm:$0xff]
        %v427 = vld [vmem:[#allocation2 + $0x338] sm:$0xff]
        %v428 = vld [vmem:[#allocation2 + $0x340] sm:$0xff]
        %v429 = vld [vmem:[#allocation2 + $0x348] sm:$0xff]
        %v430 = vld [vmem:[#allocation2 + $0x350] sm:$0xff]
        %v431 = vld [vmem:[#allocation2 + $0x358] sm:$0xff]
        %v432 = vld [vmem:[#allocation2 + $0x360] sm:$0xff]
        %v433 = vld [vmem:[#allocation2 + $0x368] sm:$0xff]
        %v434 = vld [vmem:[#allocation2 + $0x370] sm:$0xff]
        %v435 = vld [vmem:[#allocation2 + $0x378] sm:$0xff]
        %v436 = vld [vmem:[#allocation2 + $0x380] sm:$0xff]
        %v437 = vld [vmem:[#allocation2 + $0x388] sm:$0xff]
        %v438 = vld [vmem:[#allocation2 + $0x390] sm:$0xff]
        %v439 = vld [vmem:[#allocation2 + $0x398] sm:$0xff]
        %v440 = vld [vmem:[#allocation2 + $0x3a0] sm:$0xff]
        %v441 = vld [vmem:[#allocation2 + $0x3a8] sm:$0xff]
        %v442 = vld [vmem:[#allocation2 + $0x3b0] sm:$0xff]
        %v443 = vld [vmem:[#allocation2 + $0x3b8] sm:$0xff]
        %v444 = vld [vmem:[#allocation2 + $0x3c0] sm:$0xff]
        %v445 = vld [vmem:[#allocation2 + $0x3c8] sm:$0xff]
        %v446 = vld [vmem:[#allocation2 + $0x3d0] sm:$0xff]
        %v447 = vld [vmem:[#allocation2 + $0x3d8] sm:$0xff]
        %v448 = vld [vmem:[#allocation2 + $0x3e0] sm:$0xff]
        %v449 = vld [vmem:[#allocation2 + $0x3e8] sm:$0xff]
        %v450 = vld [vmem:[#allocation2 + $0x3f0] sm:$0xff]
        %v451 = vld [vmem:[#allocation2 + $0x3f8] sm:$0xff]
        %v452 = vld [vmem:[#allocation2 + $0x400] sm:$0xff]
        %v453 = vld [vmem:[#allocation2 + $0x408] sm:$0xff]
        %v454 = vld [vmem:[#allocation2 + $0x410] sm:$0xff]
        %v455 = vld [vmem:[#allocation2 + $0x418] sm:$0xff]
        %v456 = vld [vmem:[#allocation2 + $0x420] sm:$0xff]
        %v457 = vld [vmem:[#allocation2 + $0x428] sm:$0xff]
        %v458 = vld [vmem:[#allocation2 + $0x430] sm:$0xff]
        %v459 = vld [vmem:[#allocation2 + $0x438] sm:$0xff]
        %v460 = vld [vmem:[#allocation2 + $0x440] sm:$0xff]
        %v461 = vld [vmem:[#allocation2 + $0x448] sm:$0xff]
        %v462 = vld [vmem:[#allocation2 + $0x450] sm:$0xff]
        %v463 = vld [vmem:[#allocation2 + $0x458] sm:$0xff]
        %v464 = vld [vmem:[#allocation2 + $0x460] sm:$0xff]
        %v465 = vld [vmem:[#allocation2 + $0x468] sm:$0xff]
        %v466 = vld [vmem:[#allocation2 + $0x470] sm:$0xff]
        %v467 = vld [vmem:[#allocation2 + $0x478] sm:$0xff]
        %v468 = vld [vmem:[#allocation2 + $0x480] sm:$0xff]
        %v469 = vld [vmem:[#allocation2 + $0x488] sm:$0xff]
        %v470 = vld [vmem:[#allocation2 + $0x490] sm:$0xff]
        %v471 = vld [vmem:[#allocation2 + $0x498] sm:$0xff]
        %v472 = vld [vmem:[#allocation2 + $0x4a0] sm:$0xff]
        %v473 = vld [vmem:[#allocation2 + $0x4a8] sm:$0xff]
        %v474 = vld [vmem:[#allocation2 + $0x4b0] sm:$0xff]
        %v475 = vld [vmem:[#allocation2 + $0x4b8] sm:$0xff]
        %v476 = vld [vmem:[#allocation2 + $0x4c0] sm:$0xff]
        %v477 = vld [vmem:[#allocation2 + $0x4c8] sm:$0xff]
        %v478 = vld [vmem:[#allocation2 + $0x4d0] sm:$0xff]
        %v479 = vld [vmem:[#allocation2 + $0x4d8] sm:$0xff]
        %v480 = vld [vmem:[#allocation2 + $0x4e0] sm:$0xff]
        %v481 = vld [vmem:[#allocation2 + $0x4e8] sm:$0xff]
        %v482 = vld [vmem:[#allocation2 + $0x4f0] sm:$0xff]
        %v483 = vld [vmem:[#allocation2 + $0x4f8] sm:$0xff]
        %v484 = vld [vmem:[#allocation2 + $0x500] sm:$0xff]
        %v485 = vld [vmem:[#allocation2 + $0x508] sm:$0xff]
        %v486 = vld [vmem:[#allocation2 + $0x510] sm:$0xff]
        %v487 = vld [vmem:[#allocation2 + $0x518] sm:$0xff]
        %v488 = vld [vmem:[#allocation2 + $0x520] sm:$0xff]
        %v489 = vld [vmem:[#allocation2 + $0x528] sm:$0xff]
        %v490 = vld [vmem:[#allocation2 + $0x530] sm:$0xff]
        %v491 = vld [vmem:[#allocation2 + $0x538] sm:$0xff]
        %v496 = vunpack.c.l.b16 %v320
        %v497 = vunpack.c.h.b16 %v320
        %v498 = vunpack.c.l.b16 %v321
        %v499 = vunpack.c.h.b16 %v321
        %v500 = vunpack.c.l.b16 %v322
        %v501 = vunpack.c.h.b16 %v322
        %v502 = vunpack.c.l.b16 %v323
        %v503 = vunpack.c.h.b16 %v323
        %v504 = vpack.c.b16 %v500, %v496
        %v505 = vpack.c.b16 %v501, %v497
        %v506 = vpack.c.b16 %v502, %v498
        %v507 = vpack.c.b16 %v503, %v499
        %v679 = vunpack.c.l.b16 %v324
        %v680 = vunpack.c.h.b16 %v324
        %v681 = vunpack.c.l.b16 %v325
        %v682 = vunpack.c.h.b16 %v325
        %v683 = vunpack.c.l.b16 %v326
        %v684 = vunpack.c.h.b16 %v326
        %v685 = vunpack.c.l.b16 %v327
        %v686 = vunpack.c.h.b16 %v327
        %v687 = vunpack.c.l.b16 %v328
        %v688 = vunpack.c.h.b16 %v328
        %v689 = vunpack.c.l.b16 %v329
        %v690 = vunpack.c.h.b16 %v329
        %v691 = vunpack.c.l.b16 %v330
        %v692 = vunpack.c.h.b16 %v330
        %v693 = vunpack.c.l.b16 %v331
        %v694 = vunpack.c.h.b16 %v331
        %v695 = vunpack.c.l.b16 %v332
        %v696 = vunpack.c.h.b16 %v332
        %v697 = vunpack.c.l.b16 %v333
        %v698 = vunpack.c.h.b16 %v333
        %v699 = vunpack.c.l.b16 %v334
        %v700 = vunpack.c.h.b16 %v334
        %v701 = vunpack.c.l.b16 %v335
        %v702 = vunpack.c.h.b16 %v335
        %v703 = vunpack.c.l.b16 %v336
        %v704 = vunpack.c.h.b16 %v336
        %v705 = vunpack.c.l.b16 %v337
        %v706 = vunpack.c.h.b16 %v337
        %v707 = vunpack.c.l.b16 %v338
        %v708 = vunpack.c.h.b16 %v338
        %v709 = vunpack.c.l.b16 %v339
        %v710 = vunpack.c.h.b16 %v339
        %v711 = vunpack.c.l.b16 %v340
        %v712 = vunpack.c.h.b16 %v340
        %v713 = vunpack.c.l.b16 %v341
        %v714 = vunpack.c.h.b16 %v341
        %v715 = vunpack.c.l.b16 %v342
        %v716 = vunpack.c.h.b16 %v342
        %v717 = vunpack.c.l.b16 %v343
        %v718 = vunpack.c.h.b16 %v343
        %v719 = vunpack.c.l.b16 %v344
        %v720 = vunpack.c.h.b16 %v344
        %v721 = vunpack.c.l.b16 %v345
        %v722 = vunpack.c.h.b16 %v345
        %v723 = vunpack.c.l.b16 %v346
        %v724 = vunpack.c.h.b16 %v346
        %v725 = vunpack.c.l.b16 %v347
        %v726 = vunpack.c.h.b16 %v347
        %v727 = vunpack.c.l.b16 %v348
        %v728 = vunpack.c.h.b16 %v348
        %v729 = vunpack.c.l.b16 %v349
        %v730 = vunpack.c.h.b16 %v349
        %v731 = vunpack.c.l.b16 %v350
        %v732 = vunpack.c.h.b16 %v350
        %v733 = vunpack.c.l.b16 %v351
        %v734 = vunpack.c.h.b16 %v351
        %v735 = vunpack.c.l.b16 %v352
        %v736 = vunpack.c.h.b16 %v352
        %v737 = vunpack.c.l.b16 %v353
        %v738 = vunpack.c.h.b16 %v353
        %v739 = vunpack.c.l.b16 %v354
        %v740 = vunpack.c.h.b16 %v354
        %v741 = vunpack.c.l.b16 %v355
        %v742 = vunpack.c.h.b16 %v355
        %v743 = vunpack.c.l.b16 %v356
        %v744 = vunpack.c.h.b16 %v356
        %v745 = vunpack.c.l.b16 %v357
        %v746 = vunpack.c.h.b16 %v357
        %v747 = vunpack.c.l.b16 %v358
        %v748 = vunpack.c.h.b16 %v358
        %v749 = vunpack.c.l.b16 %v359
        %v750 = vunpack.c.h.b16 %v359
        %v751 = vunpack.c.l.b16 %v360
        %v752 = vunpack.c.h.b16 %v360
        %v753 = vunpack.c.l.b16 %v361
        %v754 = vunpack.c.h.b16 %v361
        %v755 = vunpack.c.l.b16 %v362
        %v756 = vunpack.c.h.b16 %v362
        %v757 = vunpack.c.l.b16 %v363
        %v758 = vunpack.c.h.b16 %v363
        %v759 = vunpack.c.l.b16 %v364
        %v760 = vunpack.c.h.b16 %v364
        %v761 = vunpack.c.l.b16 %v365
        %v762 = vunpack.c.h.b16 %v365
        %v763 = vunpack.c.l.b16 %v366
        %v764 = vunpack.c.h.b16 %v366
        %v765 = vunpack.c.l.b16 %v367
        %v766 = vunpack.c.h.b16 %v367
        %v767 = vunpack.c.l.b16 %v368
        %v768 = vunpack.c.h.b16 %v368
        %v769 = vunpack.c.l.b16 %v369
        %v770 = vunpack.c.h.b16 %v369
        %v771 = vunpack.c.l.b16 %v370
        %v772 = vunpack.c.h.b16 %v370
        %v773 = vunpack.c.l.b16 %v371
        %v774 = vunpack.c.h.b16 %v371
        %v775 = vunpack.c.l.b16 %v372
        %v776 = vunpack.c.h.b16 %v372
        %v777 = vunpack.c.l.b16 %v373
        %v778 = vunpack.c.h.b16 %v373
        %v779 = vunpack.c.l.b16 %v374
        %v780 = vunpack.c.h.b16 %v374
        %v781 = vunpack.c.l.b16 %v375
        %v782 = vunpack.c.h.b16 %v375
        %v783 = vunpack.c.l.b16 %v376
        %v784 = vunpack.c.h.b16 %v376
        %v785 = vunpack.c.l.b16 %v377
        %v786 = vunpack.c.h.b16 %v377
        %v787 = vunpack.c.l.b16 %v378
        %v788 = vunpack.c.h.b16 %v378
        %v789 = vunpack.c.l.b16 %v379
        %v790 = vunpack.c.h.b16 %v379
        %v791 = vunpack.c.l.b16 %v380
        %v792 = vunpack.c.h.b16 %v380
        %v793 = vunpack.c.l.b16 %v381
        %v794 = vunpack.c.h.b16 %v381
        %v795 = vunpack.c.l.b16 %v382
        %v796 = vunpack.c.h.b16 %v382
        %v797 = vunpack.c.l.b16 %v383
        %v798 = vunpack.c.h.b16 %v383
        %v799 = vunpack.c.l.b16 %v384
        %v800 = vunpack.c.h.b16 %v384
        %v801 = vunpack.c.l.b16 %v385
        %v802 = vunpack.c.h.b16 %v385
        %v803 = vunpack.c.l.b16 %v386
        %v804 = vunpack.c.h.b16 %v386
        %v805 = vunpack.c.l.b16 %v387
        %v806 = vunpack.c.h.b16 %v387
        %v807 = vunpack.c.l.b16 %v388
        %v808 = vunpack.c.h.b16 %v388
        %v809 = vunpack.c.l.b16 %v389
        %v810 = vunpack.c.h.b16 %v389
        %v811 = vunpack.c.l.b16 %v390
        %v812 = vunpack.c.h.b16 %v390
        %v813 = vunpack.c.l.b16 %v391
        %v814 = vunpack.c.h.b16 %v391
        %v815 = vunpack.c.l.b16 %v392
        %v816 = vunpack.c.h.b16 %v392
        %v817 = vunpack.c.l.b16 %v393
        %v818 = vunpack.c.h.b16 %v393
        %v819 = vunpack.c.l.b16 %v394
        %v820 = vunpack.c.h.b16 %v394
        %v821 = vunpack.c.l.b16 %v395
        %v822 = vunpack.c.h.b16 %v395
        %v823 = vunpack.c.l.b16 %v396
        %v824 = vunpack.c.h.b16 %v396
        %v825 = vunpack.c.l.b16 %v397
        %v826 = vunpack.c.h.b16 %v397
        %v827 = vunpack.c.l.b16 %v398
        %v828 = vunpack.c.h.b16 %v398
        %v829 = vunpack.c.l.b16 %v399
        %v830 = vunpack.c.h.b16 %v399
        %v831 = vunpack.c.l.b16 %v400
        %v832 = vunpack.c.h.b16 %v400
        %v833 = vunpack.c.l.b16 %v401
        %v834 = vunpack.c.h.b16 %v401
        %v835 = vunpack.c.l.b16 %v402
        %v836 = vunpack.c.h.b16 %v402
        %v837 = vunpack.c.l.b16 %v403
        %v838 = vunpack.c.h.b16 %v403
        %v839 = vunpack.c.l.b16 %v404
        %v840 = vunpack.c.h.b16 %v404
        %v841 = vunpack.c.l.b16 %v405
        %v842 = vunpack.c.h.b16 %v405
        %v843 = vunpack.c.l.b16 %v406
        %v844 = vunpack.c.h.b16 %v406
        %v845 = vunpack.c.l.b16 %v407
        %v846 = vunpack.c.h.b16 %v407
        %v847 = vunpack.c.l.b16 %v408
        %v848 = vunpack.c.h.b16 %v408
        %v849 = vunpack.c.l.b16 %v409
        %v850 = vunpack.c.h.b16 %v409
        %v851 = vunpack.c.l.b16 %v410
        %v852 = vunpack.c.h.b16 %v410
        %v853 = vunpack.c.l.b16 %v411
        %v854 = vunpack.c.h.b16 %v411
        %v855 = vunpack.c.l.b16 %v412
        %v856 = vunpack.c.h.b16 %v412
        %v857 = vunpack.c.l.b16 %v413
        %v858 = vunpack.c.h.b16 %v413
        %v859 = vunpack.c.l.b16 %v414
        %v860 = vunpack.c.h.b16 %v414
        %v861 = vunpack.c.l.b16 %v415
        %v862 = vunpack.c.h.b16 %v415
        %v863 = vunpack.c.l.b16 %v416
        %v864 = vunpack.c.h.b16 %v416
        %v865 = vunpack.c.l.b16 %v417
        %v866 = vunpack.c.h.b16 %v417
        %v867 = vunpack.c.l.b16 %v418
        %v868 = vunpack.c.h.b16 %v418
        %v869 = vunpack.c.l.b16 %v419
        %v870 = vunpack.c.h.b16 %v419
        %v871 = vunpack.c.l.b16 %v420
        %v872 = vunpack.c.h.b16 %v420
        %v873 = vunpack.c.l.b16 %v421
        %v874 = vunpack.c.h.b16 %v421
        %v875 = vunpack.c.l.b16 %v422
        %v876 = vunpack.c.h.b16 %v422
        %v877 = vunpack.c.l.b16 %v423
        %v878 = vunpack.c.h.b16 %v423
        %v879 = vunpack.c.l.b16 %v424
        %v880 = vunpack.c.h.b16 %v424
        %v881 = vunpack.c.l.b16 %v425
        %v882 = vunpack.c.h.b16 %v425
        %v883 = vunpack.c.l.b16 %v426
        %v884 = vunpack.c.h.b16 %v426
        %v885 = vunpack.c.l.b16 %v427
        %v886 = vunpack.c.h.b16 %v427
        %v887 = vunpack.c.l.b16 %v428
        %v888 = vunpack.c.h.b16 %v428
        %v889 = vunpack.c.l.b16 %v429
        %v890 = vunpack.c.h.b16 %v429
        %v891 = vunpack.c.l.b16 %v430
        %v892 = vunpack.c.h.b16 %v430
        %v893 = vunpack.c.l.b16 %v431
        %v894 = vunpack.c.h.b16 %v431
        %v895 = vunpack.c.l.b16 %v432
        %v896 = vunpack.c.h.b16 %v432
        %v897 = vunpack.c.l.b16 %v433
        %v898 = vunpack.c.h.b16 %v433
        %v899 = vunpack.c.l.b16 %v434
        %v900 = vunpack.c.h.b16 %v434
        %v901 = vunpack.c.l.b16 %v435
        %v902 = vunpack.c.h.b16 %v435
        %v903 = vunpack.c.l.b16 %v436
        %v904 = vunpack.c.h.b16 %v436
        %v905 = vunpack.c.l.b16 %v437
        %v906 = vunpack.c.h.b16 %v437
        %v907 = vunpack.c.l.b16 %v438
        %v908 = vunpack.c.h.b16 %v438
        %v909 = vunpack.c.l.b16 %v439
        %v910 = vunpack.c.h.b16 %v439
        %v911 = vunpack.c.l.b16 %v440
        %v912 = vunpack.c.h.b16 %v440
        %v913 = vunpack.c.l.b16 %v441
        %v914 = vunpack.c.h.b16 %v441
        %v915 = vunpack.c.l.b16 %v442
        %v916 = vunpack.c.h.b16 %v442
        %v917 = vunpack.c.l.b16 %v443
        %v918 = vunpack.c.h.b16 %v443
        %v919 = vunpack.c.l.b16 %v444
        %v920 = vunpack.c.h.b16 %v444
        %v921 = vunpack.c.l.b16 %v445
        %v922 = vunpack.c.h.b16 %v445
        %v923 = vunpack.c.l.b16 %v446
        %v924 = vunpack.c.h.b16 %v446
        %v925 = vunpack.c.l.b16 %v447
        %v926 = vunpack.c.h.b16 %v447
        %v927 = vunpack.c.l.b16 %v448
        %v928 = vunpack.c.h.b16 %v448
        %v929 = vunpack.c.l.b16 %v449
        %v930 = vunpack.c.h.b16 %v449
        %v931 = vunpack.c.l.b16 %v450
        %v932 = vunpack.c.h.b16 %v450
        %v933 = vunpack.c.l.b16 %v451
        %v934 = vunpack.c.h.b16 %v451
        %v935 = vunpack.c.l.b16 %v452
        %v936 = vunpack.c.h.b16 %v452
        %v937 = vunpack.c.l.b16 %v453
        %v938 = vunpack.c.h.b16 %v453
        %v939 = vunpack.c.l.b16 %v454
        %v940 = vunpack.c.h.b16 %v454
        %v941 = vunpack.c.l.b16 %v455
        %v942 = vunpack.c.h.b16 %v455
        %v943 = vunpack.c.l.b16 %v456
        %v944 = vunpack.c.h.b16 %v456
        %v945 = vunpack.c.l.b16 %v457
        %v946 = vunpack.c.h.b16 %v457
        %v947 = vunpack.c.l.b16 %v458
        %v948 = vunpack.c.h.b16 %v458
        %v949 = vunpack.c.l.b16 %v459
        %v950 = vunpack.c.h.b16 %v459
        %v951 = vunpack.c.l.b16 %v460
        %v952 = vunpack.c.h.b16 %v460
        %v953 = vunpack.c.l.b16 %v461
        %v954 = vunpack.c.h.b16 %v461
        %v955 = vunpack.c.l.b16 %v462
        %v956 = vunpack.c.h.b16 %v462
        %v957 = vunpack.c.l.b16 %v463
        %v958 = vunpack.c.h.b16 %v463
        %v959 = vunpack.c.l.b16 %v464
        %v960 = vunpack.c.h.b16 %v464
        %v961 = vunpack.c.l.b16 %v465
        %v962 = vunpack.c.h.b16 %v465
        %v963 = vunpack.c.l.b16 %v466
        %v964 = vunpack.c.h.b16 %v466
        %v965 = vunpack.c.l.b16 %v467
        %v966 = vunpack.c.h.b16 %v467
        %v967 = vunpack.c.l.b16 %v468
        %v968 = vunpack.c.h.b16 %v468
        %v969 = vunpack.c.l.b16 %v469
        %v970 = vunpack.c.h.b16 %v469
        %v971 = vunpack.c.l.b16 %v470
        %v972 = vunpack.c.h.b16 %v470
        %v973 = vunpack.c.l.b16 %v471
        %v974 = vunpack.c.h.b16 %v471
        %v975 = vunpack.c.l.b16 %v472
        %v976 = vunpack.c.h.b16 %v472
        %v977 = vunpack.c.l.b16 %v473
        %v978 = vunpack.c.h.b16 %v473
        %v979 = vunpack.c.l.b16 %v474
        %v980 = vunpack.c.h.b16 %v474
        %v981 = vunpack.c.l.b16 %v475
        %v982 = vunpack.c.h.b16 %v475
        %v983 = vunpack.c.l.b16 %v476
        %v984 = vunpack.c.h.b16 %v476
        %v985 = vunpack.c.l.b16 %v477
        %v986 = vunpack.c.h.b16 %v477
        %v987 = vunpack.c.l.b16 %v478
        %v988 = vunpack.c.h.b16 %v478
        %v989 = vunpack.c.l.b16 %v479
        %v990 = vunpack.c.h.b16 %v479
        %v991 = vunpack.c.l.b16 %v480
        %v992 = vunpack.c.h.b16 %v480
        %v993 = vunpack.c.l.b16 %v481
        %v994 = vunpack.c.h.b16 %v481
        %v995 = vunpack.c.l.b16 %v482
        %v996 = vunpack.c.h.b16 %v482
        %v997 = vunpack.c.l.b16 %v483
        %v998 = vunpack.c.h.b16 %v483
        %v999 = vunpack.c.l.b16 %v484
        %v1000 = vunpack.c.h.b16 %v484
        %v1001 = vunpack.c.l.b16 %v485
        %v1002 = vunpack.c.h.b16 %v485
        %v1003 = vunpack.c.l.b16 %v486
        %v1004 = vunpack.c.h.b16 %v486
        %v1005 = vunpack.c.l.b16 %v487
        %v1006 = vunpack.c.h.b16 %v487
        %v1007 = vunpack.c.l.b16 %v488
        %v1008 = vunpack.c.h.b16 %v488
        %v1009 = vunpack.c.l.b16 %v489
        %v1010 = vunpack.c.h.b16 %v489
        %v1011 = vunpack.c.l.b16 %v490
        %v1012 = vunpack.c.h.b16 %v490
        %v1013 = vunpack.c.l.b16 %v491
        %v1014 = vunpack.c.h.b16 %v491
        %v1015 = vpack.c.b16 %v685, %v679
        %v1016 = vpack.c.b16 %v686, %v680
        %v1017 = vpack.c.b16 %v687, %v681
        %v1018 = vpack.c.b16 %v688, %v682
        %v1019 = vpack.c.b16 %v689, %v683
        %v1020 = vpack.c.b16 %v690, %v684
        %v1021 = vpack.c.b16 %v697, %v691
        %v1022 = vpack.c.b16 %v698, %v692
        %v1023 = vpack.c.b16 %v699, %v693
        %v1024 = vpack.c.b16 %v700, %v694
        %v1025 = vpack.c.b16 %v701, %v695
        %v1026 = vpack.c.b16 %v702, %v696
        %v1027 = vpack.c.b16 %v709, %v703
        %v1028 = vpack.c.b16 %v710, %v704
        %v1029 = vpack.c.b16 %v711, %v705
        %v1030 = vpack.c.b16 %v712, %v706
        %v1031 = vpack.c.b16 %v713, %v707
        %v1032 = vpack.c.b16 %v714, %v708
        %v1033 = vpack.c.b16 %v721, %v715
        %v1034 = vpack.c.b16 %v722, %v716
        %v1035 = vpack.c.b16 %v723, %v717
        %v1036 = vpack.c.b16 %v724, %v718
        %v1037 = vpack.c.b16 %v725, %v719
        %v1038 = vpack.c.b16 %v726, %v720
        %v1039 = vpack.c.b16 %v733, %v727
        %v1040 = vpack.c.b16 %v734, %v728
        %v1041 = vpack.c.b16 %v735, %v729
        %v1042 = vpack.c.b16 %v736, %v730
        %v1043 = vpack.c.b16 %v737, %v731
        %v1044 = vpack.c.b16 %v738, %v732
        %v1045 = vpack.c.b16 %v745, %v739
        %v1046 = vpack.c.b16 %v746, %v740
        %v1047 = vpack.c.b16 %v747, %v741
        %v1048 = vpack.c.b16 %v748, %v742
        %v1049 = vpack.c.b16 %v749, %v743
        %v1050 = vpack.c.b16 %v750, %v744
        %v1051 = vpack.c.b16 %v757, %v751
        %v1052 = vpack.c.b16 %v758, %v752
        %v1053 = vpack.c.b16 %v759, %v753
        %v1054 = vpack.c.b16 %v760, %v754
        %v1055 = vpack.c.b16 %v761, %v755
        %v1056 = vpack.c.b16 %v762, %v756
        %v1057 = vpack.c.b16 %v769, %v763
        %v1058 = vpack.c.b16 %v770, %v764
        %v1059 = vpack.c.b16 %v771, %v765
        %v1060 = vpack.c.b16 %v772, %v766
        %v1061 = vpack.c.b16 %v773, %v767
        %v1062 = vpack.c.b16 %v774, %v768
        %v1063 = vpack.c.b16 %v781, %v775
        %v1064 = vpack.c.b16 %v782, %v776
        %v1065 = vpack.c.b16 %v783, %v777
        %v1066 = vpack.c.b16 %v784, %v778
        %v1067 = vpack.c.b16 %v785, %v779
        %v1068 = vpack.c.b16 %v786, %v780
        %v1069 = vpack.c.b16 %v793, %v787
        %v1070 = vpack.c.b16 %v794, %v788
        %v1071 = vpack.c.b16 %v795, %v789
        %v1072 = vpack.c.b16 %v796, %v790
        %v1073 = vpack.c.b16 %v797, %v791
        %v1074 = vpack.c.b16 %v798, %v792
        %v1075 = vpack.c.b16 %v805, %v799
        %v1076 = vpack.c.b16 %v806, %v800
        %v1077 = vpack.c.b16 %v807, %v801
        %v1078 = vpack.c.b16 %v808, %v802
        %v1079 = vpack.c.b16 %v809, %v803
        %v1080 = vpack.c.b16 %v810, %v804
        %v1081 = vpack.c.b16 %v817, %v811
        %v1082 = vpack.c.b16 %v818, %v812
        %v1083 = vpack.c.b16 %v819, %v813
        %v1084 = vpack.c.b16 %v820, %v814
        %v1085 = vpack.c.b16 %v821, %v815
        %v1086 = vpack.c.b16 %v822, %v816
        %v1087 = vpack.c.b16 %v829, %v823
        %v1088 = vpack.c.b16 %v830, %v824
        %v1089 = vpack.c.b16 %v831, %v825
        %v1090 = vpack.c.b16 %v832, %v826
        %v1091 = vpack.c.b16 %v833, %v827
        %v1092 = vpack.c.b16 %v834, %v828
        %v1093 = vpack.c.b16 %v841, %v835
        %v1094 = vpack.c.b16 %v842, %v836
        %v1095 = vpack.c.b16 %v843, %v837
        %v1096 = vpack.c.b16 %v844, %v838
        %v1097 = vpack.c.b16 %v845, %v839
        %v1098 = vpack.c.b16 %v846, %v840
        %v1099 = vpack.c.b16 %v853, %v847
        %v1100 = vpack.c.b16 %v854, %v848
        %v1101 = vpack.c.b16 %v855, %v849
        %v1102 = vpack.c.b16 %v856, %v850
        %v1103 = vpack.c.b16 %v857, %v851
        %v1104 = vpack.c.b16 %v858, %v852
        %v1105 = vpack.c.b16 %v865, %v859
        %v1106 = vpack.c.b16 %v866, %v860
        %v1107 = vpack.c.b16 %v867, %v861
        %v1108 = vpack.c.b16 %v868, %v862
        %v1109 = vpack.c.b16 %v869, %v863
        %v1110 = vpack.c.b16 %v870, %v864
        %v1111 = vpack.c.b16 %v877, %v871
        %v1112 = vpack.c.b16 %v878, %v872
        %v1113 = vpack.c.b16 %v879, %v873
        %v1114 = vpack.c.b16 %v880, %v874
        %v1115 = vpack.c.b16 %v881, %v875
        %v1116 = vpack.c.b16 %v882, %v876
        %v1117 = vpack.c.b16 %v889, %v883
        %v1118 = vpack.c.b16 %v890, %v884
        %v1119 = vpack.c.b16 %v891, %v885
        %v1120 = vpack.c.b16 %v892, %v886
        %v1121 = vpack.c.b16 %v893, %v887
        %v1122 = vpack.c.b16 %v894, %v888
        %v1123 = vpack.c.b16 %v901, %v895
        %v1124 = vpack.c.b16 %v902, %v896
        %v1125 = vpack.c.b16 %v903, %v897
        %v1126 = vpack.c.b16 %v904, %v898
        %v1127 = vpack.c.b16 %v905, %v899
        %v1128 = vpack.c.b16 %v906, %v900
        %v1129 = vpack.c.b16 %v913, %v907
        %v1130 = vpack.c.b16 %v914, %v908
        %v1131 = vpack.c.b16 %v915, %v909
        %v1132 = vpack.c.b16 %v916, %v910
        %v1133 = vpack.c.b16 %v917, %v911
        %v1134 = vpack.c.b16 %v918, %v912
        %v1135 = vpack.c.b16 %v925, %v919
        %v1136 = vpack.c.b16 %v926, %v920
        %v1137 = vpack.c.b16 %v927, %v921
        %v1138 = vpack.c.b16 %v928, %v922
        %v1139 = vpack.c.b16 %v929, %v923
        %v1140 = vpack.c.b16 %v930, %v924
        %v1141 = vpack.c.b16 %v937, %v931
        %v1142 = vpack.c.b16 %v938, %v932
        %v1143 = vpack.c.b16 %v939, %v933
        %v1144 = vpack.c.b16 %v940, %v934
        %v1145 = vpack.c.b16 %v941, %v935
        %v1146 = vpack.c.b16 %v942, %v936
        %v1147 = vpack.c.b16 %v949, %v943
        %v1148 = vpack.c.b16 %v950, %v944
        %v1149 = vpack.c.b16 %v951, %v945
        %v1150 = vpack.c.b16 %v952, %v946
        %v1151 = vpack.c.b16 %v953, %v947
        %v1152 = vpack.c.b16 %v954, %v948
        %v1153 = vpack.c.b16 %v961, %v955
        %v1154 = vpack.c.b16 %v962, %v956
        %v1155 = vpack.c.b16 %v963, %v957
        %v1156 = vpack.c.b16 %v964, %v958
        %v1157 = vpack.c.b16 %v965, %v959
        %v1158 = vpack.c.b16 %v966, %v960
        %v1159 = vpack.c.b16 %v973, %v967
        %v1160 = vpack.c.b16 %v974, %v968
        %v1161 = vpack.c.b16 %v975, %v969
        %v1162 = vpack.c.b16 %v976, %v970
        %v1163 = vpack.c.b16 %v977, %v971
        %v1164 = vpack.c.b16 %v978, %v972
        %v1165 = vpack.c.b16 %v985, %v979
        %v1166 = vpack.c.b16 %v986, %v980
        %v1167 = vpack.c.b16 %v987, %v981
        %v1168 = vpack.c.b16 %v988, %v982
        %v1169 = vpack.c.b16 %v989, %v983
        %v1170 = vpack.c.b16 %v990, %v984
        %v1171 = vpack.c.b16 %v997, %v991
        %v1172 = vpack.c.b16 %v998, %v992
        %v1173 = vpack.c.b16 %v999, %v993
        %v1174 = vpack.c.b16 %v1000, %v994
        %v1175 = vpack.c.b16 %v1001, %v995
        %v1176 = vpack.c.b16 %v1002, %v996
        %v1177 = vpack.c.b16 %v1009, %v1003
        %v1178 = vpack.c.b16 %v1010, %v1004
        %v1179 = vpack.c.b16 %v1011, %v1005
        %v1180 = vpack.c.b16 %v1012, %v1006
        %v1181 = vpack.c.b16 %v1013, %v1007
        %v1182 = vpack.c.b16 %v1014, %v1008
        %vm1345 = vcmask 515072
        %v1347 = vsel %vm1345, %v507, 0
        %vm1349 = vcmask 1046528
        %vm1350 = vcmask 1047552
        %v1351 = vsel %vm1349, 4294967295, 65535
        %v1352 = vsel %vm1350, %v1351, 0
        %v1354 = vand.u32 %v1177, %v1352
        %v1357 = vand.u32 %v1178, %v1352
        %v1360 = vand.u32 %v1179, %v1352
        %v1363 = vand.u32 %v1180, %v1352
        %v1366 = vand.u32 %v1181, %v1352
        %v1369 = vand.u32 %v1182, %v1352
        %1371 = vmatpush.bf16.msra.mxu0 %v1057
        %1372 = vmatpush.bf16.msra.mxu0 %v1051
        %1373 = vmatpush.bf16.msra.mxu0 %v1045
        %1374 = vmatpush.bf16.msra.mxu0 %v1039
        %1375 = vmatpush.bf16.msra.mxu0 %v1033
        %1376 = vmatpush.bf16.msra.mxu0 %v1027
        %1377 = vmatpush.bf16.msra.mxu0 %v1021
        %1378 = vmatpush.bf16.msra.mxu0 %v1015
        %1379 = vmatmul.bf16.gmra.mxu0 %v504
        %v1380 = vpop.f32.mrf.mxu0
        %v1381 = vadd.f32 0.0, %v1380
        %v1382 = vpop.f32.mrf.mxu0
        %v1383 = vadd.f32 0.0, %v1382
        %1384 = vdwg.mxu0
        %1385 = vmatpush.bf16.msra.mxu0 %v1105
        %1386 = vmatpush.bf16.msra.mxu0 %v1099
        %1387 = vmatpush.bf16.msra.mxu0 %v1093
        %1388 = vmatpush.bf16.msra.mxu0 %v1087
        %1389 = vmatpush.bf16.msra.mxu0 %v1081
        %1390 = vmatpush.bf16.msra.mxu0 %v1075
        %1391 = vmatpush.bf16.msra.mxu0 %v1069
        %1392 = vmatpush.bf16.msra.mxu0 %v1063
        %1393 = vmatmul.bf16.gmra.mxu0 %v505
        %v1394 = vpop.f32.mrf.mxu0
        %v1395 = vadd.f32 %v1381, %v1394
        %v1396 = vpop.f32.mrf.mxu0
        %v1397 = vadd.f32 %v1383, %v1396
        %1398 = vdwg.mxu0
        %1399 = vmatpush.bf16.msra.mxu0 %v1153
        %1400 = vmatpush.bf16.msra.mxu0 %v1147
        %1401 = vmatpush.bf16.msra.mxu0 %v1141
        %1402 = vmatpush.bf16.msra.mxu0 %v1135
        %1403 = vmatpush.bf16.msra.mxu0 %v1129
        %1404 = vmatpush.bf16.msra.mxu0 %v1123
        %1405 = vmatpush.bf16.msra.mxu0 %v1117
        %1406 = vmatpush.bf16.msra.mxu0 %v1111
        %1407 = vmatmul.bf16.gmra.mxu0 %v506
        %v1408 = vpop.f32.mrf.mxu0
        %v1409 = vadd.f32 %v1395, %v1408
        %v1410 = vpop.f32.mrf.mxu0
        %v1411 = vadd.f32 %v1397, %v1410
        %1412 = vdwg.mxu0
        %1413 = vmatpush.bf16.msra.mxu0 0
        %1414 = vmatpush.bf16.msra.mxu0 0
        %1415 = vmatpush.bf16.msra.mxu0 0
        %1416 = vmatpush.bf16.msra.mxu0 0
        %1417 = vmatpush.bf16.msra.mxu0 %v1354
        %1418 = vmatpush.bf16.msra.mxu0 %v1171
        %1419 = vmatpush.bf16.msra.mxu0 %v1165
        %1420 = vmatpush.bf16.msra.mxu0 %v1159
        %1421 = vmatmul.bf16.gmra.mxu0 %v1347
        %v1422 = vpop.f32.mrf.mxu0
        %v1423 = vadd.f32 %v1409, %v1422
        %v1424 = vpop.f32.mrf.mxu0
        %v1425 = vadd.f32 %v1411, %v1424
        %1426 = vdwg.mxu0
        %1427 = vmatpush.bf16.msra.mxu0 %v1058
        %1428 = vmatpush.bf16.msra.mxu0 %v1052
        %1429 = vmatpush.bf16.msra.mxu0 %v1046
        %1430 = vmatpush.bf16.msra.mxu0 %v1040
        %1431 = vmatpush.bf16.msra.mxu0 %v1034
        %1432 = vmatpush.bf16.msra.mxu0 %v1028
        %1433 = vmatpush.bf16.msra.mxu0 %v1022
        %1434 = vmatpush.bf16.msra.mxu0 %v1016
        %1435 = vmatmul.bf16.gmra.mxu0 %v504
        %v1436 = vpop.f32.mrf.mxu0
        %v1437 = vadd.f32 0.0, %v1436
        %v1438 = vpop.f32.mrf.mxu0
        %v1439 = vadd.f32 0.0, %v1438
        %1440 = vdwg.mxu0
        %1441 = vmatpush.bf16.msra.mxu0 %v1106
        %1442 = vmatpush.bf16.msra.mxu0 %v1100
        %1443 = vmatpush.bf16.msra.mxu0 %v1094
        %1444 = vmatpush.bf16.msra.mxu0 %v1088
        %1445 = vmatpush.bf16.msra.mxu0 %v1082
        %1446 = vmatpush.bf16.msra.mxu0 %v1076
        %1447 = vmatpush.bf16.msra.mxu0 %v1070
        %1448 = vmatpush.bf16.msra.mxu0 %v1064
        %1449 = vmatmul.bf16.gmra.mxu0 %v505
        %v1450 = vpop.f32.mrf.mxu0
        %v1451 = vadd.f32 %v1437, %v1450
        %v1452 = vpop.f32.mrf.mxu0
        %v1453 = vadd.f32 %v1439, %v1452
        %1454 = vdwg.mxu0
        %1455 = vmatpush.bf16.msra.mxu0 %v1154
        %1456 = vmatpush.bf16.msra.mxu0 %v1148
        %1457 = vmatpush.bf16.msra.mxu0 %v1142
        %1458 = vmatpush.bf16.msra.mxu0 %v1136
        %1459 = vmatpush.bf16.msra.mxu0 %v1130
        %1460 = vmatpush.bf16.msra.mxu0 %v1124
        %1461 = vmatpush.bf16.msra.mxu0 %v1118
        %1462 = vmatpush.bf16.msra.mxu0 %v1112
        %1463 = vmatmul.bf16.gmra.mxu0 %v506
        %v1464 = vpop.f32.mrf.mxu0
        %v1465 = vadd.f32 %v1451, %v1464
        %v1466 = vpop.f32.mrf.mxu0
        %v1467 = vadd.f32 %v1453, %v1466
        %1468 = vdwg.mxu0
        %1469 = vmatpush.bf16.msra.mxu0 0
        %1470 = vmatpush.bf16.msra.mxu0 0
        %1471 = vmatpush.bf16.msra.mxu0 0
        %1472 = vmatpush.bf16.msra.mxu0 0
        %1473 = vmatpush.bf16.msra.mxu0 %v1357
        %1474 = vmatpush.bf16.msra.mxu0 %v1172
        %1475 = vmatpush.bf16.msra.mxu0 %v1166
        %1476 = vmatpush.bf16.msra.mxu0 %v1160
        %1477 = vmatmul.bf16.gmra.mxu0 %v1347
        %v1478 = vpop.f32.mrf.mxu0
        %v1479 = vadd.f32 %v1465, %v1478
        %v1480 = vpop.f32.mrf.mxu0
        %v1481 = vadd.f32 %v1467, %v1480
        %1482 = vdwg.mxu0
        %1483 = vmatpush.bf16.msra.mxu0 %v1059
        %1484 = vmatpush.bf16.msra.mxu0 %v1053
        %1485 = vmatpush.bf16.msra.mxu0 %v1047
        %1486 = vmatpush.bf16.msra.mxu0 %v1041
        %1487 = vmatpush.bf16.msra.mxu0 %v1035
        %1488 = vmatpush.bf16.msra.mxu0 %v1029
        %1489 = vmatpush.bf16.msra.mxu0 %v1023
        %1490 = vmatpush.bf16.msra.mxu0 %v1017
        %1491 = vmatmul.bf16.gmra.mxu0 %v504
        %v1492 = vpop.f32.mrf.mxu0
        %v1493 = vadd.f32 0.0, %v1492
        %v1494 = vpop.f32.mrf.mxu0
        %v1495 = vadd.f32 0.0, %v1494
        %1496 = vdwg.mxu0
        %1497 = vmatpush.bf16.msra.mxu0 %v1107
        %1498 = vmatpush.bf16.msra.mxu0 %v1101
        %1499 = vmatpush.bf16.msra.mxu0 %v1095
        %1500 = vmatpush.bf16.msra.mxu0 %v1089
        %1501 = vmatpush.bf16.msra.mxu0 %v1083
        %1502 = vmatpush.bf16.msra.mxu0 %v1077
        %1503 = vmatpush.bf16.msra.mxu0 %v1071
        %1504 = vmatpush.bf16.msra.mxu0 %v1065
        %1505 = vmatmul.bf16.gmra.mxu0 %v505
        %v1506 = vpop.f32.mrf.mxu0
        %v1507 = vadd.f32 %v1493, %v1506
        %v1508 = vpop.f32.mrf.mxu0
        %v1509 = vadd.f32 %v1495, %v1508
        %1510 = vdwg.mxu0
        %1511 = vmatpush.bf16.msra.mxu0 %v1155
        %1512 = vmatpush.bf16.msra.mxu0 %v1149
        %1513 = vmatpush.bf16.msra.mxu0 %v1143
        %1514 = vmatpush.bf16.msra.mxu0 %v1137
        %1515 = vmatpush.bf16.msra.mxu0 %v1131
        %1516 = vmatpush.bf16.msra.mxu0 %v1125
        %1517 = vmatpush.bf16.msra.mxu0 %v1119
        %1518 = vmatpush.bf16.msra.mxu0 %v1113
        %1519 = vmatmul.bf16.gmra.mxu0 %v506
        %v1520 = vpop.f32.mrf.mxu0
        %v1521 = vadd.f32 %v1507, %v1520
        %v1522 = vpop.f32.mrf.mxu0
        %v1523 = vadd.f32 %v1509, %v1522
        %1524 = vdwg.mxu0
        %1525 = vmatpush.bf16.msra.mxu0 0
        %1526 = vmatpush.bf16.msra.mxu0 0
        %1527 = vmatpush.bf16.msra.mxu0 0
        %1528 = vmatpush.bf16.msra.mxu0 0
        %1529 = vmatpush.bf16.msra.mxu0 %v1360
        %1530 = vmatpush.bf16.msra.mxu0 %v1173
        %1531 = vmatpush.bf16.msra.mxu0 %v1167
        %1532 = vmatpush.bf16.msra.mxu0 %v1161
        %1533 = vmatmul.bf16.gmra.mxu0 %v1347
        %v1534 = vpop.f32.mrf.mxu0
        %v1535 = vadd.f32 %v1521, %v1534
        %v1536 = vpop.f32.mrf.mxu0
        %v1537 = vadd.f32 %v1523, %v1536
        %1538 = vdwg.mxu0
        %1539 = vmatpush.bf16.msra.mxu0 %v1060
        %1540 = vmatpush.bf16.msra.mxu0 %v1054
        %1541 = vmatpush.bf16.msra.mxu0 %v1048
        %1542 = vmatpush.bf16.msra.mxu0 %v1042
        %1543 = vmatpush.bf16.msra.mxu0 %v1036
        %1544 = vmatpush.bf16.msra.mxu0 %v1030
        %1545 = vmatpush.bf16.msra.mxu0 %v1024
        %1546 = vmatpush.bf16.msra.mxu0 %v1018
        %1547 = vmatmul.bf16.gmra.mxu0 %v504
        %v1548 = vpop.f32.mrf.mxu0
        %v1549 = vadd.f32 0.0, %v1548
        %v1550 = vpop.f32.mrf.mxu0
        %v1551 = vadd.f32 0.0, %v1550
        %1552 = vdwg.mxu0
        %1553 = vmatpush.bf16.msra.mxu0 %v1108
        %1554 = vmatpush.bf16.msra.mxu0 %v1102
        %1555 = vmatpush.bf16.msra.mxu0 %v1096
        %1556 = vmatpush.bf16.msra.mxu0 %v1090
        %1557 = vmatpush.bf16.msra.mxu0 %v1084
        %1558 = vmatpush.bf16.msra.mxu0 %v1078
        %1559 = vmatpush.bf16.msra.mxu0 %v1072
        %1560 = vmatpush.bf16.msra.mxu0 %v1066
        %1561 = vmatmul.bf16.gmra.mxu0 %v505
        %v1562 = vpop.f32.mrf.mxu0
        %v1563 = vadd.f32 %v1549, %v1562
        %v1564 = vpop.f32.mrf.mxu0
        %v1565 = vadd.f32 %v1551, %v1564
        %1566 = vdwg.mxu0
        %1567 = vmatpush.bf16.msra.mxu0 %v1156
        %1568 = vmatpush.bf16.msra.mxu0 %v1150
        %1569 = vmatpush.bf16.msra.mxu0 %v1144
        %1570 = vmatpush.bf16.msra.mxu0 %v1138
        %1571 = vmatpush.bf16.msra.mxu0 %v1132
        %1572 = vmatpush.bf16.msra.mxu0 %v1126
        %1573 = vmatpush.bf16.msra.mxu0 %v1120
        %1574 = vmatpush.bf16.msra.mxu0 %v1114
        %1575 = vmatmul.bf16.gmra.mxu0 %v506
        %v1576 = vpop.f32.mrf.mxu0
        %v1577 = vadd.f32 %v1563, %v1576
        %v1578 = vpop.f32.mrf.mxu0
        %v1579 = vadd.f32 %v1565, %v1578
        %1580 = vdwg.mxu0
        %1581 = vmatpush.bf16.msra.mxu0 0
        %1582 = vmatpush.bf16.msra.mxu0 0
        %1583 = vmatpush.bf16.msra.mxu0 0
        %1584 = vmatpush.bf16.msra.mxu0 0
        %1585 = vmatpush.bf16.msra.mxu0 %v1363
        %1586 = vmatpush.bf16.msra.mxu0 %v1174
        %1587 = vmatpush.bf16.msra.mxu0 %v1168
        %1588 = vmatpush.bf16.msra.mxu0 %v1162
        %1589 = vmatmul.bf16.gmra.mxu0 %v1347
        %v1590 = vpop.f32.mrf.mxu0
        %v1591 = vadd.f32 %v1577, %v1590
        %v1592 = vpop.f32.mrf.mxu0
        %v1593 = vadd.f32 %v1579, %v1592
        %1594 = vdwg.mxu0
        %1595 = vmatpush.bf16.msra.mxu0 %v1061
        %1596 = vmatpush.bf16.msra.mxu0 %v1055
        %1597 = vmatpush.bf16.msra.mxu0 %v1049
        %1598 = vmatpush.bf16.msra.mxu0 %v1043
        %1599 = vmatpush.bf16.msra.mxu0 %v1037
        %1600 = vmatpush.bf16.msra.mxu0 %v1031
        %1601 = vmatpush.bf16.msra.mxu0 %v1025
        %1602 = vmatpush.bf16.msra.mxu0 %v1019
        %1603 = vmatmul.bf16.gmra.mxu0 %v504
        %v1604 = vpop.f32.mrf.mxu0
        %v1605 = vadd.f32 0.0, %v1604
        %v1606 = vpop.f32.mrf.mxu0
        %v1607 = vadd.f32 0.0, %v1606
        %1608 = vdwg.mxu0
        %1609 = vmatpush.bf16.msra.mxu0 %v1109
        %1610 = vmatpush.bf16.msra.mxu0 %v1103
        %1611 = vmatpush.bf16.msra.mxu0 %v1097
        %1612 = vmatpush.bf16.msra.mxu0 %v1091
        %1613 = vmatpush.bf16.msra.mxu0 %v1085
        %1614 = vmatpush.bf16.msra.mxu0 %v1079
        %1615 = vmatpush.bf16.msra.mxu0 %v1073
        %1616 = vmatpush.bf16.msra.mxu0 %v1067
        %1617 = vmatmul.bf16.gmra.mxu0 %v505
        %v1618 = vpop.f32.mrf.mxu0
        %v1619 = vadd.f32 %v1605, %v1618
        %v1620 = vpop.f32.mrf.mxu0
        %v1621 = vadd.f32 %v1607, %v1620
        %1622 = vdwg.mxu0
        %1623 = vmatpush.bf16.msra.mxu0 %v1157
        %1624 = vmatpush.bf16.msra.mxu0 %v1151
        %1625 = vmatpush.bf16.msra.mxu0 %v1145
        %1626 = vmatpush.bf16.msra.mxu0 %v1139
        %1627 = vmatpush.bf16.msra.mxu0 %v1133
        %1628 = vmatpush.bf16.msra.mxu0 %v1127
        %1629 = vmatpush.bf16.msra.mxu0 %v1121
        %1630 = vmatpush.bf16.msra.mxu0 %v1115
        %1631 = vmatmul.bf16.gmra.mxu0 %v506
        %v1632 = vpop.f32.mrf.mxu0
        %v1633 = vadd.f32 %v1619, %v1632
        %v1634 = vpop.f32.mrf.mxu0
        %v1635 = vadd.f32 %v1621, %v1634
        %1636 = vdwg.mxu0
        %1637 = vmatpush.bf16.msra.mxu0 0
        %1638 = vmatpush.bf16.msra.mxu0 0
        %1639 = vmatpush.bf16.msra.mxu0 0
        %1640 = vmatpush.bf16.msra.mxu0 0
        %1641 = vmatpush.bf16.msra.mxu0 %v1366
        %1642 = vmatpush.bf16.msra.mxu0 %v1175
        %1643 = vmatpush.bf16.msra.mxu0 %v1169
        %1644 = vmatpush.bf16.msra.mxu0 %v1163
        %1645 = vmatmul.bf16.gmra.mxu0 %v1347
        %v1646 = vpop.f32.mrf.mxu0
        %v1647 = vadd.f32 %v1633, %v1646
        %v1648 = vpop.f32.mrf.mxu0
        %v1649 = vadd.f32 %v1635, %v1648
        %1650 = vdwg.mxu0
        %1651 = vmatpush.bf16.msra.mxu0 %v1062
        %1652 = vmatpush.bf16.msra.mxu0 %v1056
        %1653 = vmatpush.bf16.msra.mxu0 %v1050
        %1654 = vmatpush.bf16.msra.mxu0 %v1044
        %1655 = vmatpush.bf16.msra.mxu0 %v1038
        %1656 = vmatpush.bf16.msra.mxu0 %v1032
        %1657 = vmatpush.bf16.msra.mxu0 %v1026
        %1658 = vmatpush.bf16.msra.mxu0 %v1020
        %1659 = vmatmul.bf16.gmra.mxu0 %v504
        %v1660 = vpop.f32.mrf.mxu0
        %v1661 = vadd.f32 0.0, %v1660
        %v1662 = vpop.f32.mrf.mxu0
        %v1663 = vadd.f32 0.0, %v1662
        %1664 = vdwg.mxu0
        %1665 = vmatpush.bf16.msra.mxu0 %v1110
        %1666 = vmatpush.bf16.msra.mxu0 %v1104
        %1667 = vmatpush.bf16.msra.mxu0 %v1098
        %1668 = vmatpush.bf16.msra.mxu0 %v1092
        %1669 = vmatpush.bf16.msra.mxu0 %v1086
        %1670 = vmatpush.bf16.msra.mxu0 %v1080
        %1671 = vmatpush.bf16.msra.mxu0 %v1074
        %1672 = vmatpush.bf16.msra.mxu0 %v1068
        %1673 = vmatmul.bf16.gmra.mxu0 %v505
        %v1674 = vpop.f32.mrf.mxu0
        %v1675 = vadd.f32 %v1661, %v1674
        %v1676 = vpop.f32.mrf.mxu0
        %v1677 = vadd.f32 %v1663, %v1676
        %1678 = vdwg.mxu0
        %1679 = vmatpush.bf16.msra.mxu0 %v1158
        %1680 = vmatpush.bf16.msra.mxu0 %v1152
        %1681 = vmatpush.bf16.msra.mxu0 %v1146
        %1682 = vmatpush.bf16.msra.mxu0 %v1140
        %1683 = vmatpush.bf16.msra.mxu0 %v1134
        %1684 = vmatpush.bf16.msra.mxu0 %v1128
        %1685 = vmatpush.bf16.msra.mxu0 %v1122
        %1686 = vmatpush.bf16.msra.mxu0 %v1116
        %1687 = vmatmul.bf16.gmra.mxu0 %v506
        %v1688 = vpop.f32.mrf.mxu0
        %v1689 = vadd.f32 %v1675, %v1688
        %v1690 = vpop.f32.mrf.mxu0
        %v1691 = vadd.f32 %v1677, %v1690
        %1692 = vdwg.mxu0
        %1693 = vmatpush.bf16.msra.mxu0 0
        %1694 = vmatpush.bf16.msra.mxu0 0
        %1695 = vmatpush.bf16.msra.mxu0 0
        %1696 = vmatpush.bf16.msra.mxu0 0
        %1697 = vmatpush.bf16.msra.mxu0 %v1369
        %1698 = vmatpush.bf16.msra.mxu0 %v1176
        %1699 = vmatpush.bf16.msra.mxu0 %v1170
        %1700 = vmatpush.bf16.msra.mxu0 %v1164
        %1701 = vmatmul.bf16.gmra.mxu0 %v1347
        %v1702 = vpop.f32.mrf.mxu0
        %v1703 = vadd.f32 %v1689, %v1702
        %v1704 = vpop.f32.mrf.mxu0
        %v1705 = vadd.f32 %v1691, %v1704
        %1706 = vdwg.mxu0
        %v1707 = vld [vmem:[%s310] sm:$0xff]
        %v1708 = vld [vmem:[%s310 + $0x8] sm:$0xff]
        %v1709 = vld [vmem:[%s310 + $0x10] sm:$0xff]
        %v1710 = vld [vmem:[%s310 + $0x18] sm:$0xff]
        %v1711 = vld [vmem:[%s310 + $0x20] sm:$0xff]
        %v1712 = vld [vmem:[%s310 + $0x28] sm:$0xff]
        %v1713 = vld [vmem:[%s3] sm:$0x7]
        %v1714 = vld [vmem:[%s4] sm:$0x7]
        %v1715 = vadd.f32 %v1707, %v1708
        %v1716 = vadd.f32 %v1715, %v1709
        %1717 = vadd.xlane.f32.xlu0 %v1716
        %v1718 = vpop.xlane.xlu0 %1717
        %v1719 = vadd.f32 %v1710, %v1711
        %v1720 = vadd.f32 %v1719, %v1712
        %1721 = vadd.xlane.f32.xlu0 %v1720
        %v1722 = vpop.xlane.xlu0 %1721
        %v1723 = vrcp.pop 384.0
        %v1724 = vmul.f32 384.0, %v1723
        %v1725 = vsub.f32 1.0, %v1724
        %v1726 = vmul.f32 %v1723, %v1725
        %v1727 = vadd.f32 %v1723, %v1726
        %vm1728 = vweird.f32 %v1723
        %v1729 = vsel %vm1728, %v1723, %v1727
        %v1730 = vmul.f32 %v1718, %v1729
        %v1731 = vmul.f32 %v1722, %v1729
        %v1732 = vmul.f32 %v1707, %v1707
        %v1733 = vmul.f32 %v1708, %v1708
        %v1734 = vmul.f32 %v1709, %v1709
        %v1735 = vmul.f32 %v1710, %v1710
        %v1736 = vmul.f32 %v1711, %v1711
        %v1737 = vmul.f32 %v1712, %v1712
        %v1738 = vadd.f32 %v1732, %v1733
        %v1739 = vadd.f32 %v1738, %v1734
        %1740 = vadd.xlane.f32.xlu0 %v1739
        %v1741 = vpop.xlane.xlu0 %1740
        %v1742 = vadd.f32 %v1735, %v1736
        %v1743 = vadd.f32 %v1742, %v1737
        %1744 = vadd.xlane.f32.xlu0 %v1743
        %v1745 = vpop.xlane.xlu0 %1744
        %v1746 = vmul.f32 %v1741, %v1729
        %v1747 = vmul.f32 %v1745, %v1729
        %v1748 = vmul.f32 %v1730, %v1730
        %v1749 = vmul.f32 %v1731, %v1731
        %v1750 = vsub.f32 %v1746, %v1748
        %v1751 = vsub.f32 %v1747, %v1749
        %v1752 = vsub.f32 %v1707, %v1730
        %v1753 = vsub.f32 %v1708, %v1730
        %v1754 = vsub.f32 %v1709, %v1730
        %v1755 = vsub.f32 %v1710, %v1731
        %v1756 = vsub.f32 %v1711, %v1731
        %v1757 = vsub.f32 %v1712, %v1731
        %v1758 = vadd.f32 %v1750, 1e-05
        %v1759 = vadd.f32 %v1751, 1e-05
        %v1760 = vrsqrt.pop %v1758
        %v1761 = vmul.f32 %v1760, %v1758
        %v1762 = vmul.f32 %v1761, %v1760
        %v1763 = vmul.f32 0.5, %v1762
        %v1764 = vsub.f32 1.5, %v1763
        %v1765 = vmul.f32 %v1760, %v1764
        %vm1766 = vweird.f32 %v1758
        %vm1767 = vweird.f32 %v1760
        %vm1768 = vmor %vm1766, %vm1767
        %v1769 = vsel %vm1768, %v1760, %v1765
        %v1770 = vrsqrt.pop %v1759
        %v1771 = vmul.f32 %v1770, %v1759
        %v1772 = vmul.f32 %v1771, %v1770
        %v1773 = vmul.f32 0.5, %v1772
        %v1774 = vsub.f32 1.5, %v1773
        %v1775 = vmul.f32 %v1770, %v1774
        %vm1776 = vweird.f32 %v1759
        %vm1777 = vweird.f32 %v1770
        %vm1778 = vmor %vm1776, %vm1777
        %v1779 = vsel %vm1778, %v1770, %v1775
        %v1780 = vmul.f32 %v1752, %v1769
        %v1781 = vmul.f32 %v1753, %v1769
        %v1782 = vmul.f32 %v1754, %v1769
        %v1783 = vmul.f32 %v1755, %v1779
        %v1784 = vmul.f32 %v1756, %v1779
        %v1785 = vmul.f32 %v1757, %v1779
        %v1787 = vperm.slane %v1713, 0
        %v1788 = vperm.slane %v1713, 1
        %v1789 = vperm.slane %v1713, 2
        %v1793 = vmul.f32 %v1780, %v1787
        %v1794 = vmul.f32 %v1781, %v1788
        %v1795 = vmul.f32 %v1782, %v1789
        %v1796 = vmul.f32 %v1783, %v1787
        %v1797 = vmul.f32 %v1784, %v1788
        %v1798 = vmul.f32 %v1785, %v1789
        %v1800 = vperm.slane %v1714, 0
        %v1801 = vperm.slane %v1714, 1
        %v1802 = vperm.slane %v1714, 2
        %v1806 = vadd.f32 %v1793, %v1800
        %v1807 = vadd.f32 %v1794, %v1801
        %v1808 = vadd.f32 %v1795, %v1802
        %v1809 = vadd.f32 %v1796, %v1800
        %v1810 = vadd.f32 %v1797, %v1801
        %v1811 = vadd.f32 %v1798, %v1802
        %v1812 = vpack.c.bf16 %v1809, %v1806
        %v1813 = vpack.c.bf16 %v1810, %v1807
        %v1814 = vpack.c.bf16 %v1811, %v1808
        %v1815 = vld [vmem:[#allocation4] sm:$0xff]
        %v1816 = vld [vmem:[#allocation4 + $0x8] sm:$0xf]
        %v1817 = vld [vmem:[#allocation4 + $0xc] sm:$0xff]
        %v1818 = vld [vmem:[#allocation4 + $0x14] sm:$0xf]
        %v1819 = vld [vmem:[#allocation4 + $0x18] sm:$0xff]
        %v1820 = vld [vmem:[#allocation4 + $0x20] sm:$0xf]
        %v1821 = vld [vmem:[#allocation4 + $0x24] sm:$0xff]
        %v1822 = vld [vmem:[#allocation4 + $0x2c] sm:$0xf]
        %v1823 = vld [vmem:[#allocation4 + $0x30] sm:$0xff]
        %v1824 = vld [vmem:[#allocation4 + $0x38] sm:$0xf]
        %v1825 = vld [vmem:[#allocation4 + $0x3c] sm:$0xff]
        %v1826 = vld [vmem:[#allocation4 + $0x44] sm:$0xf]
        %v1827 = vld [vmem:[#allocation4 + $0x48] sm:$0xff]
        %v1828 = vld [vmem:[#allocation4 + $0x50] sm:$0xf]
        %v1829 = vld [vmem:[#allocation4 + $0x54] sm:$0xff]
        %v1830 = vld [vmem:[#allocation4 + $0x5c] sm:$0xf]
        %v1831 = vld [vmem:[#allocation4 + $0x60] sm:$0xff]
        %v1832 = vld [vmem:[#allocation4 + $0x68] sm:$0xf]
        %v1833 = vld [vmem:[#allocation4 + $0x6c] sm:$0xff]
        %v1834 = vld [vmem:[#allocation4 + $0x74] sm:$0xf]
        %v1835 = vld [vmem:[#allocation4 + $0x78] sm:$0xff]
        %v1836 = vld [vmem:[#allocation4 + $0x80] sm:$0xf]
        %v1837 = vld [vmem:[#allocation4 + $0x84] sm:$0xff]
        %v1838 = vld [vmem:[#allocation4 + $0x8c] sm:$0xf]
        %v1839 = vld [vmem:[#allocation4 + $0x90] sm:$0xff]
        %v1840 = vld [vmem:[#allocation4 + $0x98] sm:$0xf]
        %v1841 = vld [vmem:[#allocation4 + $0x9c] sm:$0xff]
        %v1842 = vld [vmem:[#allocation4 + $0xa4] sm:$0xf]
        %v1843 = vld [vmem:[#allocation4 + $0xa8] sm:$0xff]
        %v1844 = vld [vmem:[#allocation4 + $0xb0] sm:$0xf]
        %v1845 = vld [vmem:[#allocation4 + $0xb4] sm:$0xff]
        %v1846 = vld [vmem:[#allocation4 + $0xbc] sm:$0xf]
        %v1847 = vld [vmem:[#allocation4 + $0xc0] sm:$0xff]
        %v1848 = vld [vmem:[#allocation4 + $0xc8] sm:$0xf]
        %v1849 = vld [vmem:[#allocation4 + $0xcc] sm:$0xff]
        %v1850 = vld [vmem:[#allocation4 + $0xd4] sm:$0xf]
        %v1851 = vld [vmem:[#allocation4 + $0xd8] sm:$0xff]
        %v1852 = vld [vmem:[#allocation4 + $0xe0] sm:$0xf]
        %v1853 = vld [vmem:[#allocation4 + $0xe4] sm:$0xff]
        %v1854 = vld [vmem:[#allocation4 + $0xec] sm:$0xf]
        %v1855 = vld [vmem:[#allocation4 + $0xf0] sm:$0xff]
        %v1856 = vld [vmem:[#allocation4 + $0xf8] sm:$0xf]
        %v1857 = vld [vmem:[#allocation4 + $0xfc] sm:$0xff]
        %v1858 = vld [vmem:[#allocation4 + $0x104] sm:$0xf]
        %v1859 = vld [vmem:[#allocation4 + $0x108] sm:$0xff]
        %v1860 = vld [vmem:[#allocation4 + $0x110] sm:$0xf]
        %v1861 = vld [vmem:[#allocation4 + $0x114] sm:$0xff]
        %v1862 = vld [vmem:[#allocation4 + $0x11c] sm:$0xf]
        %v1863 = vld [vmem:[#allocation4 + $0x120] sm:$0xff]
        %v1864 = vld [vmem:[#allocation4 + $0x128] sm:$0xf]
        %v1865 = vld [vmem:[#allocation4 + $0x12c] sm:$0xff]
        %v1866 = vld [vmem:[#allocation4 + $0x134] sm:$0xf]
        %v1867 = vld [vmem:[#allocation4 + $0x138] sm:$0xff]
        %v1868 = vld [vmem:[#allocation4 + $0x140] sm:$0xf]
        %v1869 = vld [vmem:[#allocation4 + $0x144] sm:$0xff]
        %v1870 = vld [vmem:[#allocation4 + $0x14c] sm:$0xf]
        %v1871 = vld [vmem:[#allocation4 + $0x150] sm:$0xff]
        %v1872 = vld [vmem:[#allocation4 + $0x158] sm:$0xf]
        %v1873 = vld [vmem:[#allocation4 + $0x15c] sm:$0xff]
        %v1874 = vld [vmem:[#allocation4 + $0x164] sm:$0xf]
        %v1875 = vld [vmem:[#allocation4 + $0x168] sm:$0xff]
        %v1876 = vld [vmem:[#allocation4 + $0x170] sm:$0xf]
        %v1877 = vld [vmem:[#allocation4 + $0x174] sm:$0xff]
        %v1878 = vld [vmem:[#allocation4 + $0x17c] sm:$0xf]
        %v1879 = vld [vmem:[#allocation4 + $0x180] sm:$0xff]
        %v1880 = vld [vmem:[#allocation4 + $0x188] sm:$0xf]
        %v1881 = vld [vmem:[#allocation4 + $0x18c] sm:$0xff]
        %v1882 = vld [vmem:[#allocation4 + $0x194] sm:$0xf]
        %v1883 = vld [vmem:[#allocation4 + $0x198] sm:$0xff]
        %v1884 = vld [vmem:[#allocation4 + $0x1a0] sm:$0xf]
        %v1885 = vld [vmem:[#allocation4 + $0x1a4] sm:$0xff]
        %v1886 = vld [vmem:[#allocation4 + $0x1ac] sm:$0xf]
        %v1887 = vld [vmem:[#allocation4 + $0x1b0] sm:$0xff]
        %v1888 = vld [vmem:[#allocation4 + $0x1b8] sm:$0xf]
        %v1889 = vld [vmem:[#allocation4 + $0x1bc] sm:$0xff]
        %v1890 = vld [vmem:[#allocation4 + $0x1c4] sm:$0xf]
        %v1891 = vld [vmem:[#allocation4 + $0x1c8] sm:$0xff]
        %v1892 = vld [vmem:[#allocation4 + $0x1d0] sm:$0xf]
        %v1893 = vld [vmem:[#allocation4 + $0x1d4] sm:$0xff]
        %v1894 = vld [vmem:[#allocation4 + $0x1dc] sm:$0xf]
        %v1895 = vld [vmem:[#allocation4 + $0x1e0] sm:$0xff]
        %v1896 = vld [vmem:[#allocation4 + $0x1e8] sm:$0xf]
        %v1897 = vld [vmem:[#allocation4 + $0x1ec] sm:$0xff]
        %v1898 = vld [vmem:[#allocation4 + $0x1f4] sm:$0xf]
        %v1899 = vld [vmem:[#allocation4 + $0x1f8] sm:$0xff]
        %v1900 = vld [vmem:[#allocation4 + $0x200] sm:$0xf]
        %v1901 = vld [vmem:[#allocation4 + $0x204] sm:$0xff]
        %v1902 = vld [vmem:[#allocation4 + $0x20c] sm:$0xf]
        %v1903 = vld [vmem:[#allocation4 + $0x210] sm:$0xff]
        %v1904 = vld [vmem:[#allocation4 + $0x218] sm:$0xf]
        %v1905 = vld [vmem:[#allocation4 + $0x21c] sm:$0xff]
        %v1906 = vld [vmem:[#allocation4 + $0x224] sm:$0xf]
        %v1907 = vld [vmem:[#allocation4 + $0x228] sm:$0xff]
        %v1908 = vld [vmem:[#allocation4 + $0x230] sm:$0xf]
        %v1909 = vld [vmem:[#allocation4 + $0x234] sm:$0xff]
        %v1910 = vld [vmem:[#allocation4 + $0x23c] sm:$0xf]
        %v2007 = vunpack.c.l.b16 %v1815
        %v2008 = vunpack.c.h.b16 %v1815
        %v2009 = vunpack.c.l.b16 %v1816
        %v2010 = vunpack.c.l.b16 %v1817
        %v2011 = vunpack.c.h.b16 %v1817
        %v2012 = vunpack.c.l.b16 %v1818
        %v2013 = vunpack.c.l.b16 %v1819
        %v2014 = vunpack.c.h.b16 %v1819
        %v2015 = vunpack.c.l.b16 %v1820
        %v2016 = vunpack.c.l.b16 %v1821
        %v2017 = vunpack.c.h.b16 %v1821
        %v2018 = vunpack.c.l.b16 %v1822
        %v2019 = vunpack.c.l.b16 %v1823
        %v2020 = vunpack.c.h.b16 %v1823
        %v2021 = vunpack.c.l.b16 %v1824
        %v2022 = vunpack.c.l.b16 %v1825
        %v2023 = vunpack.c.h.b16 %v1825
        %v2024 = vunpack.c.l.b16 %v1826
        %v2025 = vunpack.c.l.b16 %v1827
        %v2026 = vunpack.c.h.b16 %v1827
        %v2027 = vunpack.c.l.b16 %v1828
        %v2028 = vunpack.c.l.b16 %v1829
        %v2029 = vunpack.c.h.b16 %v1829
        %v2030 = vunpack.c.l.b16 %v1830
        %v2031 = vunpack.c.l.b16 %v1831
        %v2032 = vunpack.c.h.b16 %v1831
        %v2033 = vunpack.c.l.b16 %v1832
        %v2034 = vunpack.c.l.b16 %v1833
        %v2035 = vunpack.c.h.b16 %v1833
        %v2036 = vunpack.c.l.b16 %v1834
        %v2037 = vunpack.c.l.b16 %v1835
        %v2038 = vunpack.c.h.b16 %v1835
        %v2039 = vunpack.c.l.b16 %v1836
        %v2040 = vunpack.c.l.b16 %v1837
        %v2041 = vunpack.c.h.b16 %v1837
        %v2042 = vunpack.c.l.b16 %v1838
        %v2043 = vunpack.c.l.b16 %v1839
        %v2044 = vunpack.c.h.b16 %v1839
        %v2045 = vunpack.c.l.b16 %v1840
        %v2046 = vunpack.c.l.b16 %v1841
        %v2047 = vunpack.c.h.b16 %v1841
        %v2048 = vunpack.c.l.b16 %v1842
        %v2049 = vunpack.c.l.b16 %v1843
        %v2050 = vunpack.c.h.b16 %v1843
        %v2051 = vunpack.c.l.b16 %v1844
        %v2052 = vunpack.c.l.b16 %v1845
        %v2053 = vunpack.c.h.b16 %v1845
        %v2054 = vunpack.c.l.b16 %v1846
        %v2055 = vunpack.c.l.b16 %v1847
        %v2056 = vunpack.c.h.b16 %v1847
        %v2057 = vunpack.c.l.b16 %v1848
        %v2058 = vunpack.c.l.b16 %v1849
        %v2059 = vunpack.c.h.b16 %v1849
        %v2060 = vunpack.c.l.b16 %v1850
        %v2061 = vunpack.c.l.b16 %v1851
        %v2062 = vunpack.c.h.b16 %v1851
        %v2063 = vunpack.c.l.b16 %v1852
        %v2064 = vunpack.c.l.b16 %v1853
        %v2065 = vunpack.c.h.b16 %v1853
        %v2066 = vunpack.c.l.b16 %v1854
        %v2067 = vunpack.c.l.b16 %v1855
        %v2068 = vunpack.c.h.b16 %v1855
        %v2069 = vunpack.c.l.b16 %v1856
        %v2070 = vunpack.c.l.b16 %v1857
        %v2071 = vunpack.c.h.b16 %v1857
        %v2072 = vunpack.c.l.b16 %v1858
        %v2073 = vunpack.c.l.b16 %v1859
        %v2074 = vunpack.c.h.b16 %v1859
        %v2075 = vunpack.c.l.b16 %v1860
        %v2076 = vunpack.c.l.b16 %v1861
        %v2077 = vunpack.c.h.b16 %v1861
        %v2078 = vunpack.c.l.b16 %v1862
        %v2079 = vunpack.c.l.b16 %v1863
        %v2080 = vunpack.c.h.b16 %v1863
        %v2081 = vunpack.c.l.b16 %v1864
        %v2082 = vunpack.c.l.b16 %v1865
        %v2083 = vunpack.c.h.b16 %v1865
        %v2084 = vunpack.c.l.b16 %v1866
        %v2085 = vunpack.c.l.b16 %v1867
        %v2086 = vunpack.c.h.b16 %v1867
        %v2087 = vunpack.c.l.b16 %v1868
        %v2088 = vunpack.c.l.b16 %v1869
        %v2089 = vunpack.c.h.b16 %v1869
        %v2090 = vunpack.c.l.b16 %v1870
        %v2091 = vunpack.c.l.b16 %v1871
        %v2092 = vunpack.c.h.b16 %v1871
        %v2093 = vunpack.c.l.b16 %v1872
        %v2094 = vunpack.c.l.b16 %v1873
        %v2095 = vunpack.c.h.b16 %v1873
        %v2096 = vunpack.c.l.b16 %v1874
        %v2097 = vunpack.c.l.b16 %v1875
        %v2098 = vunpack.c.h.b16 %v1875
        %v2099 = vunpack.c.l.b16 %v1876
        %v2100 = vunpack.c.l.b16 %v1877
        %v2101 = vunpack.c.h.b16 %v1877
        %v2102 = vunpack.c.l.b16 %v1878
        %v2103 = vunpack.c.l.b16 %v1879
        %v2104 = vunpack.c.h.b16 %v1879
        %v2105 = vunpack.c.l.b16 %v1880
        %v2106 = vunpack.c.l.b16 %v1881
        %v2107 = vunpack.c.h.b16 %v1881
        %v2108 = vunpack.c.l.b16 %v1882
        %v2109 = vunpack.c.l.b16 %v1883
        %v2110 = vunpack.c.h.b16 %v1883
        %v2111 = vunpack.c.l.b16 %v1884
        %v2112 = vunpack.c.l.b16 %v1885
        %v2113 = vunpack.c.h.b16 %v1885
        %v2114 = vunpack.c.l.b16 %v1886
        %v2115 = vunpack.c.l.b16 %v1887
        %v2116 = vunpack.c.h.b16 %v1887
        %v2117 = vunpack.c.l.b16 %v1888
        %v2118 = vunpack.c.l.b16 %v1889
        %v2119 = vunpack.c.h.b16 %v1889
        %v2120 = vunpack.c.l.b16 %v1890
        %v2121 = vunpack.c.l.b16 %v1891
        %v2122 = vunpack.c.h.b16 %v1891
        %v2123 = vunpack.c.l.b16 %v1892
        %v2124 = vunpack.c.l.b16 %v1893
        %v2125 = vunpack.c.h.b16 %v1893
        %v2126 = vunpack.c.l.b16 %v1894
        %v2127 = vunpack.c.l.b16 %v1895
        %v2128 = vunpack.c.h.b16 %v1895
        %v2129 = vunpack.c.l.b16 %v1896
        %v2130 = vunpack.c.l.b16 %v1897
        %v2131 = vunpack.c.h.b16 %v1897
        %v2132 = vunpack.c.l.b16 %v1898
        %v2133 = vunpack.c.l.b16 %v1899
        %v2134 = vunpack.c.h.b16 %v1899
        %v2135 = vunpack.c.l.b16 %v1900
        %v2136 = vunpack.c.l.b16 %v1901
        %v2137 = vunpack.c.h.b16 %v1901
        %v2138 = vunpack.c.l.b16 %v1902
        %v2139 = vunpack.c.l.b16 %v1903
        %v2140 = vunpack.c.h.b16 %v1903
        %v2141 = vunpack.c.l.b16 %v1904
        %v2142 = vunpack.c.l.b16 %v1905
        %v2143 = vunpack.c.h.b16 %v1905
        %v2144 = vunpack.c.l.b16 %v1906
        %v2145 = vunpack.c.l.b16 %v1907
        %v2146 = vunpack.c.h.b16 %v1907
        %v2147 = vunpack.c.l.b16 %v1908
        %v2148 = vunpack.c.l.b16 %v1909
        %v2149 = vunpack.c.h.b16 %v1909
        %v2150 = vunpack.c.l.b16 %v1910
        %v2151 = vpack.c.b16 %v2010, %v2007
        %v2152 = vpack.c.b16 %v2011, %v2008
        %v2153 = vpack.c.b16 %v2012, %v2009
        %v2154 = vpack.c.b16 %v2016, %v2013
        %v2155 = vpack.c.b16 %v2017, %v2014
        %v2156 = vpack.c.b16 %v2018, %v2015
        %v2157 = vpack.c.b16 %v2022, %v2019
        %v2158 = vpack.c.b16 %v2023, %v2020
        %v2159 = vpack.c.b16 %v2024, %v2021
        %v2160 = vpack.c.b16 %v2028, %v2025
        %v2161 = vpack.c.b16 %v2029, %v2026
        %v2162 = vpack.c.b16 %v2030, %v2027
        %v2163 = vpack.c.b16 %v2034, %v2031
        %v2164 = vpack.c.b16 %v2035, %v2032
        %v2165 = vpack.c.b16 %v2036, %v2033
        %v2166 = vpack.c.b16 %v2040, %v2037
        %v2167 = vpack.c.b16 %v2041, %v2038
        %v2168 = vpack.c.b16 %v2042, %v2039
        %v2169 = vpack.c.b16 %v2046, %v2043
        %v2170 = vpack.c.b16 %v2047, %v2044
        %v2171 = vpack.c.b16 %v2048, %v2045
        %v2172 = vpack.c.b16 %v2052, %v2049
        %v2173 = vpack.c.b16 %v2053, %v2050
        %v2174 = vpack.c.b16 %v2054, %v2051
        %v2175 = vpack.c.b16 %v2058, %v2055
        %v2176 = vpack.c.b16 %v2059, %v2056
        %v2177 = vpack.c.b16 %v2060, %v2057
        %v2178 = vpack.c.b16 %v2064, %v2061
        %v2179 = vpack.c.b16 %v2065, %v2062
        %v2180 = vpack.c.b16 %v2066, %v2063
        %v2181 = vpack.c.b16 %v2070, %v2067
        %v2182 = vpack.c.b16 %v2071, %v2068
        %v2183 = vpack.c.b16 %v2072, %v2069
        %v2184 = vpack.c.b16 %v2076, %v2073
        %v2185 = vpack.c.b16 %v2077, %v2074
        %v2186 = vpack.c.b16 %v2078, %v2075
        %v2187 = vpack.c.b16 %v2082, %v2079
        %v2188 = vpack.c.b16 %v2083, %v2080
        %v2189 = vpack.c.b16 %v2084, %v2081
        %v2190 = vpack.c.b16 %v2088, %v2085
        %v2191 = vpack.c.b16 %v2089, %v2086
        %v2192 = vpack.c.b16 %v2090, %v2087
        %v2193 = vpack.c.b16 %v2094, %v2091
        %v2194 = vpack.c.b16 %v2095, %v2092
        %v2195 = vpack.c.b16 %v2096, %v2093
        %v2196 = vpack.c.b16 %v2100, %v2097
        %v2197 = vpack.c.b16 %v2101, %v2098
        %v2198 = vpack.c.b16 %v2102, %v2099
        %v2199 = vpack.c.b16 %v2106, %v2103
        %v2200 = vpack.c.b16 %v2107, %v2104
        %v2201 = vpack.c.b16 %v2108, %v2105
        %v2202 = vpack.c.b16 %v2112, %v2109
        %v2203 = vpack.c.b16 %v2113, %v2110
        %v2204 = vpack.c.b16 %v2114, %v2111
        %v2205 = vpack.c.b16 %v2118, %v2115
        %v2206 = vpack.c.b16 %v2119, %v2116
        %v2207 = vpack.c.b16 %v2120, %v2117
        %v2208 = vpack.c.b16 %v2124, %v2121
        %v2209 = vpack.c.b16 %v2125, %v2122
        %v2210 = vpack.c.b16 %v2126, %v2123
        %v2211 = vpack.c.b16 %v2130, %v2127
        %v2212 = vpack.c.b16 %v2131, %v2128
        %v2213 = vpack.c.b16 %v2132, %v2129
        %v2214 = vpack.c.b16 %v2136, %v2133
        %v2215 = vpack.c.b16 %v2137, %v2134
        %v2216 = vpack.c.b16 %v2138, %v2135
        %v2217 = vpack.c.b16 %v2142, %v2139
        %v2218 = vpack.c.b16 %v2143, %v2140
        %v2219 = vpack.c.b16 %v2144, %v2141
        %v2220 = vpack.c.b16 %v2148, %v2145
        %v2221 = vpack.c.b16 %v2149, %v2146
        %v2222 = vpack.c.b16 %v2150, %v2147
        %2295 = vmatpush.bf16.msra.mxu0 %v2172
        %2296 = vmatpush.bf16.msra.mxu0 %v2169
        %2297 = vmatpush.bf16.msra.mxu0 %v2166
        %2298 = vmatpush.bf16.msra.mxu0 %v2163
        %2299 = vmatpush.bf16.msra.mxu0 %v2160
        %2300 = vmatpush.bf16.msra.mxu0 %v2157
        %2301 = vmatpush.bf16.msra.mxu0 %v2154
        %2302 = vmatpush.bf16.msra.mxu0 %v2151
        %2303 = vmatmul.bf16.gmra.mxu0 %v1812
        %v2304 = vpop.f32.mrf.mxu0
        %v2305 = vadd.f32 0.0, %v2304
        %v2306 = vpop.f32.mrf.mxu0
        %v2307 = vadd.f32 0.0, %v2306
        %2308 = vdwg.mxu0
        %2309 = vmatpush.bf16.msra.mxu0 %v2196
        %2310 = vmatpush.bf16.msra.mxu0 %v2193
        %2311 = vmatpush.bf16.msra.mxu0 %v2190
        %2312 = vmatpush.bf16.msra.mxu0 %v2187
        %2313 = vmatpush.bf16.msra.mxu0 %v2184
        %2314 = vmatpush.bf16.msra.mxu0 %v2181
        %2315 = vmatpush.bf16.msra.mxu0 %v2178
        %2316 = vmatpush.bf16.msra.mxu0 %v2175
        %2317 = vmatmul.bf16.gmra.mxu0 %v1813
        %v2318 = vpop.f32.mrf.mxu0
        %v2319 = vadd.f32 %v2305, %v2318
        %v2320 = vpop.f32.mrf.mxu0
        %v2321 = vadd.f32 %v2307, %v2320
        %2322 = vdwg.mxu0
        %2323 = vmatpush.bf16.msra.mxu0 %v2220
        %2324 = vmatpush.bf16.msra.mxu0 %v2217
        %2325 = vmatpush.bf16.msra.mxu0 %v2214
        %2326 = vmatpush.bf16.msra.mxu0 %v2211
        %2327 = vmatpush.bf16.msra.mxu0 %v2208
        %2328 = vmatpush.bf16.msra.mxu0 %v2205
        %2329 = vmatpush.bf16.msra.mxu0 %v2202
        %2330 = vmatpush.bf16.msra.mxu0 %v2199
        %2331 = vmatmul.bf16.gmra.mxu0 %v1814
        %v2332 = vpop.f32.mrf.mxu0
        %v2333 = vadd.f32 %v2319, %v2332
        %v2334 = vpop.f32.mrf.mxu0
        %v2335 = vadd.f32 %v2321, %v2334
        %2336 = vdwg.mxu0
        %2337 = vmatpush.bf16.msra.mxu0 %v2173
        %2338 = vmatpush.bf16.msra.mxu0 %v2170
        %2339 = vmatpush.bf16.msra.mxu0 %v2167
        %2340 = vmatpush.bf16.msra.mxu0 %v2164
        %2341 = vmatpush.bf16.msra.mxu0 %v2161
        %2342 = vmatpush.bf16.msra.mxu0 %v2158
        %2343 = vmatpush.bf16.msra.mxu0 %v2155
        %2344 = vmatpush.bf16.msra.mxu0 %v2152
        %2345 = vmatmul.bf16.gmra.mxu0 %v1812
        %v2346 = vpop.f32.mrf.mxu0
        %v2347 = vadd.f32 0.0, %v2346
        %v2348 = vpop.f32.mrf.mxu0
        %v2349 = vadd.f32 0.0, %v2348
        %2350 = vdwg.mxu0
        %2351 = vmatpush.bf16.msra.mxu0 %v2197
        %2352 = vmatpush.bf16.msra.mxu0 %v2194
        %2353 = vmatpush.bf16.msra.mxu0 %v2191
        %2354 = vmatpush.bf16.msra.mxu0 %v2188
        %2355 = vmatpush.bf16.msra.mxu0 %v2185
        %2356 = vmatpush.bf16.msra.mxu0 %v2182
        %2357 = vmatpush.bf16.msra.mxu0 %v2179
        %2358 = vmatpush.bf16.msra.mxu0 %v2176
        %2359 = vmatmul.bf16.gmra.mxu0 %v1813
        %v2360 = vpop.f32.mrf.mxu0
        %v2361 = vadd.f32 %v2347, %v2360
        %v2362 = vpop.f32.mrf.mxu0
        %v2363 = vadd.f32 %v2349, %v2362
        %2364 = vdwg.mxu0
        %2365 = vmatpush.bf16.msra.mxu0 %v2221
        %2366 = vmatpush.bf16.msra.mxu0 %v2218
        %2367 = vmatpush.bf16.msra.mxu0 %v2215
        %2368 = vmatpush.bf16.msra.mxu0 %v2212
        %2369 = vmatpush.bf16.msra.mxu0 %v2209
        %2370 = vmatpush.bf16.msra.mxu0 %v2206
        %2371 = vmatpush.bf16.msra.mxu0 %v2203
        %2372 = vmatpush.bf16.msra.mxu0 %v2200
        %2373 = vmatmul.bf16.gmra.mxu0 %v1814
        %v2374 = vpop.f32.mrf.mxu0
        %v2375 = vadd.f32 %v2361, %v2374
        %v2376 = vpop.f32.mrf.mxu0
        %v2377 = vadd.f32 %v2363, %v2376
        %2378 = vdwg.mxu0
        %2379 = vmatpush.bf16.msra.mxu0 %v2174
        %2380 = vmatpush.bf16.msra.mxu0 %v2171
        %2381 = vmatpush.bf16.msra.mxu0 %v2168
        %2382 = vmatpush.bf16.msra.mxu0 %v2165
        %2383 = vmatpush.bf16.msra.mxu0 %v2162
        %2384 = vmatpush.bf16.msra.mxu0 %v2159
        %2385 = vmatpush.bf16.msra.mxu0 %v2156
        %2386 = vmatpush.bf16.msra.mxu0 %v2153
        %2387 = vmatmul.bf16.gmra.mxu0 %v1812
        %v2388 = vpop.f32.mrf.mxu0
        %v2389 = vadd.f32 0.0, %v2388
        %v2390 = vpop.f32.mrf.mxu0
        %v2391 = vadd.f32 0.0, %v2390
        %2392 = vdwg.mxu0
        %2393 = vmatpush.bf16.msra.mxu0 %v2198
        %2394 = vmatpush.bf16.msra.mxu0 %v2195
        %2395 = vmatpush.bf16.msra.mxu0 %v2192
        %2396 = vmatpush.bf16.msra.mxu0 %v2189
        %2397 = vmatpush.bf16.msra.mxu0 %v2186
        %2398 = vmatpush.bf16.msra.mxu0 %v2183
        %2399 = vmatpush.bf16.msra.mxu0 %v2180
        %2400 = vmatpush.bf16.msra.mxu0 %v2177
        %2401 = vmatmul.bf16.gmra.mxu0 %v1813
        %v2402 = vpop.f32.mrf.mxu0
        %v2403 = vadd.f32 %v2389, %v2402
        %v2404 = vpop.f32.mrf.mxu0
        %v2405 = vadd.f32 %v2391, %v2404
        %2406 = vdwg.mxu0
        %2407 = vmatpush.bf16.msra.mxu0 %v2222
        %2408 = vmatpush.bf16.msra.mxu0 %v2219
        %2409 = vmatpush.bf16.msra.mxu0 %v2216
        %2410 = vmatpush.bf16.msra.mxu0 %v2213
        %2411 = vmatpush.bf16.msra.mxu0 %v2210
        %2412 = vmatpush.bf16.msra.mxu0 %v2207
        %2413 = vmatpush.bf16.msra.mxu0 %v2204
        %2414 = vmatpush.bf16.msra.mxu0 %v2201
        %2415 = vmatmul.bf16.gmra.mxu0 %v1814
        %v2416 = vpop.f32.mrf.mxu0
        %v2417 = vadd.f32 %v2403, %v2416
        %v2418 = vpop.f32.mrf.mxu0
        %v2419 = vadd.f32 %v2405, %v2418
        %2420 = vdwg.mxu0
        %2421 = vst [vmem:[%s317] sm:$0xff] %v1423
        %2422 = vst [vmem:[%s317 + $0x8] sm:$0xff] %v1479
        %2423 = vst [vmem:[%s317 + $0x30] sm:$0xff] %v1425
        %2424 = vst [vmem:[%s317 + $0x38] sm:$0xff] %v1481
        %v2425 = vadd.f32 %v1535, %v2333
        %v2426 = vadd.f32 %v1591, %v2375
        %v2427 = vadd.f32 %v1647, %v2417
        %v2428 = vadd.f32 %v1537, %v2335
        %v2429 = vadd.f32 %v1593, %v2377
        %v2430 = vadd.f32 %v1649, %v2419
        %2431 = vst [vmem:[%s317 + $0x10] sm:$0xff] %v2425
        %2432 = vst [vmem:[%s317 + $0x18] sm:$0xff] %v2426
        %2433 = vst [vmem:[%s317 + $0x20] sm:$0xff] %v2427
        %2434 = vst [vmem:[%s317 + $0x40] sm:$0xff] %v2428
        %2435 = vst [vmem:[%s317 + $0x48] sm:$0xff] %v2429
        %2436 = vst [vmem:[%s317 + $0x50] sm:$0xff] %v2430
        %vm2437 = vcmask 523264
        %2438 = vst.msk [vmem:[%s317 + $0x28] sm:$0xff] %vm2437, %v1703
        %2439 = vst.msk [vmem:[%s317 + $0x58] sm:$0xff] %vm2437, %v1705
        %s2440 = smul.u32 2, %s19
        %p2441 = scmp.lt.s32.totalorder %s2440, 3
        %s2442 = scalar_select %p2441, %s2440, 3
        %s2443 = smul.addr %s2442, 6
        %s2444 = smul.addr %s2443, 8
        %s2445 = scalar_lea.vmem %s6, %s2444
        // Predicated region
        $region53: #{evoformer_forward.3} parent=43 // pred_check
          %p2446 = pneg %p173
        $region54: #{evoformer_forward.3} parent=43 // pred_check_branch
          %2448 = sbr.rel (%p2446) target = $region56
        $region55: #{evoformer_forward.3} parent=43 // pred_region
          %s2449 = smul.u32 2, %s19
        $region56: #{evoformer_forward.3} parent=43 // pred_fallthru
          _
      $region44: #{evoformer_forward.3} parent=5 // pred_fallthru
        _
      %p2450 = scmp.le.s32.totalorder 2, %s14
      // Predicated region
      $region57: #{evoformer_forward.3} parent=5 // pred_check
        %p2451 = pneg %p2450
      $region58: #{evoformer_forward.3} parent=5 // pred_check_branch
        %2453 = sbr.rel (%p2451) target = $region60
      $region59: #{evoformer_forward.3} parent=5 // pred_region
        %s2454 = ssub.s32 %s14, 2
        // Predicated region
        $region61: #{evoformer_forward.3} parent=59 // pred_check
          %p2455 = pneg %p179
        $region62: #{evoformer_forward.3} parent=59 // pred_check_branch
          %2457 = sbr.rel (%p2455) target = $region64
        $region63: #{evoformer_forward.3} parent=59 // pred_region
          %s2458 = smul.u32 2, %s20
          %p2459 = scmp.lt.s32.totalorder %s2458, 3
          %s2460 = scalar_select %p2459, %s2458, 3
          %s2461 = smul.addr %s2460, 6
          %s2462 = smul.addr %s2461, 8
          %s2463 = scalar_lea.vmem %s6, %s2462
        $region64: #{evoformer_forward.3} parent=59 // pred_fallthru
          _
      $region60: #{evoformer_forward.3} parent=5 // pred_fallthru
        _
    $region6: #{evoformer_forward.3} parent=1 // loop_footer
      %s18 = sadd.s32 1, %s14
    $region7: #{evoformer_forward.3} parent=1 // loop_footer_branch
      %13 = sbr.rel target = $region3
    $region8: #{evoformer_forward.3} parent=1 // loop_exit
      _
    %2464 = vsyncpa [#allocation3], 1
    %s2465 = scalar_lea.sflag [#allocation3], 1
    %2466 = vsyncpa %s2465, 1
    %2467 = vsyncpa [#allocation5], 1

// kernel: evoformer_forward.4
$region0: #{evoformer_forward.4}
  #allocation0 [shape = 'u32[]', space=smem, size = 0x4, offset = 0x4, fixed_abs, tag = 'smem constant byte address 0x4 - core index']
  #allocation1 [shape = 'u32[72,128]{1,0:T(1,128)}', space=vmem, size = 0x9000, scoped, tag = 'internal scratch']
  #allocation2 [shape = 's32[1]{0}', space=sflag, size = 0x4, scoped, tag = 'scoped memory for evoformer_forward.4']
  #allocation3 [shape = 'u8[512]{0}', space=smem, size = 0x200, scoped, tag = 'prefetched SMEM operand 0']
  #allocation4 [shape = 'u8[512]{0}', space=smem, size = 0x200, scoped, tag = 'prefetched SMEM operand 1']
  %s0 = inlined_call_operand.vmem [shape: s32[4], index: 0, kind: input, shape index: {}]
  %s1 = inlined_call_operand.vmem [shape: s32[4], index: 1, kind: input, shape index: {}]
  %s2 = inlined_call_operand.vmem [shape: f32[32,704], index: 2, kind: input, shape index: {}, may-alias: {2,3}]
  %s3 = inlined_call_operand.vmem [shape: f32[32,704], index: 3, kind: input, shape index: {}, may-alias: {2,3}]
  %s4 = inlined_call_operand.vmem [shape: bf16[32,32,128], index: 4, kind: input, shape index: {}]
  %s5 = inlined_call_operand.vmem [shape: f32[1,128], index: 5, kind: input, shape index: {}]
  %s6 = inlined_call_operand.vmem [shape: f32[1,128], index: 6, kind: input, shape index: {}]
  %s7 = inlined_call_operand.vmem [shape: bf16[128,128], index: 7, kind: input, shape index: {}]
  %s8 = inlined_call_operand.vmem [shape: bf16[32,32,139], index: 8, kind: input, shape index: {}]
  %s9 = inlined_call_operand.vmem [shape: bf16[139,128], index: 9, kind: input, shape index: {}]
  %s10 = inlined_call_operand.vmem [shape: f32[1,128], index: 10, kind: input, shape index: {}]
  %s11 = inlined_call_operand.vmem [shape: f32[32,1], index: 11, kind: input, shape index: {}]
  %s12 = inlined_call_operand.vmem [shape: f32[1,32], index: 12, kind: input, shape index: {}]
  %s13 = inlined_call_operand.hbm [shape: bf16[32,32,128], index: 13, kind: output, shape index: {0}]
  %s14 = inlined_call_operand.hbm [shape: f32[32,32], index: 14, kind: output, shape index: {1}]
  %15 = xla_tuple %s13, %s14
  %s16 = sld [smem:[#allocation0]]
  $region131: #{evoformer_forward.4} parent=0
    _
  %s18 = ssub.s32 1, %s16
  %s19 = scalar_select 0, %s18, %s16
  %s21 = sshll.u32 %s0, 4
  %s22 = int_to_ptr.vmem [resolvable:$true] %s21
  %24 = dma.vmem_to_smem %s22, 16, [#allocation3], [#allocation2]
  %s26 = sshll.u32 %s1, 4
  %s27 = int_to_ptr.vmem [resolvable:$true] %s26
  %29 = dma.vmem_to_smem %s27, 16, [#allocation4], [#allocation2]
  %31 = dma.done [#allocation2], 32
  %32 = sfence
  $region1: #{evoformer_forward.4} parent=0
    #allocation5 [shape = 'u8[16384]{0}', space=vmem, size = 0x4000, scoped, tag = 'input window, operand 3, single buffered']
    #allocation6 [shape = 'u8[131072]{0}', space=vmem, size = 0x20000, scoped, tag = 'output window, operand 0']
    #allocation7 [shape = 's32[2]{0}', space=sflag, size = 0x8, scoped, tag = 'scoped memory for evoformer_forward.4']
    #allocation8 [shape = 'u8[8192]{0}', space=vmem, size = 0x2000, scoped, tag = 'output window, operand 1']
    #allocation9 [shape = 's32[2]{0}', space=sflag, size = 0x8, scoped, tag = 'scoped memory for evoformer_forward.4']
    %33 = vsyncpa [#allocation7], 0
    %s34 = scalar_lea.sflag [#allocation7], 1
    %35 = vsyncpa %s34, 0
    %36 = vsyncpa [#allocation9], 0
    %s37 = scalar_lea.sflag [#allocation9], 1
    %38 = vsyncpa %s37, 0
    loop: start=0, step=1, limit=6
    $region2: #{evoformer_forward.4} parent=1 // loop_pre_header
      _
    $region3: #{evoformer_forward.4} parent=1 // loop_header
      %s40 = sphi 0, %s44
      %p41 = scmp.ge.s32.totalorder %s40, 6
      %s47 = sphi 0, %s59
      %s48 = sphi 0, %s55
      %s49 = sphi 0, %s47
      %s50 = sphi 0, %s48
      %s51 = sphi 0, %s49
      %s52 = sphi 0, %s50
      %s62 = sphi 0, %s64
      %s65 = sphi 0, %s62
      %s66 = sphi 0, %s65
      %s82 = sphi 0, %s66
      %s88 = sphi 0, %s90
      %s91 = sphi 0, %s88
      %s92 = sphi 0, %s91
      %s108 = sphi 0, %s92
      %s116 = sphi 0, %s118
      %s119 = sphi 0, %s116
      %s120 = sphi 0, %s119
      %s136 = sphi 0, %s120
      %s140 = sphi 0, %s140
      %s142 = sphi 0, %s140
      %s143 = sphi 0, %s142
      %s157 = sphi 0, %s143
      %s161 = sphi 0, %s161
      %s163 = sphi 0, %s161
      %s164 = sphi 0, %s163
      %s178 = sphi 0, %s164
      %s182 = sphi 0, %s182
      %s184 = sphi 0, %s182
      %s185 = sphi 0, %s184
      %s199 = sphi 0, %s185
      %s207 = sphi 0, %s209
      %s210 = sphi 0, %s207
      %s211 = sphi 0, %s210
      %s227 = sphi 0, %s211
      %s231 = sphi 0, %s231
      %s233 = sphi 0, %s231
      %s234 = sphi 0, %s233
      %s248 = sphi 0, %s234
      %s252 = sphi 0, %s252
      %s254 = sphi 0, %s252
      %s255 = sphi 0, %s254
      %s269 = sphi 0, %s255
      %s275 = sphi 0, %s277
      %s278 = sphi 0, %s275
      %s279 = sphi 0, %s278
      %s295 = sphi 0, %s279
      %s301 = sphi 0, %s303
      %s304 = sphi 0, %s301
      %s305 = sphi 0, %s304
      %s321 = sphi 0, %s305
      %s329 = sphi 0, %s331
      %s332 = sphi 0, %s329
      %s333 = sphi 0, %s332
      %s349 = sphi 0, %s333
      %s357 = sphi 0, %s359
      %s360 = sphi 0, %s357
      %s361 = sphi 0, %s360
      %s377 = sphi 0, %s361
    $region4: #{evoformer_forward.4} parent=1 // loop_header_branch
      %43 = sbr.rel (%p41) target = $region8
    $region5: #{evoformer_forward.4} parent=1 // loop_body
      %s45 = ssub.s32 %s40, 1
      %s46 = ssub.s32 %s40, 2
      %s53 = sadd.s32 1, %s48
      %p54 = scmp.ge.s32.totalorder %s53, 1
      %s55 = scalar_select %p54, 0, %s53
      %s56 = sadd.s32 1, %s47
      %s57 = scalar_select %p54, %s56, %s47
      %p58 = scmp.ge.s32.totalorder %s57, 4
      %s59 = scalar_select %p58, 0, %s57
      %s60 = ssub.s32 %s47, %s59
      %p61 = scmp.eq.s32.totalorder %s60, 0
      %s63 = sadd.s32 %s62, 1
      %s64 = scalar_select %p61, %s62, %s63
      %p67 = pneg %p61
      %p68 = scmp.eq.s32.totalorder %s40, 3
      %p69 = por %p67, %p68
      %p70 = scmp.ne.s32.totalorder %s62, %s65
      %p71 = scmp.eq.s32.totalorder %s40, 0
      %p72 = por %p70, %p71
      %p73 = scmp.ne.s32.totalorder %s62, %s65
      %p74 = scmp.eq.s32.totalorder %s45, 3
      %p75 = por %p73, %p74
      %p76 = scmp.ne.s32.totalorder %s65, %s66
      %p77 = scmp.eq.s32.totalorder %s45, 0
      %p78 = por %p76, %p77
      %p79 = scmp.ne.s32.totalorder %s65, %s66
      %p80 = scmp.eq.s32.totalorder %s46, 3
      %p81 = por %p79, %p80
      %p83 = scmp.ne.s32.totalorder %s66, %s82
      %p84 = scmp.eq.s32.totalorder %s46, 0
      %p85 = por %p83, %p84
      %s86 = ssub.s32 %s48, %s55
      %p87 = scmp.eq.s32.totalorder %s86, 0
      %s89 = sadd.s32 %s88, 1
      %s90 = scalar_select %p87, %s88, %s89
      %p93 = pneg %p87
      %p94 = scmp.eq.s32.totalorder %s40, 3
      %p95 = por %p93, %p94
      %p96 = scmp.ne.s32.totalorder %s88, %s91
      %p97 = scmp.eq.s32.totalorder %s40, 0
      %p98 = por %p96, %p97
      %p99 = scmp.ne.s32.totalorder %s88, %s91
      %p100 = scmp.eq.s32.totalorder %s45, 3
      %p101 = por %p99, %p100
      %p102 = scmp.ne.s32.totalorder %s91, %s92
      %p103 = scmp.eq.s32.totalorder %s45, 0
      %p104 = por %p102, %p103
      %p105 = scmp.ne.s32.totalorder %s91, %s92
      %p106 = scmp.eq.s32.totalorder %s46, 3
      %p107 = por %p105, %p106
      %p109 = scmp.ne.s32.totalorder %s92, %s108
      %p110 = scmp.eq.s32.totalorder %s46, 0
      %p111 = por %p109, %p110
      %s112 = ssub.s32 %s47, %s59
      %s113 = ssub.s32 %s48, %s55
      %s114 = sor.u32 %s112, %s113
      %p115 = scmp.eq.s32.totalorder %s114, 0
      %s117 = sadd.s32 %s116, 1
      %s118 = scalar_select %p115, %s116, %s117
      %p121 = pneg %p115
      %p122 = scmp.eq.s32.totalorder %s40, 3
      %p123 = por %p121, %p122
      %p124 = scmp.ne.s32.totalorder %s116, %s119
      %p125 = scmp.eq.s32.totalorder %s40, 0
      %p126 = por %p124, %p125
      %p127 = scmp.ne.s32.totalorder %s116, %s119
      %p128 = scmp.eq.s32.totalorder %s45, 3
      %p129 = por %p127, %p128
      %p130 = scmp.ne.s32.totalorder %s119, %s120
      %p131 = scmp.eq.s32.totalorder %s45, 0
      %p132 = por %p130, %p131
      %p133 = scmp.ne.s32.totalorder %s119, %s120
      %p134 = scmp.eq.s32.totalorder %s46, 3
      %p135 = por %p133, %p134
      %p137 = scmp.ne.s32.totalorder %s120, %s136
      %p138 = scmp.eq.s32.totalorder %s46, 0
      %p139 = por %p137, %p138
      %s141 = sadd.s32 %s140, 1
      %p144 = scmp.eq.s32.totalorder %s40, 3
      %p145 = scmp.ne.s32.totalorder %s140, %s142
      %p146 = scmp.eq.s32.totalorder %s40, 0
      %p147 = por %p145, %p146
      %p148 = scmp.ne.s32.totalorder %s140, %s142
      %p149 = scmp.eq.s32.totalorder %s45, 3
      %p150 = por %p148, %p149
      %p151 = scmp.ne.s32.totalorder %s142, %s143
      %p152 = scmp.eq.s32.totalorder %s45, 0
      %p153 = por %p151, %p152
      %p154 = scmp.ne.s32.totalorder %s142, %s143
      %p155 = scmp.eq.s32.totalorder %s46, 3
      %p156 = por %p154, %p155
      %p158 = scmp.ne.s32.totalorder %s143, %s157
      %p159 = scmp.eq.s32.totalorder %s46, 0
      %p160 = por %p158, %p159
      %s162 = sadd.s32 %s161, 1
      %p165 = scmp.eq.s32.totalorder %s40, 3
      %p166 = scmp.ne.s32.totalorder %s161, %s163
      %p167 = scmp.eq.s32.totalorder %s40, 0
      %p168 = por %p166, %p167
      %p169 = scmp.ne.s32.totalorder %s161, %s163
      %p170 = scmp.eq.s32.totalorder %s45, 3
      %p171 = por %p169, %p170
      %p172 = scmp.ne.s32.totalorder %s163, %s164
      %p173 = scmp.eq.s32.totalorder %s45, 0
      %p174 = por %p172, %p173
      %p175 = scmp.ne.s32.totalorder %s163, %s164
      %p176 = scmp.eq.s32.totalorder %s46, 3
      %p177 = por %p175, %p176
      %p179 = scmp.ne.s32.totalorder %s164, %s178
      %p180 = scmp.eq.s32.totalorder %s46, 0
      %p181 = por %p179, %p180
      %s183 = sadd.s32 %s182, 1
      %p186 = scmp.eq.s32.totalorder %s40, 3
      %p187 = scmp.ne.s32.totalorder %s182, %s184
      %p188 = scmp.eq.s32.totalorder %s40, 0
      %p189 = por %p187, %p188
      %p190 = scmp.ne.s32.totalorder %s182, %s184
      %p191 = scmp.eq.s32.totalorder %s45, 3
      %p192 = por %p190, %p191
      %p193 = scmp.ne.s32.totalorder %s184, %s185
      %p194 = scmp.eq.s32.totalorder %s45, 0
      %p195 = por %p193, %p194
      %p196 = scmp.ne.s32.totalorder %s184, %s185
      %p197 = scmp.eq.s32.totalorder %s46, 3
      %p198 = por %p196, %p197
      %p200 = scmp.ne.s32.totalorder %s185, %s199
      %p201 = scmp.eq.s32.totalorder %s46, 0
      %p202 = por %p200, %p201
      %s203 = ssub.s32 %s47, %s59
      %s204 = ssub.s32 %s48, %s55
      %s205 = sor.u32 %s203, %s204
      %p206 = scmp.eq.s32.totalorder %s205, 0
      %s208 = sadd.s32 %s207, 1
      %s209 = scalar_select %p206, %s207, %s208
      %p212 = pneg %p206
      %p213 = scmp.eq.s32.totalorder %s40, 3
      %p214 = por %p212, %p213
      %p215 = scmp.ne.s32.totalorder %s207, %s210
      %p216 = scmp.eq.s32.totalorder %s40, 0
      %p217 = por %p215, %p216
      %p218 = scmp.ne.s32.totalorder %s207, %s210
      %p219 = scmp.eq.s32.totalorder %s45, 3
      %p220 = por %p218, %p219
      %p221 = scmp.ne.s32.totalorder %s210, %s211
      %p222 = scmp.eq.s32.totalorder %s45, 0
      %p223 = por %p221, %p222
      %p224 = scmp.ne.s32.totalorder %s210, %s211
      %p225 = scmp.eq.s32.totalorder %s46, 3
      %p226 = por %p224, %p225
      %p228 = scmp.ne.s32.totalorder %s211, %s227
      %p229 = scmp.eq.s32.totalorder %s46, 0
      %p230 = por %p228, %p229
      %s232 = sadd.s32 %s231, 1
      %p235 = scmp.eq.s32.totalorder %s40, 3
      %p236 = scmp.ne.s32.totalorder %s231, %s233
      %p237 = scmp.eq.s32.totalorder %s40, 0
      %p238 = por %p236, %p237
      %p239 = scmp.ne.s32.totalorder %s231, %s233
      %p240 = scmp.eq.s32.totalorder %s45, 3
      %p241 = por %p239, %p240
      %p242 = scmp.ne.s32.totalorder %s233, %s234
      %p243 = scmp.eq.s32.totalorder %s45, 0
      %p244 = por %p242, %p243
      %p245 = scmp.ne.s32.totalorder %s233, %s234
      %p246 = scmp.eq.s32.totalorder %s46, 3
      %p247 = por %p245, %p246
      %p249 = scmp.ne.s32.totalorder %s234, %s248
      %p250 = scmp.eq.s32.totalorder %s46, 0
      %p251 = por %p249, %p250
      %s253 = sadd.s32 %s252, 1
      %p256 = scmp.eq.s32.totalorder %s40, 3
      %p257 = scmp.ne.s32.totalorder %s252, %s254
      %p258 = scmp.eq.s32.totalorder %s40, 0
      %p259 = por %p257, %p258
      %p260 = scmp.ne.s32.totalorder %s252, %s254
      %p261 = scmp.eq.s32.totalorder %s45, 3
      %p262 = por %p260, %p261
      %p263 = scmp.ne.s32.totalorder %s254, %s255
      %p264 = scmp.eq.s32.totalorder %s45, 0
      %p265 = por %p263, %p264
      %p266 = scmp.ne.s32.totalorder %s254, %s255
      %p267 = scmp.eq.s32.totalorder %s46, 3
      %p268 = por %p266, %p267
      %p270 = scmp.ne.s32.totalorder %s255, %s269
      %p271 = scmp.eq.s32.totalorder %s46, 0
      %p272 = por %p270, %p271
      %s273 = ssub.s32 %s47, %s59
      %p274 = scmp.eq.s32.totalorder %s273, 0
      %s276 = sadd.s32 %s275, 1
      %s277 = scalar_select %p274, %s275, %s276
      %p280 = pneg %p274
      %p281 = scmp.eq.s32.totalorder %s40, 3
      %p282 = por %p280, %p281
      %p283 = scmp.ne.s32.totalorder %s275, %s278
      %p284 = scmp.eq.s32.totalorder %s40, 0
      %p285 = por %p283, %p284
      %p286 = scmp.ne.s32.totalorder %s275, %s278
      %p287 = scmp.eq.s32.totalorder %s45, 3
      %p288 = por %p286, %p287
      %p289 = scmp.ne.s32.totalorder %s278, %s279
      %p290 = scmp.eq.s32.totalorder %s45, 0
      %p291 = por %p289, %p290
      %p292 = scmp.ne.s32.totalorder %s278, %s279
      %p293 = scmp.eq.s32.totalorder %s46, 3
      %p294 = por %p292, %p293
      %p296 = scmp.ne.s32.totalorder %s279, %s295
      %p297 = scmp.eq.s32.totalorder %s46, 0
      %p298 = por %p296, %p297
      %s299 = ssub.s32 %s48, %s55
      %p300 = scmp.eq.s32.totalorder %s299, 0
      %s302 = sadd.s32 %s301, 1
      %s303 = scalar_select %p300, %s301, %s302
      %p306 = pneg %p300
      %p307 = scmp.eq.s32.totalorder %s40, 3
      %p308 = por %p306, %p307
      %p309 = scmp.ne.s32.totalorder %s301, %s304
      %p310 = scmp.eq.s32.totalorder %s40, 0
      %p311 = por %p309, %p310
      %p312 = scmp.ne.s32.totalorder %s301, %s304
      %p313 = scmp.eq.s32.totalorder %s45, 3
      %p314 = por %p312, %p313
      %p315 = scmp.ne.s32.totalorder %s304, %s305
      %p316 = scmp.eq.s32.totalorder %s45, 0
      %p317 = por %p315, %p316
      %p318 = scmp.ne.s32.totalorder %s304, %s305
      %p319 = scmp.eq.s32.totalorder %s46, 3
      %p320 = por %p318, %p319
      %p322 = scmp.ne.s32.totalorder %s305, %s321
      %p323 = scmp.eq.s32.totalorder %s46, 0
      %p324 = por %p322, %p323
      %s325 = ssub.s32 %s47, %s59
      %s326 = ssub.s32 %s48, %s55
      %s327 = sor.u32 %s325, %s326
      %p328 = scmp.eq.s32.totalorder %s327, 0
      %s330 = sadd.s32 %s329, 1
      %s331 = scalar_select %p328, %s329, %s330
      %p334 = pneg %p328
      %p335 = scmp.eq.s32.totalorder %s40, 3
      %p336 = por %p334, %p335
      %p337 = scmp.ne.s32.totalorder %s329, %s332
      %p338 = scmp.eq.s32.totalorder %s40, 0
      %p339 = por %p337, %p338
      %p340 = scmp.ne.s32.totalorder %s329, %s332
      %p341 = scmp.eq.s32.totalorder %s45, 3
      %p342 = por %p340, %p341
      %p343 = scmp.ne.s32.totalorder %s332, %s333
      %p344 = scmp.eq.s32.totalorder %s45, 0
      %p345 = por %p343, %p344
      %p346 = scmp.ne.s32.totalorder %s332, %s333
      %p347 = scmp.eq.s32.totalorder %s46, 3
      %p348 = por %p346, %p347
      %p350 = scmp.ne.s32.totalorder %s333, %s349
      %p351 = scmp.eq.s32.totalorder %s46, 0
      %p352 = por %p350, %p351
      %s353 = ssub.s32 %s47, %s59
      %s354 = ssub.s32 %s48, %s55
      %s355 = sor.u32 %s353, %s354
      %p356 = scmp.eq.s32.totalorder %s355, 0
      %s358 = sadd.s32 %s357, 1
      %s359 = scalar_select %p356, %s357, %s358
      %p362 = pneg %p356
      %p363 = scmp.eq.s32.totalorder %s40, 3
      %p364 = por %p362, %p363
      %p365 = scmp.ne.s32.totalorder %s357, %s360
      %p366 = scmp.eq.s32.totalorder %s40, 0
      %p367 = por %p365, %p366
      %p368 = scmp.ne.s32.totalorder %s357, %s360
      %p369 = scmp.eq.s32.totalorder %s45, 3
      %p370 = por %p368, %p369
      %p371 = scmp.ne.s32.totalorder %s360, %s361
      %p372 = scmp.eq.s32.totalorder %s45, 0
      %p373 = por %p371, %p372
      %p374 = scmp.ne.s32.totalorder %s360, %s361
      %p375 = scmp.eq.s32.totalorder %s46, 3
      %p376 = por %p374, %p375
      %p378 = scmp.ne.s32.totalorder %s361, %s377
      %p379 = scmp.eq.s32.totalorder %s46, 0
      %p380 = por %p378, %p379
      %p381 = scmp.le.s32.totalorder 1, %s40
      %p382 = scmp.lt.s32.totalorder %s40, 5
      %p383 = pnand %p381, %p382
      %p384 = pneg %p383
      // Predicated region
      $region9: #{evoformer_forward.4} parent=5 // pred_check
        _
      $region10: #{evoformer_forward.4} parent=5 // pred_check_branch
        %386 = sbr.rel (%p383) target = $region12
      $region11: #{evoformer_forward.4} parent=5 // pred_region
        %s387 = ssub.s32 %s40, 1
        // Predicated region
        $region13: #{evoformer_forward.4} parent=11 // pred_check
          %p388 = pneg %p104
        $region14: #{evoformer_forward.4} parent=11 // pred_check_branch
          %390 = sbr.rel (%p388) target = $region16
        $region15: #{evoformer_forward.4} parent=11 // pred_region
          %s391 = smul.u32 4, %s50
          %s392 = smul.addr %s391, 6
          %s393 = sadd.s32 1, %s392
          %s394 = smul.addr %s393, 8
          %s395 = scalar_lea.vmem %s3, %s394
          // Predicated region
          $region17: #{evoformer_forward.4} parent=15 // pred_check
            _
          $region18: #{evoformer_forward.4} parent=15 // pred_check_branch
            %397 = sbr.rel (0) target = $region20
          $region19: #{evoformer_forward.4} parent=15 // pred_region
            // Predicated region
            $region21: #{evoformer_forward.4} parent=19 // pred_check
              _
            $region22: #{evoformer_forward.4} parent=19 // pred_check_branch
              %399 = sbr.rel (0) target = $region24
            $region23: #{evoformer_forward.4} parent=19 // pred_region
              // Predicated region
              $region36: #{evoformer_forward.4} parent=23 // pred_check
                _
              $region37: #{evoformer_forward.4} parent=23 // pred_check_branch
                %421 = sbr.rel (0) target = $region39
              $region38: #{evoformer_forward.4} parent=23 // pred_region
                loop: start=0, step=1, limit=1
                $region40: #{evoformer_forward.4} parent=38 // loop_pre_header
                  _
                $region41: #{evoformer_forward.4} parent=38 // loop_header
                  %s423 = sphi 0, %s427
                  %p424 = scmp.ge.s32.totalorder %s423, 1
                  %s428 = sphi %s395, %s395
                  %s429 = sphi [#allocation5], [#allocation5]
                $region42: #{evoformer_forward.4} parent=38 // loop_header_branch
                  %426 = sbr.rel (%p424) target = $region46
                $region43: #{evoformer_forward.4} parent=38 // loop_body
                  %v430 = vld [vmem:[%s428] sm:$0xff]
                  %431 = vst [vmem:[%s429] sm:$0xff] %v430
                  %v432 = vld [vmem:[%s428 + $0x30] sm:$0xff]
                  %433 = vst [vmem:[%s429 + $0x8] sm:$0xff] %v432
                  %v434 = vld [vmem:[%s428 + $0x60] sm:$0xff]
                  %435 = vst [vmem:[%s429 + $0x10] sm:$0xff] %v434
                  %v436 = vld [vmem:[%s428 + $0x90] sm:$0xff]
                  %437 = vst [vmem:[%s429 + $0x18] sm:$0xff] %v436
                $region44: #{evoformer_forward.4} parent=38 // loop_footer
                  %s427 = sadd.s32 1, %s423
                $region45: #{evoformer_forward.4} parent=38 // loop_footer_branch
                  %422 = sbr.rel target = $region41
                $region46: #{evoformer_forward.4} parent=38 // loop_exit
                  _
              $region39: #{evoformer_forward.4} parent=23 // pred_fallthru
                _
              // Predicated region
              $region47: #{evoformer_forward.4} parent=23 // pred_check
                _
              $region48: #{evoformer_forward.4} parent=23 // pred_check_branch
                %439 = sbr.rel target = $region50
              $region49: #{evoformer_forward.4} parent=23 // pred_region
                _
              $region50: #{evoformer_forward.4} parent=23 // pred_fallthru
                _
            $region24: #{evoformer_forward.4} parent=19 // pred_fallthru
              _
            // Predicated region
            $region25: #{evoformer_forward.4} parent=19 // pred_check
              _
            $region26: #{evoformer_forward.4} parent=19 // pred_check_branch
              %401 = sbr.rel target = $region28
            $region27: #{evoformer_forward.4} parent=19 // pred_region
              %s403 = ssub.s32 256, 1
              loop: start=0, step=1, limit=1
              $region29: #{evoformer_forward.4} parent=27 // loop_pre_header
                _
              $region30: #{evoformer_forward.4} parent=27 // loop_header
                %s405 = sphi 0, %s409
                %p406 = scmp.ge.s32.totalorder %s405, 1
                %s410 = sphi %s395, %s395
                %s411 = sphi [#allocation5], [#allocation5]
              $region31: #{evoformer_forward.4} parent=27 // loop_header_branch
                %408 = sbr.rel (%p406) target = $region35
              $region32: #{evoformer_forward.4} parent=27 // loop_body
                %v412 = vld [vmem:[%s410] sm:%s403]
                %413 = vst [vmem:[%s411] sm:%s403] %v412
                %v414 = vld [vmem:[%s410 + $0x30] sm:%s403]
                %415 = vst [vmem:[%s411 + $0x8] sm:%s403] %v414
                %v416 = vld [vmem:[%s410 + $0x60] sm:%s403]
                %417 = vst [vmem:[%s411 + $0x10] sm:%s403] %v416
                %v418 = vld [vmem:[%s410 + $0x90] sm:%s403]
                %419 = vst [vmem:[%s411 + $0x18] sm:%s403] %v418
              $region33: #{evoformer_forward.4} parent=27 // loop_footer
                %s409 = sadd.s32 1, %s405
              $region34: #{evoformer_forward.4} parent=27 // loop_footer_branch
                %404 = sbr.rel target = $region30
              $region35: #{evoformer_forward.4} parent=27 // loop_exit
                _
            $region28: #{evoformer_forward.4} parent=19 // pred_fallthru
              _
          $region20: #{evoformer_forward.4} parent=15 // pred_fallthru
            _
          %440 = vnop
        $region16: #{evoformer_forward.4} parent=11 // pred_fallthru
          _
        // Predicated region
        $region51: #{evoformer_forward.4} parent=11 // pred_check
          %p441 = pneg %p153
        $region52: #{evoformer_forward.4} parent=11 // pred_check_branch
          %443 = sbr.rel (%p441) target = $region54
        $region53: #{evoformer_forward.4} parent=11 // pred_region
          _
        $region54: #{evoformer_forward.4} parent=11 // pred_fallthru
          _
        // Predicated region
        $region55: #{evoformer_forward.4} parent=11 // pred_check
          %p444 = pneg %p174
        $region56: #{evoformer_forward.4} parent=11 // pred_check_branch
          %446 = sbr.rel (%p444) target = $region58
        $region57: #{evoformer_forward.4} parent=11 // pred_region
          _
        $region58: #{evoformer_forward.4} parent=11 // pred_fallthru
          _
        // Predicated region
        $region59: #{evoformer_forward.4} parent=11 // pred_check
          %p447 = pneg %p195
        $region60: #{evoformer_forward.4} parent=11 // pred_check_branch
          %449 = sbr.rel (%p447) target = $region62
        $region61: #{evoformer_forward.4} parent=11 // pred_region
          _
        $region62: #{evoformer_forward.4} parent=11 // pred_fallthru
          _
        // Predicated region
        $region63: #{evoformer_forward.4} parent=11 // pred_check
          %p450 = pneg %p244
        $region64: #{evoformer_forward.4} parent=11 // pred_check_branch
          %452 = sbr.rel (%p450) target = $region66
        $region65: #{evoformer_forward.4} parent=11 // pred_region
          _
        $region66: #{evoformer_forward.4} parent=11 // pred_fallthru
          _
        // Predicated region
        $region67: #{evoformer_forward.4} parent=11 // pred_check
          %p453 = pneg %p265
        $region68: #{evoformer_forward.4} parent=11 // pred_check_branch
          %455 = sbr.rel (%p453) target = $region70
        $region69: #{evoformer_forward.4} parent=11 // pred_region
          _
        $region70: #{evoformer_forward.4} parent=11 // pred_fallthru
          _
        // Predicated region
        $region71: #{evoformer_forward.4} parent=11 // pred_check
          %p456 = pneg %p317
        $region72: #{evoformer_forward.4} parent=11 // pred_check_branch
          %458 = sbr.rel (%p456) target = $region74
        $region73: #{evoformer_forward.4} parent=11 // pred_region
          %p459 = scmp.lt.s32.totalorder %s50, 0
          %s460 = scalar_select %p459, %s50, 0
          %s461 = scalar_lea.vmem %s12, %s460
        $region74: #{evoformer_forward.4} parent=11 // pred_fallthru
          _
      $region12: #{evoformer_forward.4} parent=5 // pred_fallthru
        _
      %p462 = scmp.lt.s32.totalorder %s40, 4
      // Predicated region
      $region75: #{evoformer_forward.4} parent=5 // pred_check
        %p463 = pneg %p462
      $region76: #{evoformer_forward.4} parent=5 // pred_check_branch
        %465 = sbr.rel (%p463) target = $region78
      $region77: #{evoformer_forward.4} parent=5 // pred_region
        // Predicated region
        $region79: #{evoformer_forward.4} parent=77 // pred_check
          %p466 = pneg %p72
        $region80: #{evoformer_forward.4} parent=77 // pred_check_branch
          %468 = sbr.rel (%p466) target = $region82
        $region81: #{evoformer_forward.4} parent=77 // pred_region
          %p469 = scmp.lt.s32.totalorder %s47, 3
          %s470 = scalar_select %p469, %s47, 3
          %s471 = smul.addr %s470, 6
          %s472 = smul.addr %s471, 8
          %s473 = scalar_lea.vmem %s2, %s472
        $region82: #{evoformer_forward.4} parent=77 // pred_fallthru
          _
        // Predicated region
        $region83: #{evoformer_forward.4} parent=77 // pred_check
          %p474 = pneg %p126
        $region84: #{evoformer_forward.4} parent=77 // pred_check_branch
          %476 = sbr.rel (%p474) target = $region86
        $region85: #{evoformer_forward.4} parent=77 // pred_region
          %s477 = smul.u32 8, %s47
          %s478 = smul.u32 4, %s48
          %p479 = scmp.lt.s32.totalorder %s477, 31
          %s480 = scalar_select %p479, %s477, 31
          %p481 = scmp.lt.s32.totalorder %s478, 3
          %s482 = scalar_select %p481, %s478, 3
          %s483 = smul.addr %s480, 4
          %s484 = sadd.s32 %s482, %s483
          %s485 = smul.addr %s484, 4
          %s486 = scalar_lea.vmem %s4, %s485
          %s487 = smul.u32 8, %s47
          %s488 = smul.u32 4, %s48
        $region86: #{evoformer_forward.4} parent=77 // pred_fallthru
          _
        // Predicated region
        $region87: #{evoformer_forward.4} parent=77 // pred_check
          %p489 = pneg %p217
        $region88: #{evoformer_forward.4} parent=77 // pred_check_branch
          %491 = sbr.rel (%p489) target = $region90
        $region89: #{evoformer_forward.4} parent=77 // pred_region
          %s492 = smul.u32 8, %s47
          %s493 = smul.u32 4, %s48
          %p494 = scmp.lt.s32.totalorder %s492, 31
          %s495 = scalar_select %p494, %s492, 31
          %p496 = scmp.lt.s32.totalorder %s493, 3
          %s497 = scalar_select %p496, %s493, 3
          %s498 = smul.addr %s497, 2
          %s499 = smul.addr %s495, 8
          %s500 = sadd.s32 %s498, %s499
          %s501 = smul.addr %s500, 4
          %s502 = scalar_lea.vmem %s8, %s501
          %s503 = smul.u32 8, %s47
          %s504 = smul.u32 4, %s48
        $region90: #{evoformer_forward.4} parent=77 // pred_fallthru
          _
        // Predicated region
        $region91: #{evoformer_forward.4} parent=77 // pred_check
          %p505 = pneg %p285
        $region92: #{evoformer_forward.4} parent=77 // pred_check_branch
          %507 = sbr.rel (%p505) target = $region94
        $region93: #{evoformer_forward.4} parent=77 // pred_region
          %p508 = scmp.lt.s32.totalorder %s47, 3
          %s509 = scalar_select %p508, %s47, 3
          %s510 = smul.addr %s509, 8
          %s511 = scalar_lea.vmem %s11, %s510
        $region94: #{evoformer_forward.4} parent=77 // pred_fallthru
          _
      $region78: #{evoformer_forward.4} parent=5 // pred_fallthru
        _
      %p512 = scmp.le.s32.totalorder 1, %s40
      %p513 = scmp.lt.s32.totalorder %s40, 5
      %p514 = pnand %p512, %p513
      %p515 = pneg %p514
      // Predicated region
      $region95: #{evoformer_forward.4} parent=5 // pred_check
        _
      $region96: #{evoformer_forward.4} parent=5 // pred_check_branch
        %517 = sbr.rel (%p514) target = $region98
      $region97: #{evoformer_forward.4} parent=5 // pred_region
        %s518 = ssub.s32 %s40, 1
        // Predicated region
        $region99: #{evoformer_forward.4} parent=97 // pred_check
          %p519 = pneg %p104
        $region100: #{evoformer_forward.4} parent=97 // pred_check_branch
          %521 = sbr.rel (%p519) target = $region102
        $region101: #{evoformer_forward.4} parent=97 // pred_region
          _
        $region102: #{evoformer_forward.4} parent=97 // pred_fallthru
          _
        %p522 = scmp.lt.s32.totalorder %s49, 3
        %s523 = scalar_select %p522, %s49, 3
        %s524 = smul.addr %s523, 6
        %s525 = smul.addr %s524, 8
        %s526 = scalar_lea.vmem %s2, %s525
        %p527 = pneg %p78
        %p528 = pneg %p75
        %p529 = pneg %p104
        %p530 = pneg %p101
        %s531 = smul.u32 8, %s49
        %s532 = smul.u32 4, %s50
        %p533 = scmp.lt.s32.totalorder %s531, 31
        %s534 = scalar_select %p533, %s531, 31
        %p535 = scmp.lt.s32.totalorder %s532, 3
        %s536 = scalar_select %p535, %s532, 3
        %s537 = smul.addr %s534, 4
        %s538 = sadd.s32 %s536, %s537
        %s539 = smul.addr %s538, 4
        %s540 = scalar_lea.vmem %s4, %s539
        %p541 = pneg %p132
        %p542 = pneg %p129
        %p543 = pneg %p153
        %p544 = pneg %p150
        %p545 = pneg %p174
        %p546 = pneg %p171
        %p547 = pneg %p195
        %p548 = pneg %p192
        %s549 = smul.u32 8, %s49
        %s550 = smul.u32 4, %s50
        %p551 = scmp.lt.s32.totalorder %s549, 31
        %s552 = scalar_select %p551, %s549, 31
        %p553 = scmp.lt.s32.totalorder %s550, 3
        %s554 = scalar_select %p553, %s550, 3
        %s555 = smul.addr %s554, 2
        %s556 = smul.addr %s552, 8
        %s557 = sadd.s32 %s555, %s556
        %s558 = smul.addr %s557, 4
        %s559 = scalar_lea.vmem %s8, %s558
        %p560 = pneg %p223
        %p561 = pneg %p220
        %p562 = pneg %p244
        %p563 = pneg %p241
        %p564 = pneg %p265
        %p565 = pneg %p262
        %p566 = scmp.lt.s32.totalorder %s49, 3
        %s567 = scalar_select %p566, %s49, 3
        %s568 = smul.addr %s567, 8
        %s569 = scalar_lea.vmem %s11, %s568
        %p570 = pneg %p291
        %p571 = pneg %p288
        %p572 = scmp.lt.s32.totalorder %s50, 0
        %s573 = scalar_select %p572, %s50, 0
        %s574 = scalar_lea.vmem %s12, %s573
        %p575 = pneg %p317
        %p576 = pneg %p314
        %p577 = pneg %p345
        %p578 = pneg %p342
        %s579 = sand.u32 %s332, 1
        %s580 = scalar_lea.sflag [#allocation7], %s579
        %s581 = sand.u32 %s332, 1
        %s582 = smul.addr %s581, 128
        %s583 = scalar_lea.vmem [#allocation6], %s582
        %p584 = pneg %p373
        %p585 = pneg %p370
        %s586 = sand.u32 %s360, 1
        %s587 = scalar_lea.sflag [#allocation9], %s586
        %s588 = sand.u32 %s360, 1
        %s589 = smul.addr %s588, 8
        %s590 = scalar_lea.vmem [#allocation8], %s589
        %p591 = scmp.lt.s32.totalorder %s49, 3
        %s592 = scalar_select %p591, %s49, 3
        %s593 = smul.addr %s592, 6
        %s594 = smul.addr %s593, 8
        %s595 = scalar_lea.vmem %s2, %s594
        %s596 = smul.u32 4, %s50
        %s597 = smul.u32 8, %s49
        %s598 = smul.u32 4, %s50
        %p599 = scmp.lt.s32.totalorder %s597, 31
        %s600 = scalar_select %p599, %s597, 31
        %p601 = scmp.lt.s32.totalorder %s598, 3
        %s602 = scalar_select %p601, %s598, 3
        %s603 = smul.addr %s600, 4
        %s604 = sadd.s32 %s602, %s603
        %s605 = smul.addr %s604, 4
        %s606 = scalar_lea.vmem %s4, %s605
        %s607 = smul.u32 8, %s49
        %s608 = smul.u32 4, %s50
        %s609 = smul.u32 8, %s49
        %s610 = smul.u32 4, %s50
        %p611 = scmp.lt.s32.totalorder %s609, 31
        %s612 = scalar_select %p611, %s609, 31
        %p613 = scmp.lt.s32.totalorder %s610, 3
        %s614 = scalar_select %p613, %s610, 3
        %s615 = smul.addr %s614, 2
        %s616 = smul.addr %s612, 8
        %s617 = sadd.s32 %s615, %s616
        %s618 = smul.addr %s617, 4
        %s619 = scalar_lea.vmem %s8, %s618
        %s620 = smul.u32 8, %s49
        %s621 = smul.u32 4, %s50
        %p622 = scmp.lt.s32.totalorder %s49, 3
        %s623 = scalar_select %p622, %s49, 3
        %s624 = smul.addr %s623, 8
        %s625 = scalar_lea.vmem %s11, %s624
        %p626 = scmp.lt.s32.totalorder %s50, 0
        %s627 = scalar_select %p626, %s50, 0
        %s628 = scalar_lea.vmem %s12, %s627
        %s629 = smul.u32 8, %s49
        %s630 = smul.u32 4, %s50
        %v632 = vld [vmem:[%s606] sm:$0xf]
        %v633 = vld [vmem:[%s606 + $0x4] sm:$0xf]
        %v634 = vld [vmem:[%s606 + $0x8] sm:$0xf]
        %v635 = vld [vmem:[%s606 + $0xc] sm:$0xf]
        %v636 = vld [vmem:[%s606 + $0x10] sm:$0xf]
        %v637 = vld [vmem:[%s606 + $0x14] sm:$0xf]
        %v638 = vld [vmem:[%s606 + $0x18] sm:$0xf]
        %v639 = vld [vmem:[%s606 + $0x1c] sm:$0xf]
        %v640 = vld [vmem:[%s606 + $0x20] sm:$0xf]
        %v641 = vld [vmem:[%s606 + $0x24] sm:$0xf]
        %v642 = vld [vmem:[%s606 + $0x28] sm:$0xf]
        %v643 = vld [vmem:[%s606 + $0x2c] sm:$0xf]
        %v644 = vld [vmem:[%s606 + $0x30] sm:$0xf]
        %v645 = vld [vmem:[%s606 + $0x34] sm:$0xf]
        %v646 = vld [vmem:[%s606 + $0x38] sm:$0xf]
        %v647 = vld [vmem:[%s606 + $0x3c] sm:$0xf]
        %v648 = vld [vmem:[%s606 + $0x40] sm:$0xf]
        %v649 = vld [vmem:[%s606 + $0x44] sm:$0xf]
        %v650 = vld [vmem:[%s606 + $0x48] sm:$0xf]
        %v651 = vld [vmem:[%s606 + $0x4c] sm:$0xf]
        %v652 = vld [vmem:[%s606 + $0x50] sm:$0xf]
        %v653 = vld [vmem:[%s606 + $0x54] sm:$0xf]
        %v654 = vld [vmem:[%s606 + $0x58] sm:$0xf]
        %v655 = vld [vmem:[%s606 + $0x5c] sm:$0xf]
        %v656 = vld [vmem:[%s606 + $0x60] sm:$0xf]
        %v657 = vld [vmem:[%s606 + $0x64] sm:$0xf]
        %v658 = vld [vmem:[%s606 + $0x68] sm:$0xf]
        %v659 = vld [vmem:[%s606 + $0x6c] sm:$0xf]
        %v660 = vld [vmem:[%s606 + $0x70] sm:$0xf]
        %v661 = vld [vmem:[%s606 + $0x74] sm:$0xf]
        %v662 = vld [vmem:[%s606 + $0x78] sm:$0xf]
        %v663 = vld [vmem:[%s606 + $0x7c] sm:$0xf]
        %v664 = vunpack.c.l.bf16 %v632
        %v665 = vunpack.c.l.bf16 %v633
        %v666 = vunpack.c.l.bf16 %v634
        %v667 = vunpack.c.l.bf16 %v635
        %v668 = vunpack.c.l.bf16 %v636
        %v669 = vunpack.c.l.bf16 %v637
        %v670 = vunpack.c.l.bf16 %v638
        %v671 = vunpack.c.l.bf16 %v639
        %v672 = vunpack.c.l.bf16 %v640
        %v673 = vunpack.c.l.bf16 %v641
        %v674 = vunpack.c.l.bf16 %v642
        %v675 = vunpack.c.l.bf16 %v643
        %v676 = vunpack.c.l.bf16 %v644
        %v677 = vunpack.c.l.bf16 %v645
        %v678 = vunpack.c.l.bf16 %v646
        %v679 = vunpack.c.l.bf16 %v647
        %v680 = vunpack.c.l.bf16 %v648
        %v681 = vunpack.c.l.bf16 %v649
        %v682 = vunpack.c.l.bf16 %v650
        %v683 = vunpack.c.l.bf16 %v651
        %v684 = vunpack.c.l.bf16 %v652
        %v685 = vunpack.c.l.bf16 %v653
        %v686 = vunpack.c.l.bf16 %v654
        %v687 = vunpack.c.l.bf16 %v655
        %v688 = vunpack.c.l.bf16 %v656
        %v689 = vunpack.c.l.bf16 %v657
        %v690 = vunpack.c.l.bf16 %v658
        %v691 = vunpack.c.l.bf16 %v659
        %v692 = vunpack.c.l.bf16 %v660
        %v693 = vunpack.c.l.bf16 %v661
        %v694 = vunpack.c.l.bf16 %v662
        %v695 = vunpack.c.l.bf16 %v663
        %v696 = vld [vmem:[%s5] sm:$0x1]
        %v697 = vld [vmem:[%s6] sm:$0x1]
        %698 = vadd.xlane.f32.xlu0 %v664
        %v699 = vpop.xlane.xlu0 %698
        %700 = vadd.xlane.f32.xlu0 %v665
        %v701 = vpop.xlane.xlu0 %700
        %702 = vadd.xlane.f32.xlu0 %v666
        %v703 = vpop.xlane.xlu0 %702
        %704 = vadd.xlane.f32.xlu0 %v667
        %v705 = vpop.xlane.xlu0 %704
        %706 = vadd.xlane.f32.xlu0 %v668
        %v707 = vpop.xlane.xlu0 %706
        %708 = vadd.xlane.f32.xlu0 %v669
        %v709 = vpop.xlane.xlu0 %708
        %710 = vadd.xlane.f32.xlu0 %v670
        %v711 = vpop.xlane.xlu0 %710
        %712 = vadd.xlane.f32.xlu0 %v671
        %v713 = vpop.xlane.xlu0 %712
        %714 = vadd.xlane.f32.xlu0 %v672
        %v715 = vpop.xlane.xlu0 %714
        %716 = vadd.xlane.f32.xlu0 %v673
        %v717 = vpop.xlane.xlu0 %716
        %718 = vadd.xlane.f32.xlu0 %v674
        %v719 = vpop.xlane.xlu0 %718
        %720 = vadd.xlane.f32.xlu0 %v675
        %v721 = vpop.xlane.xlu0 %720
        %722 = vadd.xlane.f32.xlu0 %v676
        %v723 = vpop.xlane.xlu0 %722
        %724 = vadd.xlane.f32.xlu0 %v677
        %v725 = vpop.xlane.xlu0 %724
        %726 = vadd.xlane.f32.xlu0 %v678
        %v727 = vpop.xlane.xlu0 %726
        %728 = vadd.xlane.f32.xlu0 %v679
        %v729 = vpop.xlane.xlu0 %728
        %730 = vadd.xlane.f32.xlu0 %v680
        %v731 = vpop.xlane.xlu0 %730
        %732 = vadd.xlane.f32.xlu0 %v681
        %v733 = vpop.xlane.xlu0 %732
        %734 = vadd.xlane.f32.xlu0 %v682
        %v735 = vpop.xlane.xlu0 %734
        %736 = vadd.xlane.f32.xlu0 %v683
        %v737 = vpop.xlane.xlu0 %736
        %738 = vadd.xlane.f32.xlu0 %v684
        %v739 = vpop.xlane.xlu0 %738
        %740 = vadd.xlane.f32.xlu0 %v685
        %v741 = vpop.xlane.xlu0 %740
        %742 = vadd.xlane.f32.xlu0 %v686
        %v743 = vpop.xlane.xlu0 %742
        %744 = vadd.xlane.f32.xlu0 %v687
        %v745 = vpop.xlane.xlu0 %744
        %746 = vadd.xlane.f32.xlu0 %v688
        %v747 = vpop.xlane.xlu0 %746
        %748 = vadd.xlane.f32.xlu0 %v689
        %v749 = vpop.xlane.xlu0 %748
        %750 = vadd.xlane.f32.xlu0 %v690
        %v751 = vpop.xlane.xlu0 %750
        %752 = vadd.xlane.f32.xlu0 %v691
        %v753 = vpop.xlane.xlu0 %752
        %754 = vadd.xlane.f32.xlu0 %v692
        %v755 = vpop.xlane.xlu0 %754
        %756 = vadd.xlane.f32.xlu0 %v693
        %v757 = vpop.xlane.xlu0 %756
        %758 = vadd.xlane.f32.xlu0 %v694
        %v759 = vpop.xlane.xlu0 %758
        %760 = vadd.xlane.f32.xlu0 %v695
        %v761 = vpop.xlane.xlu0 %760
        %v762 = vrcp.pop 128.0
        %v763 = vmul.f32 128.0, %v762
        %v764 = vsub.f32 1.0, %v763
        %v765 = vmul.f32 %v762, %v764
        %v766 = vadd.f32 %v762, %v765
        %vm767 = vweird.f32 %v762
        %v768 = vsel %vm767, %v762, %v766
        %v769 = vmul.f32 %v699, %v768
        %v770 = vmul.f32 %v701, %v768
        %v771 = vmul.f32 %v703, %v768
        %v772 = vmul.f32 %v705, %v768
        %v773 = vmul.f32 %v707, %v768
        %v774 = vmul.f32 %v709, %v768
        %v775 = vmul.f32 %v711, %v768
        %v776 = vmul.f32 %v713, %v768
        %v777 = vmul.f32 %v715, %v768
        %v778 = vmul.f32 %v717, %v768
        %v779 = vmul.f32 %v719, %v768
        %v780 = vmul.f32 %v721, %v768
        %v781 = vmul.f32 %v723, %v768
        %v782 = vmul.f32 %v725, %v768
        %v783 = vmul.f32 %v727, %v768
        %v784 = vmul.f32 %v729, %v768
        %v785 = vmul.f32 %v731, %v768
        %v786 = vmul.f32 %v733, %v768
        %v787 = vmul.f32 %v735, %v768
        %v788 = vmul.f32 %v737, %v768
        %v789 = vmul.f32 %v739, %v768
        %v790 = vmul.f32 %v741, %v768
        %v791 = vmul.f32 %v743, %v768
        %v792 = vmul.f32 %v745, %v768
        %v793 = vmul.f32 %v747, %v768
        %v794 = vmul.f32 %v749, %v768
        %v795 = vmul.f32 %v751, %v768
        %v796 = vmul.f32 %v753, %v768
        %v797 = vmul.f32 %v755, %v768
        %v798 = vmul.f32 %v757, %v768
        %v799 = vmul.f32 %v759, %v768
        %v800 = vmul.f32 %v761, %v768
        %v801 = vmul.f32 %v664, %v664
        %v802 = vmul.f32 %v665, %v665
        %v803 = vmul.f32 %v666, %v666
        %v804 = vmul.f32 %v667, %v667
        %v805 = vmul.f32 %v668, %v668
        %v806 = vmul.f32 %v669, %v669
        %v807 = vmul.f32 %v670, %v670
        %v808 = vmul.f32 %v671, %v671
        %v809 = vmul.f32 %v672, %v672
        %v810 = vmul.f32 %v673, %v673
        %v811 = vmul.f32 %v674, %v674
        %v812 = vmul.f32 %v675, %v675
        %v813 = vmul.f32 %v676, %v676
        %v814 = vmul.f32 %v677, %v677
        %v815 = vmul.f32 %v678, %v678
        %v816 = vmul.f32 %v679, %v679
        %v817 = vmul.f32 %v680, %v680
        %v818 = vmul.f32 %v681, %v681
        %v819 = vmul.f32 %v682, %v682
        %v820 = vmul.f32 %v683, %v683
        %v821 = vmul.f32 %v684, %v684
        %v822 = vmul.f32 %v685, %v685
        %v823 = vmul.f32 %v686, %v686
        %v824 = vmul.f32 %v687, %v687
        %v825 = vmul.f32 %v688, %v688
        %v826 = vmul.f32 %v689, %v689
        %v827 = vmul.f32 %v690, %v690
        %v828 = vmul.f32 %v691, %v691
        %v829 = vmul.f32 %v692, %v692
        %v830 = vmul.f32 %v693, %v693
        %v831 = vmul.f32 %v694, %v694
        %v832 = vmul.f32 %v695, %v695
        %833 = vadd.xlane.f32.xlu0 %v801
        %v834 = vpop.xlane.xlu0 %833
        %835 = vadd.xlane.f32.xlu0 %v802
        %v836 = vpop.xlane.xlu0 %835
        %837 = vadd.xlane.f32.xlu0 %v803
        %v838 = vpop.xlane.xlu0 %837
        %839 = vadd.xlane.f32.xlu0 %v804
        %v840 = vpop.xlane.xlu0 %839
        %841 = vadd.xlane.f32.xlu0 %v805
        %v842 = vpop.xlane.xlu0 %841
        %843 = vadd.xlane.f32.xlu0 %v806
        %v844 = vpop.xlane.xlu0 %843
        %845 = vadd.xlane.f32.xlu0 %v807
        %v846 = vpop.xlane.xlu0 %845
        %847 = vadd.xlane.f32.xlu0 %v808
        %v848 = vpop.xlane.xlu0 %847
        %849 = vadd.xlane.f32.xlu0 %v809
        %v850 = vpop.xlane.xlu0 %849
        %851 = vadd.xlane.f32.xlu0 %v810
        %v852 = vpop.xlane.xlu0 %851
        %853 = vadd.xlane.f32.xlu0 %v811
        %v854 = vpop.xlane.xlu0 %853
        %855 = vadd.xlane.f32.xlu0 %v812
        %v856 = vpop.xlane.xlu0 %855
        %857 = vadd.xlane.f32.xlu0 %v813
        %v858 = vpop.xlane.xlu0 %857
        %859 = vadd.xlane.f32.xlu0 %v814
        %v860 = vpop.xlane.xlu0 %859
        %861 = vadd.xlane.f32.xlu0 %v815
        %v862 = vpop.xlane.xlu0 %861
        %863 = vadd.xlane.f32.xlu0 %v816
        %v864 = vpop.xlane.xlu0 %863
        %865 = vadd.xlane.f32.xlu0 %v817
        %v866 = vpop.xlane.xlu0 %865
        %867 = vadd.xlane.f32.xlu0 %v818
        %v868 = vpop.xlane.xlu0 %867
        %869 = vadd.xlane.f32.xlu0 %v819
        %v870 = vpop.xlane.xlu0 %869
        %871 = vadd.xlane.f32.xlu0 %v820
        %v872 = vpop.xlane.xlu0 %871
        %873 = vadd.xlane.f32.xlu0 %v821
        %v874 = vpop.xlane.xlu0 %873
        %875 = vadd.xlane.f32.xlu0 %v822
        %v876 = vpop.xlane.xlu0 %875
        %877 = vadd.xlane.f32.xlu0 %v823
        %v878 = vpop.xlane.xlu0 %877
        %879 = vadd.xlane.f32.xlu0 %v824
        %v880 = vpop.xlane.xlu0 %879
        %881 = vadd.xlane.f32.xlu0 %v825
        %v882 = vpop.xlane.xlu0 %881
        %883 = vadd.xlane.f32.xlu0 %v826
        %v884 = vpop.xlane.xlu0 %883
        %885 = vadd.xlane.f32.xlu0 %v827
        %v886 = vpop.xlane.xlu0 %885
        %887 = vadd.xlane.f32.xlu0 %v828
        %v888 = vpop.xlane.xlu0 %887
        %889 = vadd.xlane.f32.xlu0 %v829
        %v890 = vpop.xlane.xlu0 %889
        %891 = vadd.xlane.f32.xlu0 %v830
        %v892 = vpop.xlane.xlu0 %891
        %893 = vadd.xlane.f32.xlu0 %v831
        %v894 = vpop.xlane.xlu0 %893
        %895 = vadd.xlane.f32.xlu0 %v832
        %v896 = vpop.xlane.xlu0 %895
        %v897 = vmul.f32 %v834, %v768
        %v898 = vmul.f32 %v836, %v768
        %v899 = vmul.f32 %v838, %v768
        %v900 = vmul.f32 %v840, %v768
        %v901 = vmul.f32 %v842, %v768
        %v902 = vmul.f32 %v844, %v768
        %v903 = vmul.f32 %v846, %v768
        %v904 = vmul.f32 %v848, %v768
        %v905 = vmul.f32 %v850, %v768
        %v906 = vmul.f32 %v852, %v768
        %v907 = vmul.f32 %v854, %v768
        %v908 = vmul.f32 %v856, %v768
        %v909 = vmul.f32 %v858, %v768
        %v910 = vmul.f32 %v860, %v768
        %v911 = vmul.f32 %v862, %v768
        %v912 = vmul.f32 %v864, %v768
        %v913 = vmul.f32 %v866, %v768
        %v914 = vmul.f32 %v868, %v768
        %v915 = vmul.f32 %v870, %v768
        %v916 = vmul.f32 %v872, %v768
        %v917 = vmul.f32 %v874, %v768
        %v918 = vmul.f32 %v876, %v768
        %v919 = vmul.f32 %v878, %v768
        %v920 = vmul.f32 %v880, %v768
        %v921 = vmul.f32 %v882, %v768
        %v922 = vmul.f32 %v884, %v768
        %v923 = vmul.f32 %v886, %v768
        %v924 = vmul.f32 %v888, %v768
        %v925 = vmul.f32 %v890, %v768
        %v926 = vmul.f32 %v892, %v768
        %v927 = vmul.f32 %v894, %v768
        %v928 = vmul.f32 %v896, %v768
        %v929 = vmul.f32 %v769, %v769
        %v930 = vmul.f32 %v770, %v770
        %v931 = vmul.f32 %v771, %v771
        %v932 = vmul.f32 %v772, %v772
        %v933 = vmul.f32 %v773, %v773
        %v934 = vmul.f32 %v774, %v774
        %v935 = vmul.f32 %v775, %v775
        %v936 = vmul.f32 %v776, %v776
        %v937 = vmul.f32 %v777, %v777
        %v938 = vmul.f32 %v778, %v778
        %v939 = vmul.f32 %v779, %v779
        %v940 = vmul.f32 %v780, %v780
        %v941 = vmul.f32 %v781, %v781
        %v942 = vmul.f32 %v782, %v782
        %v943 = vmul.f32 %v783, %v783
        %v944 = vmul.f32 %v784, %v784
        %v945 = vmul.f32 %v785, %v785
        %v946 = vmul.f32 %v786, %v786
        %v947 = vmul.f32 %v787, %v787
        %v948 = vmul.f32 %v788, %v788
        %v949 = vmul.f32 %v789, %v789
        %v950 = vmul.f32 %v790, %v790
        %v951 = vmul.f32 %v791, %v791
        %v952 = vmul.f32 %v792, %v792
        %v953 = vmul.f32 %v793, %v793
        %v954 = vmul.f32 %v794, %v794
        %v955 = vmul.f32 %v795, %v795
        %v956 = vmul.f32 %v796, %v796
        %v957 = vmul.f32 %v797, %v797
        %v958 = vmul.f32 %v798, %v798
        %v959 = vmul.f32 %v799, %v799
        %v960 = vmul.f32 %v800, %v800
        %v961 = vsub.f32 %v897, %v929
        %v962 = vsub.f32 %v898, %v930
        %v963 = vsub.f32 %v899, %v931
        %v964 = vsub.f32 %v900, %v932
        %v965 = vsub.f32 %v901, %v933
        %v966 = vsub.f32 %v902, %v934
        %v967 = vsub.f32 %v903, %v935
        %v968 = vsub.f32 %v904, %v936
        %v969 = vsub.f32 %v905, %v937
        %v970 = vsub.f32 %v906, %v938
        %v971 = vsub.f32 %v907, %v939
        %v972 = vsub.f32 %v908, %v940
        %v973 = vsub.f32 %v909, %v941
        %v974 = vsub.f32 %v910, %v942
        %v975 = vsub.f32 %v911, %v943
        %v976 = vsub.f32 %v912, %v944
        %v977 = vsub.f32 %v913, %v945
        %v978 = vsub.f32 %v914, %v946
        %v979 = vsub.f32 %v915, %v947
        %v980 = vsub.f32 %v916, %v948
        %v981 = vsub.f32 %v917, %v949
        %v982 = vsub.f32 %v918, %v950
        %v983 = vsub.f32 %v919, %v951
        %v984 = vsub.f32 %v920, %v952
        %v985 = vsub.f32 %v921, %v953
        %v986 = vsub.f32 %v922, %v954
        %v987 = vsub.f32 %v923, %v955
        %v988 = vsub.f32 %v924, %v956
        %v989 = vsub.f32 %v925, %v957
        %v990 = vsub.f32 %v926, %v958
        %v991 = vsub.f32 %v927, %v959
        %v992 = vsub.f32 %v928, %v960
        %v993 = vsub.f32 %v664, %v769
        %v994 = vsub.f32 %v665, %v770
        %v995 = vsub.f32 %v666, %v771
        %v996 = vsub.f32 %v667, %v772
        %v997 = vsub.f32 %v668, %v773
        %v998 = vsub.f32 %v669, %v774
        %v999 = vsub.f32 %v670, %v775
        %v1000 = vsub.f32 %v671, %v776
        %v1001 = vsub.f32 %v672, %v777
        %v1002 = vsub.f32 %v673, %v778
        %v1003 = vsub.f32 %v674, %v779
        %v1004 = vsub.f32 %v675, %v780
        %v1005 = vsub.f32 %v676, %v781
        %v1006 = vsub.f32 %v677, %v782
        %v1007 = vsub.f32 %v678, %v783
        %v1008 = vsub.f32 %v679, %v784
        %v1009 = vsub.f32 %v680, %v785
        %v1010 = vsub.f32 %v681, %v786
        %v1011 = vsub.f32 %v682, %v787
        %v1012 = vsub.f32 %v683, %v788
        %v1013 = vsub.f32 %v684, %v789
        %v1014 = vsub.f32 %v685, %v790
        %v1015 = vsub.f32 %v686, %v791
        %v1016 = vsub.f32 %v687, %v792
        %v1017 = vsub.f32 %v688, %v793
        %v1018 = vsub.f32 %v689, %v794
        %v1019 = vsub.f32 %v690, %v795
        %v1020 = vsub.f32 %v691, %v796
        %v1021 = vsub.f32 %v692, %v797
        %v1022 = vsub.f32 %v693, %v798
        %v1023 = vsub.f32 %v694, %v799
        %v1024 = vsub.f32 %v695, %v800
        %v1025 = vadd.f32 %v961, 1e-05
        %v1026 = vadd.f32 %v962, 1e-05
        %v1027 = vadd.f32 %v963, 1e-05
        %v1028 = vadd.f32 %v964, 1e-05
        %v1029 = vadd.f32 %v965, 1e-05
        %v1030 = vadd.f32 %v966, 1e-05
        %v1031 = vadd.f32 %v967, 1e-05
        %v1032 = vadd.f32 %v968, 1e-05
        %v1033 = vadd.f32 %v969, 1e-05
        %v1034 = vadd.f32 %v970, 1e-05
        %v1035 = vadd.f32 %v971, 1e-05
        %v1036 = vadd.f32 %v972, 1e-05
        %v1037 = vadd.f32 %v973, 1e-05
        %v1038 = vadd.f32 %v974, 1e-05
        %v1039 = vadd.f32 %v975, 1e-05
        %v1040 = vadd.f32 %v976, 1e-05
        %v1041 = vadd.f32 %v977, 1e-05
        %v1042 = vadd.f32 %v978, 1e-05
        %v1043 = vadd.f32 %v979, 1e-05
        %v1044 = vadd.f32 %v980, 1e-05
        %v1045 = vadd.f32 %v981, 1e-05
        %v1046 = vadd.f32 %v982, 1e-05
        %v1047 = vadd.f32 %v983, 1e-05
        %v1048 = vadd.f32 %v984, 1e-05
        %v1049 = vadd.f32 %v985, 1e-05
        %v1050 = vadd.f32 %v986, 1e-05
        %v1051 = vadd.f32 %v987, 1e-05
        %v1052 = vadd.f32 %v988, 1e-05
        %v1053 = vadd.f32 %v989, 1e-05
        %v1054 = vadd.f32 %v990, 1e-05
        %v1055 = vadd.f32 %v991, 1e-05
        %v1056 = vadd.f32 %v992, 1e-05
        %v1057 = vrsqrt.pop %v1025
        %v1058 = vmul.f32 %v1057, %v1025
        %v1059 = vmul.f32 %v1058, %v1057
        %v1060 = vmul.f32 0.5, %v1059
        %v1061 = vsub.f32 1.5, %v1060
        %v1062 = vmul.f32 %v1057, %v1061
        %vm1063 = vweird.f32 %v1025
        %vm1064 = vweird.f32 %v1057
        %vm1065 = vmor %vm1063, %vm1064
        %v1066 = vsel %vm1065, %v1057, %v1062
        %v1067 = vrsqrt.pop %v1026
        %v1068 = vmul.f32 %v1067, %v1026
        %v1069 = vmul.f32 %v1068, %v1067
        %v1070 = vmul.f32 0.5, %v1069
        %v1071 = vsub.f32 1.5, %v1070
        %v1072 = vmul.f32 %v1067, %v1071
        %vm1073 = vweird.f32 %v1026
        %vm1074 = vweird.f32 %v1067
        %vm1075 = vmor %vm1073, %vm1074
        %v1076 = vsel %vm1075, %v1067, %v1072
        %v1077 = vrsqrt.pop %v1027
        %v1078 = vmul.f32 %v1077, %v1027
        %v1079 = vmul.f32 %v1078, %v1077
        %v1080 = vmul.f32 0.5, %v1079
        %v1081 = vsub.f32 1.5, %v1080
        %v1082 = vmul.f32 %v1077, %v1081
        %vm1083 = vweird.f32 %v1027
        %vm1084 = vweird.f32 %v1077
        %vm1085 = vmor %vm1083, %vm1084
        %v1086 = vsel %vm1085, %v1077, %v1082
        %v1087 = vrsqrt.pop %v1028
        %v1088 = vmul.f32 %v1087, %v1028
        %v1089 = vmul.f32 %v1088, %v1087
        %v1090 = vmul.f32 0.5, %v1089
        %v1091 = vsub.f32 1.5, %v1090
        %v1092 = vmul.f32 %v1087, %v1091
        %vm1093 = vweird.f32 %v1028
        %vm1094 = vweird.f32 %v1087
        %vm1095 = vmor %vm1093, %vm1094
        %v1096 = vsel %vm1095, %v1087, %v1092
        %v1097 = vrsqrt.pop %v1029
        %v1098 = vmul.f32 %v1097, %v1029
        %v1099 = vmul.f32 %v1098, %v1097
        %v1100 = vmul.f32 0.5, %v1099
        %v1101 = vsub.f32 1.5, %v1100
        %v1102 = vmul.f32 %v1097, %v1101
        %vm1103 = vweird.f32 %v1029
        %vm1104 = vweird.f32 %v1097
        %vm1105 = vmor %vm1103, %vm1104
        %v1106 = vsel %vm1105, %v1097, %v1102
        %v1107 = vrsqrt.pop %v1030
        %v1108 = vmul.f32 %v1107, %v1030
        %v1109 = vmul.f32 %v1108, %v1107
        %v1110 = vmul.f32 0.5, %v1109
        %v1111 = vsub.f32 1.5, %v1110
        %v1112 = vmul.f32 %v1107, %v1111
        %vm1113 = vweird.f32 %v1030
        %vm1114 = vweird.f32 %v1107
        %vm1115 = vmor %vm1113, %vm1114
        %v1116 = vsel %vm1115, %v1107, %v1112
        %v1117 = vrsqrt.pop %v1031
        %v1118 = vmul.f32 %v1117, %v1031
        %v1119 = vmul.f32 %v1118, %v1117
        %v1120 = vmul.f32 0.5, %v1119
        %v1121 = vsub.f32 1.5, %v1120
        %v1122 = vmul.f32 %v1117, %v1121
        %vm1123 = vweird.f32 %v1031
        %vm1124 = vweird.f32 %v1117
        %vm1125 = vmor %vm1123, %vm1124
        %v1126 = vsel %vm1125, %v1117, %v1122
        %v1127 = vrsqrt.pop %v1032
        %v1128 = vmul.f32 %v1127, %v1032
        %v1129 = vmul.f32 %v1128, %v1127
        %v1130 = vmul.f32 0.5, %v1129
        %v1131 = vsub.f32 1.5, %v1130
        %v1132 = vmul.f32 %v1127, %v1131
        %vm1133 = vweird.f32 %v1032
        %vm1134 = vweird.f32 %v1127
        %vm1135 = vmor %vm1133, %vm1134
        %v1136 = vsel %vm1135, %v1127, %v1132
        %v1137 = vrsqrt.pop %v1033
        %v1138 = vmul.f32 %v1137, %v1033
        %v1139 = vmul.f32 %v1138, %v1137
        %v1140 = vmul.f32 0.5, %v1139
        %v1141 = vsub.f32 1.5, %v1140
        %v1142 = vmul.f32 %v1137, %v1141
        %vm1143 = vweird.f32 %v1033
        %vm1144 = vweird.f32 %v1137
        %vm1145 = vmor %vm1143, %vm1144
        %v1146 = vsel %vm1145, %v1137, %v1142
        %v1147 = vrsqrt.pop %v1034
        %v1148 = vmul.f32 %v1147, %v1034
        %v1149 = vmul.f32 %v1148, %v1147
        %v1150 = vmul.f32 0.5, %v1149
        %v1151 = vsub.f32 1.5, %v1150
        %v1152 = vmul.f32 %v1147, %v1151
        %vm1153 = vweird.f32 %v1034
        %vm1154 = vweird.f32 %v1147
        %vm1155 = vmor %vm1153, %vm1154
        %v1156 = vsel %vm1155, %v1147, %v1152
        %v1157 = vrsqrt.pop %v1035
        %v1158 = vmul.f32 %v1157, %v1035
        %v1159 = vmul.f32 %v1158, %v1157
        %v1160 = vmul.f32 0.5, %v1159
        %v1161 = vsub.f32 1.5, %v1160
        %v1162 = vmul.f32 %v1157, %v1161
        %vm1163 = vweird.f32 %v1035
        %vm1164 = vweird.f32 %v1157
        %vm1165 = vmor %vm1163, %vm1164
        %v1166 = vsel %vm1165, %v1157, %v1162
        %v1167 = vrsqrt.pop %v1036
        %v1168 = vmul.f32 %v1167, %v1036
        %v1169 = vmul.f32 %v1168, %v1167
        %v1170 = vmul.f32 0.5, %v1169
        %v1171 = vsub.f32 1.5, %v1170
        %v1172 = vmul.f32 %v1167, %v1171
        %vm1173 = vweird.f32 %v1036
        %vm1174 = vweird.f32 %v1167
        %vm1175 = vmor %vm1173, %vm1174
        %v1176 = vsel %vm1175, %v1167, %v1172
        %v1177 = vrsqrt.pop %v1037
        %v1178 = vmul.f32 %v1177, %v1037
        %v1179 = vmul.f32 %v1178, %v1177
        %v1180 = vmul.f32 0.5, %v1179
        %v1181 = vsub.f32 1.5, %v1180
        %v1182 = vmul.f32 %v1177, %v1181
        %vm1183 = vweird.f32 %v1037
        %vm1184 = vweird.f32 %v1177
        %vm1185 = vmor %vm1183, %vm1184
        %v1186 = vsel %vm1185, %v1177, %v1182
        %v1187 = vrsqrt.pop %v1038
        %v1188 = vmul.f32 %v1187, %v1038
        %v1189 = vmul.f32 %v1188, %v1187
        %v1190 = vmul.f32 0.5, %v1189
        %v1191 = vsub.f32 1.5, %v1190
        %v1192 = vmul.f32 %v1187, %v1191
        %vm1193 = vweird.f32 %v1038
        %vm1194 = vweird.f32 %v1187
        %vm1195 = vmor %vm1193, %vm1194
        %v1196 = vsel %vm1195, %v1187, %v1192
        %v1197 = vrsqrt.pop %v1039
        %v1198 = vmul.f32 %v1197, %v1039
        %v1199 = vmul.f32 %v1198, %v1197
        %v1200 = vmul.f32 0.5, %v1199
        %v1201 = vsub.f32 1.5, %v1200
        %v1202 = vmul.f32 %v1197, %v1201
        %vm1203 = vweird.f32 %v1039
        %vm1204 = vweird.f32 %v1197
        %vm1205 = vmor %vm1203, %vm1204
        %v1206 = vsel %vm1205, %v1197, %v1202
        %v1207 = vrsqrt.pop %v1040
        %v1208 = vmul.f32 %v1207, %v1040
        %v1209 = vmul.f32 %v1208, %v1207
        %v1210 = vmul.f32 0.5, %v1209
        %v1211 = vsub.f32 1.5, %v1210
        %v1212 = vmul.f32 %v1207, %v1211
        %vm1213 = vweird.f32 %v1040
        %vm1214 = vweird.f32 %v1207
        %vm1215 = vmor %vm1213, %vm1214
        %v1216 = vsel %vm1215, %v1207, %v1212
        %v1217 = vrsqrt.pop %v1041
        %v1218 = vmul.f32 %v1217, %v1041
        %v1219 = vmul.f32 %v1218, %v1217
        %v1220 = vmul.f32 0.5, %v1219
        %v1221 = vsub.f32 1.5, %v1220
        %v1222 = vmul.f32 %v1217, %v1221
        %vm1223 = vweird.f32 %v1041
        %vm1224 = vweird.f32 %v1217
        %vm1225 = vmor %vm1223, %vm1224
        %v1226 = vsel %vm1225, %v1217, %v1222
        %v1227 = vrsqrt.pop %v1042
        %v1228 = vmul.f32 %v1227, %v1042
        %v1229 = vmul.f32 %v1228, %v1227
        %v1230 = vmul.f32 0.5, %v1229
        %v1231 = vsub.f32 1.5, %v1230
        %v1232 = vmul.f32 %v1227, %v1231
        %vm1233 = vweird.f32 %v1042
        %vm1234 = vweird.f32 %v1227
        %vm1235 = vmor %vm1233, %vm1234
        %v1236 = vsel %vm1235, %v1227, %v1232
        %v1237 = vrsqrt.pop %v1043
        %v1238 = vmul.f32 %v1237, %v1043
        %v1239 = vmul.f32 %v1238, %v1237
        %v1240 = vmul.f32 0.5, %v1239
        %v1241 = vsub.f32 1.5, %v1240
        %v1242 = vmul.f32 %v1237, %v1241
        %vm1243 = vweird.f32 %v1043
        %vm1244 = vweird.f32 %v1237
        %vm1245 = vmor %vm1243, %vm1244
        %v1246 = vsel %vm1245, %v1237, %v1242
        %v1247 = vrsqrt.pop %v1044
        %v1248 = vmul.f32 %v1247, %v1044
        %v1249 = vmul.f32 %v1248, %v1247
        %v1250 = vmul.f32 0.5, %v1249
        %v1251 = vsub.f32 1.5, %v1250
        %v1252 = vmul.f32 %v1247, %v1251
        %vm1253 = vweird.f32 %v1044
        %vm1254 = vweird.f32 %v1247
        %vm1255 = vmor %vm1253, %vm1254
        %v1256 = vsel %vm1255, %v1247, %v1252
        %v1257 = vrsqrt.pop %v1045
        %v1258 = vmul.f32 %v1257, %v1045
        %v1259 = vmul.f32 %v1258, %v1257
        %v1260 = vmul.f32 0.5, %v1259
        %v1261 = vsub.f32 1.5, %v1260
        %v1262 = vmul.f32 %v1257, %v1261
        %vm1263 = vweird.f32 %v1045
        %vm1264 = vweird.f32 %v1257
        %vm1265 = vmor %vm1263, %vm1264
        %v1266 = vsel %vm1265, %v1257, %v1262
        %v1267 = vrsqrt.pop %v1046
        %v1268 = vmul.f32 %v1267, %v1046
        %v1269 = vmul.f32 %v1268, %v1267
        %v1270 = vmul.f32 0.5, %v1269
        %v1271 = vsub.f32 1.5, %v1270
        %v1272 = vmul.f32 %v1267, %v1271
        %vm1273 = vweird.f32 %v1046
        %vm1274 = vweird.f32 %v1267
        %vm1275 = vmor %vm1273, %vm1274
        %v1276 = vsel %vm1275, %v1267, %v1272
        %v1277 = vrsqrt.pop %v1047
        %v1278 = vmul.f32 %v1277, %v1047
        %v1279 = vmul.f32 %v1278, %v1277
        %v1280 = vmul.f32 0.5, %v1279
        %v1281 = vsub.f32 1.5, %v1280
        %v1282 = vmul.f32 %v1277, %v1281
        %vm1283 = vweird.f32 %v1047
        %vm1284 = vweird.f32 %v1277
        %vm1285 = vmor %vm1283, %vm1284
        %v1286 = vsel %vm1285, %v1277, %v1282
        %v1287 = vrsqrt.pop %v1048
        %v1288 = vmul.f32 %v1287, %v1048
        %v1289 = vmul.f32 %v1288, %v1287
        %v1290 = vmul.f32 0.5, %v1289
        %v1291 = vsub.f32 1.5, %v1290
        %v1292 = vmul.f32 %v1287, %v1291
        %vm1293 = vweird.f32 %v1048
        %vm1294 = vweird.f32 %v1287
        %vm1295 = vmor %vm1293, %vm1294
        %v1296 = vsel %vm1295, %v1287, %v1292
        %v1297 = vrsqrt.pop %v1049
        %v1298 = vmul.f32 %v1297, %v1049
        %v1299 = vmul.f32 %v1298, %v1297
        %v1300 = vmul.f32 0.5, %v1299
        %v1301 = vsub.f32 1.5, %v1300
        %v1302 = vmul.f32 %v1297, %v1301
        %vm1303 = vweird.f32 %v1049
        %vm1304 = vweird.f32 %v1297
        %vm1305 = vmor %vm1303, %vm1304
        %v1306 = vsel %vm1305, %v1297, %v1302
        %v1307 = vrsqrt.pop %v1050
        %v1308 = vmul.f32 %v1307, %v1050
        %v1309 = vmul.f32 %v1308, %v1307
        %v1310 = vmul.f32 0.5, %v1309
        %v1311 = vsub.f32 1.5, %v1310
        %v1312 = vmul.f32 %v1307, %v1311
        %vm1313 = vweird.f32 %v1050
        %vm1314 = vweird.f32 %v1307
        %vm1315 = vmor %vm1313, %vm1314
        %v1316 = vsel %vm1315, %v1307, %v1312
        %v1317 = vrsqrt.pop %v1051
        %v1318 = vmul.f32 %v1317, %v1051
        %v1319 = vmul.f32 %v1318, %v1317
        %v1320 = vmul.f32 0.5, %v1319
        %v1321 = vsub.f32 1.5, %v1320
        %v1322 = vmul.f32 %v1317, %v1321
        %vm1323 = vweird.f32 %v1051
        %vm1324 = vweird.f32 %v1317
        %vm1325 = vmor %vm1323, %vm1324
        %v1326 = vsel %vm1325, %v1317, %v1322
        %v1327 = vrsqrt.pop %v1052
        %v1328 = vmul.f32 %v1327, %v1052
        %v1329 = vmul.f32 %v1328, %v1327
        %v1330 = vmul.f32 0.5, %v1329
        %v1331 = vsub.f32 1.5, %v1330
        %v1332 = vmul.f32 %v1327, %v1331
        %vm1333 = vweird.f32 %v1052
        %vm1334 = vweird.f32 %v1327
        %vm1335 = vmor %vm1333, %vm1334
        %v1336 = vsel %vm1335, %v1327, %v1332
        %v1337 = vrsqrt.pop %v1053
        %v1338 = vmul.f32 %v1337, %v1053
        %v1339 = vmul.f32 %v1338, %v1337
        %v1340 = vmul.f32 0.5, %v1339
        %v1341 = vsub.f32 1.5, %v1340
        %v1342 = vmul.f32 %v1337, %v1341
        %vm1343 = vweird.f32 %v1053
        %vm1344 = vweird.f32 %v1337
        %vm1345 = vmor %vm1343, %vm1344
        %v1346 = vsel %vm1345, %v1337, %v1342
        %v1347 = vrsqrt.pop %v1054
        %v1348 = vmul.f32 %v1347, %v1054
        %v1349 = vmul.f32 %v1348, %v1347
        %v1350 = vmul.f32 0.5, %v1349
        %v1351 = vsub.f32 1.5, %v1350
        %v1352 = vmul.f32 %v1347, %v1351
        %vm1353 = vweird.f32 %v1054
        %vm1354 = vweird.f32 %v1347
        %vm1355 = vmor %vm1353, %vm1354
        %v1356 = vsel %vm1355, %v1347, %v1352
        %v1357 = vrsqrt.pop %v1055
        %v1358 = vmul.f32 %v1357, %v1055
        %v1359 = vmul.f32 %v1358, %v1357
        %v1360 = vmul.f32 0.5, %v1359
        %v1361 = vsub.f32 1.5, %v1360
        %v1362 = vmul.f32 %v1357, %v1361
        %vm1363 = vweird.f32 %v1055
        %vm1364 = vweird.f32 %v1357
        %vm1365 = vmor %vm1363, %vm1364
        %v1366 = vsel %vm1365, %v1357, %v1362
        %v1367 = vrsqrt.pop %v1056
        %v1368 = vmul.f32 %v1367, %v1056
        %v1369 = vmul.f32 %v1368, %v1367
        %v1370 = vmul.f32 0.5, %v1369
        %v1371 = vsub.f32 1.5, %v1370
        %v1372 = vmul.f32 %v1367, %v1371
        %vm1373 = vweird.f32 %v1056
        %vm1374 = vweird.f32 %v1367
        %vm1375 = vmor %vm1373, %vm1374
        %v1376 = vsel %vm1375, %v1367, %v1372
        %v1377 = vmul.f32 %v993, %v1066
        %v1378 = vmul.f32 %v994, %v1076
        %v1379 = vmul.f32 %v995, %v1086
        %v1380 = vmul.f32 %v996, %v1096
        %v1381 = vmul.f32 %v997, %v1106
        %v1382 = vmul.f32 %v998, %v1116
        %v1383 = vmul.f32 %v999, %v1126
        %v1384 = vmul.f32 %v1000, %v1136
        %v1385 = vmul.f32 %v1001, %v1146
        %v1386 = vmul.f32 %v1002, %v1156
        %v1387 = vmul.f32 %v1003, %v1166
        %v1388 = vmul.f32 %v1004, %v1176
        %v1389 = vmul.f32 %v1005, %v1186
        %v1390 = vmul.f32 %v1006, %v1196
        %v1391 = vmul.f32 %v1007, %v1206
        %v1392 = vmul.f32 %v1008, %v1216
        %v1393 = vmul.f32 %v1009, %v1226
        %v1394 = vmul.f32 %v1010, %v1236
        %v1395 = vmul.f32 %v1011, %v1246
        %v1396 = vmul.f32 %v1012, %v1256
        %v1397 = vmul.f32 %v1013, %v1266
        %v1398 = vmul.f32 %v1014, %v1276
        %v1399 = vmul.f32 %v1015, %v1286
        %v1400 = vmul.f32 %v1016, %v1296
        %v1401 = vmul.f32 %v1017, %v1306
        %v1402 = vmul.f32 %v1018, %v1316
        %v1403 = vmul.f32 %v1019, %v1326
        %v1404 = vmul.f32 %v1020, %v1336
        %v1405 = vmul.f32 %v1021, %v1346
        %v1406 = vmul.f32 %v1022, %v1356
        %v1407 = vmul.f32 %v1023, %v1366
        %v1408 = vmul.f32 %v1024, %v1376
        %v1410 = vperm.slane %v696, 0
        %v1412 = vmul.f32 %v1377, %v1410
        %v1413 = vmul.f32 %v1378, %v1410
        %v1414 = vmul.f32 %v1379, %v1410
        %v1415 = vmul.f32 %v1380, %v1410
        %v1416 = vmul.f32 %v1381, %v1410
        %v1417 = vmul.f32 %v1382, %v1410
        %v1418 = vmul.f32 %v1383, %v1410
        %v1419 = vmul.f32 %v1384, %v1410
        %v1420 = vmul.f32 %v1385, %v1410
        %v1421 = vmul.f32 %v1386, %v1410
        %v1422 = vmul.f32 %v1387, %v1410
        %v1423 = vmul.f32 %v1388, %v1410
        %v1424 = vmul.f32 %v1389, %v1410
        %v1425 = vmul.f32 %v1390, %v1410
        %v1426 = vmul.f32 %v1391, %v1410
        %v1427 = vmul.f32 %v1392, %v1410
        %v1428 = vmul.f32 %v1393, %v1410
        %v1429 = vmul.f32 %v1394, %v1410
        %v1430 = vmul.f32 %v1395, %v1410
        %v1431 = vmul.f32 %v1396, %v1410
        %v1432 = vmul.f32 %v1397, %v1410
        %v1433 = vmul.f32 %v1398, %v1410
        %v1434 = vmul.f32 %v1399, %v1410
        %v1435 = vmul.f32 %v1400, %v1410
        %v1436 = vmul.f32 %v1401, %v1410
        %v1437 = vmul.f32 %v1402, %v1410
        %v1438 = vmul.f32 %v1403, %v1410
        %v1439 = vmul.f32 %v1404, %v1410
        %v1440 = vmul.f32 %v1405, %v1410
        %v1441 = vmul.f32 %v1406, %v1410
        %v1442 = vmul.f32 %v1407, %v1410
        %v1443 = vmul.f32 %v1408, %v1410
        %v1445 = vperm.slane %v697, 0
        %v1447 = vadd.f32 %v1412, %v1445
        %v1448 = vadd.f32 %v1413, %v1445
        %v1449 = vadd.f32 %v1414, %v1445
        %v1450 = vadd.f32 %v1415, %v1445
        %v1451 = vadd.f32 %v1416, %v1445
        %v1452 = vadd.f32 %v1417, %v1445
        %v1453 = vadd.f32 %v1418, %v1445
        %v1454 = vadd.f32 %v1419, %v1445
        %v1455 = vadd.f32 %v1420, %v1445
        %v1456 = vadd.f32 %v1421, %v1445
        %v1457 = vadd.f32 %v1422, %v1445
        %v1458 = vadd.f32 %v1423, %v1445
        %v1459 = vadd.f32 %v1424, %v1445
        %v1460 = vadd.f32 %v1425, %v1445
        %v1461 = vadd.f32 %v1426, %v1445
        %v1462 = vadd.f32 %v1427, %v1445
        %v1463 = vadd.f32 %v1428, %v1445
        %v1464 = vadd.f32 %v1429, %v1445
        %v1465 = vadd.f32 %v1430, %v1445
        %v1466 = vadd.f32 %v1431, %v1445
        %v1467 = vadd.f32 %v1432, %v1445
        %v1468 = vadd.f32 %v1433, %v1445
        %v1469 = vadd.f32 %v1434, %v1445
        %v1470 = vadd.f32 %v1435, %v1445
        %v1471 = vadd.f32 %v1436, %v1445
        %v1472 = vadd.f32 %v1437, %v1445
        %v1473 = vadd.f32 %v1438, %v1445
        %v1474 = vadd.f32 %v1439, %v1445
        %v1475 = vadd.f32 %v1440, %v1445
        %v1476 = vadd.f32 %v1441, %v1445
        %v1477 = vadd.f32 %v1442, %v1445
        %v1478 = vadd.f32 %v1443, %v1445
        %v1479 = vpack.c.bf16 %v1447, %v1447
        %v1480 = vpack.c.bf16 %v1448, %v1448
        %v1481 = vpack.c.bf16 %v1449, %v1449
        %v1482 = vpack.c.bf16 %v1450, %v1450
        %v1483 = vpack.c.bf16 %v1451, %v1451
        %v1484 = vpack.c.bf16 %v1452, %v1452
        %v1485 = vpack.c.bf16 %v1453, %v1453
        %v1486 = vpack.c.bf16 %v1454, %v1454
        %v1487 = vpack.c.bf16 %v1455, %v1455
        %v1488 = vpack.c.bf16 %v1456, %v1456
        %v1489 = vpack.c.bf16 %v1457, %v1457
        %v1490 = vpack.c.bf16 %v1458, %v1458
        %v1491 = vpack.c.bf16 %v1459, %v1459
        %v1492 = vpack.c.bf16 %v1460, %v1460
        %v1493 = vpack.c.bf16 %v1461, %v1461
        %v1494 = vpack.c.bf16 %v1462, %v1462
        %v1495 = vpack.c.bf16 %v1463, %v1463
        %v1496 = vpack.c.bf16 %v1464, %v1464
        %v1497 = vpack.c.bf16 %v1465, %v1465
        %v1498 = vpack.c.bf16 %v1466, %v1466
        %v1499 = vpack.c.bf16 %v1467, %v1467
        %v1500 = vpack.c.bf16 %v1468, %v1468
        %v1501 = vpack.c.bf16 %v1469, %v1469
        %v1502 = vpack.c.bf16 %v1470, %v1470
        %v1503 = vpack.c.bf16 %v1471, %v1471
        %v1504 = vpack.c.bf16 %v1472, %v1472
        %v1505 = vpack.c.bf16 %v1473, %v1473
        %v1506 = vpack.c.bf16 %v1474, %v1474
        %v1507 = vpack.c.bf16 %v1475, %v1475
        %v1508 = vpack.c.bf16 %v1476, %v1476
        %v1509 = vpack.c.bf16 %v1477, %v1477
        %v1510 = vpack.c.bf16 %v1478, %v1478
        %v1511 = vld [vmem:[%s7] sm:$0xf]
        %v1512 = vld [vmem:[%s7 + $0x4] sm:$0xf]
        %v1513 = vld [vmem:[%s7 + $0x8] sm:$0xf]
        %v1514 = vld [vmem:[%s7 + $0xc] sm:$0xf]
        %v1515 = vld [vmem:[%s7 + $0x10] sm:$0xf]
        %v1516 = vld [vmem:[%s7 + $0x14] sm:$0xf]
        %v1517 = vld [vmem:[%s7 + $0x18] sm:$0xf]
        %v1518 = vld [vmem:[%s7 + $0x1c] sm:$0xf]
        %v1519 = vld [vmem:[%s7 + $0x20] sm:$0xf]
        %v1520 = vld [vmem:[%s7 + $0x24] sm:$0xf]
        %v1521 = vld [vmem:[%s7 + $0x28] sm:$0xf]
        %v1522 = vld [vmem:[%s7 + $0x2c] sm:$0xf]
        %v1523 = vld [vmem:[%s7 + $0x30] sm:$0xf]
        %v1524 = vld [vmem:[%s7 + $0x34] sm:$0xf]
        %v1525 = vld [vmem:[%s7 + $0x38] sm:$0xf]
        %v1526 = vld [vmem:[%s7 + $0x3c] sm:$0xf]
        %v1527 = vld [vmem:[%s619] sm:$0xff]
        %v1528 = vld [vmem:[%s619 + $0x8] sm:$0xff]
        %v1529 = vld [vmem:[%s619 + $0x10] sm:$0xff]
        %v1530 = vld [vmem:[%s619 + $0x18] sm:$0xff]
        %v1531 = vld [vmem:[%s619 + $0x20] sm:$0xff]
        %v1532 = vld [vmem:[%s619 + $0x28] sm:$0xff]
        %v1533 = vld [vmem:[%s619 + $0x30] sm:$0xff]
        %v1534 = vld [vmem:[%s619 + $0x38] sm:$0xff]
        %v1535 = vld [vmem:[%s619 + $0x40] sm:$0xff]
        %v1536 = vld [vmem:[%s619 + $0x48] sm:$0xff]
        %v1537 = vld [vmem:[%s619 + $0x50] sm:$0xff]
        %v1538 = vld [vmem:[%s619 + $0x58] sm:$0xff]
        %v1539 = vld [vmem:[%s619 + $0x60] sm:$0xff]
        %v1540 = vld [vmem:[%s619 + $0x68] sm:$0xff]
        %v1541 = vld [vmem:[%s619 + $0x70] sm:$0xff]
        %v1542 = vld [vmem:[%s619 + $0x78] sm:$0xff]
        %v1543 = vld [vmem:[%s619 + $0x80] sm:$0xff]
        %v1544 = vld [vmem:[%s619 + $0x88] sm:$0xff]
        %v1545 = vld [vmem:[%s619 + $0x90] sm:$0xff]
        %v1546 = vld [vmem:[%s619 + $0x98] sm:$0xff]
        %v1547 = vld [vmem:[%s619 + $0xa0] sm:$0xff]
        %v1548 = vld [vmem:[%s619 + $0xa8] sm:$0xff]
        %v1549 = vld [vmem:[%s619 + $0xb0] sm:$0xff]
        %v1550 = vld [vmem:[%s619 + $0xb8] sm:$0xff]
        %v1551 = vld [vmem:[%s619 + $0xc0] sm:$0xff]
        %v1552 = vld [vmem:[%s619 + $0xc8] sm:$0xff]
        %v1553 = vld [vmem:[%s619 + $0xd0] sm:$0xff]
        %v1554 = vld [vmem:[%s619 + $0xd8] sm:$0xff]
        %v1555 = vld [vmem:[%s619 + $0xe0] sm:$0xff]
        %v1556 = vld [vmem:[%s619 + $0xe8] sm:$0xff]
        %v1557 = vld [vmem:[%s619 + $0xf0] sm:$0xff]
        %v1558 = vld [vmem:[%s619 + $0xf8] sm:$0xff]
        %v1559 = vld [vmem:[%s9] sm:$0xf]
        %v1560 = vld [vmem:[%s9 + $0x4] sm:$0xf]
        %v1561 = vld [vmem:[%s9 + $0x8] sm:$0xf]
        %v1562 = vld [vmem:[%s9 + $0xc] sm:$0xf]
        %v1563 = vld [vmem:[%s9 + $0x10] sm:$0xf]
        %v1564 = vld [vmem:[%s9 + $0x14] sm:$0xf]
        %v1565 = vld [vmem:[%s9 + $0x18] sm:$0xf]
        %v1566 = vld [vmem:[%s9 + $0x1c] sm:$0xf]
        %v1567 = vld [vmem:[%s9 + $0x20] sm:$0xf]
        %v1568 = vld [vmem:[%s9 + $0x24] sm:$0xf]
        %v1569 = vld [vmem:[%s9 + $0x28] sm:$0xf]
        %v1570 = vld [vmem:[%s9 + $0x2c] sm:$0xf]
        %v1571 = vld [vmem:[%s9 + $0x30] sm:$0xf]
        %v1572 = vld [vmem:[%s9 + $0x34] sm:$0xf]
        %v1573 = vld [vmem:[%s9 + $0x38] sm:$0xf]
        %v1574 = vld [vmem:[%s9 + $0x3c] sm:$0xf]
        %v1575 = vld [vmem:[%s9 + $0x40] sm:$0xf]
        %v1576 = vld [vmem:[%s9 + $0x44] sm:$0x3]
        %v1609 = vunpack.c.l.b16 %v1527
        %v1610 = vunpack.c.h.b16 %v1527
        %v1611 = vunpack.c.l.b16 %v1528
        %v1612 = vunpack.c.h.b16 %v1528
        %v1613 = vunpack.c.l.b16 %v1529
        %v1614 = vunpack.c.h.b16 %v1529
        %v1615 = vunpack.c.l.b16 %v1530
        %v1616 = vunpack.c.h.b16 %v1530
        %v1617 = vunpack.c.l.b16 %v1531
        %v1618 = vunpack.c.h.b16 %v1531
        %v1619 = vunpack.c.l.b16 %v1532
        %v1620 = vunpack.c.h.b16 %v1532
        %v1621 = vunpack.c.l.b16 %v1533
        %v1622 = vunpack.c.h.b16 %v1533
        %v1623 = vunpack.c.l.b16 %v1534
        %v1624 = vunpack.c.h.b16 %v1534
        %v1625 = vunpack.c.l.b16 %v1535
        %v1626 = vunpack.c.h.b16 %v1535
        %v1627 = vunpack.c.l.b16 %v1536
        %v1628 = vunpack.c.h.b16 %v1536
        %v1629 = vunpack.c.l.b16 %v1537
        %v1630 = vunpack.c.h.b16 %v1537
        %v1631 = vunpack.c.l.b16 %v1538
        %v1632 = vunpack.c.h.b16 %v1538
        %v1633 = vunpack.c.l.b16 %v1539
        %v1634 = vunpack.c.h.b16 %v1539
        %v1635 = vunpack.c.l.b16 %v1540
        %v1636 = vunpack.c.h.b16 %v1540
        %v1637 = vunpack.c.l.b16 %v1541
        %v1638 = vunpack.c.h.b16 %v1541
        %v1639 = vunpack.c.l.b16 %v1542
        %v1640 = vunpack.c.h.b16 %v1542
        %v1641 = vunpack.c.l.b16 %v1543
        %v1642 = vunpack.c.h.b16 %v1543
        %v1643 = vunpack.c.l.b16 %v1544
        %v1644 = vunpack.c.h.b16 %v1544
        %v1645 = vunpack.c.l.b16 %v1545
        %v1646 = vunpack.c.h.b16 %v1545
        %v1647 = vunpack.c.l.b16 %v1546
        %v1648 = vunpack.c.h.b16 %v1546
        %v1649 = vunpack.c.l.b16 %v1547
        %v1650 = vunpack.c.h.b16 %v1547
        %v1651 = vunpack.c.l.b16 %v1548
        %v1652 = vunpack.c.h.b16 %v1548
        %v1653 = vunpack.c.l.b16 %v1549
        %v1654 = vunpack.c.h.b16 %v1549
        %v1655 = vunpack.c.l.b16 %v1550
        %v1656 = vunpack.c.h.b16 %v1550
        %v1657 = vunpack.c.l.b16 %v1551
        %v1658 = vunpack.c.h.b16 %v1551
        %v1659 = vunpack.c.l.b16 %v1552
        %v1660 = vunpack.c.h.b16 %v1552
        %v1661 = vunpack.c.l.b16 %v1553
        %v1662 = vunpack.c.h.b16 %v1553
        %v1663 = vunpack.c.l.b16 %v1554
        %v1664 = vunpack.c.h.b16 %v1554
        %v1665 = vunpack.c.l.b16 %v1555
        %v1666 = vunpack.c.h.b16 %v1555
        %v1667 = vunpack.c.l.b16 %v1556
        %v1668 = vunpack.c.h.b16 %v1556
        %v1669 = vunpack.c.l.b16 %v1557
        %v1670 = vunpack.c.h.b16 %v1557
        %v1671 = vunpack.c.l.b16 %v1558
        %v1672 = vunpack.c.h.b16 %v1558
        %v1673 = vpack.c.b16 %v1611, %v1609
        %v1674 = vpack.c.b16 %v1612, %v1610
        %v1675 = vpack.c.b16 %v1615, %v1613
        %v1676 = vpack.c.b16 %v1616, %v1614
        %v1677 = vpack.c.b16 %v1619, %v1617
        %v1678 = vpack.c.b16 %v1620, %v1618
        %v1679 = vpack.c.b16 %v1623, %v1621
        %v1680 = vpack.c.b16 %v1624, %v1622
        %v1681 = vpack.c.b16 %v1627, %v1625
        %v1682 = vpack.c.b16 %v1628, %v1626
        %v1683 = vpack.c.b16 %v1631, %v1629
        %v1684 = vpack.c.b16 %v1632, %v1630
        %v1685 = vpack.c.b16 %v1635, %v1633
        %v1686 = vpack.c.b16 %v1636, %v1634
        %v1687 = vpack.c.b16 %v1639, %v1637
        %v1688 = vpack.c.b16 %v1640, %v1638
        %v1689 = vpack.c.b16 %v1643, %v1641
        %v1690 = vpack.c.b16 %v1644, %v1642
        %v1691 = vpack.c.b16 %v1647, %v1645
        %v1692 = vpack.c.b16 %v1648, %v1646
        %v1693 = vpack.c.b16 %v1651, %v1649
        %v1694 = vpack.c.b16 %v1652, %v1650
        %v1695 = vpack.c.b16 %v1655, %v1653
        %v1696 = vpack.c.b16 %v1656, %v1654
        %v1697 = vpack.c.b16 %v1659, %v1657
        %v1698 = vpack.c.b16 %v1660, %v1658
        %v1699 = vpack.c.b16 %v1663, %v1661
        %v1700 = vpack.c.b16 %v1664, %v1662
        %v1701 = vpack.c.b16 %v1667, %v1665
        %v1702 = vpack.c.b16 %v1668, %v1666
        %v1703 = vpack.c.b16 %v1671, %v1669
        %v1704 = vpack.c.b16 %v1672, %v1670
        %v1739 = vunpack.c.l.b16 %v1559
        %v1740 = vunpack.c.l.b16 %v1560
        %v1741 = vunpack.c.l.b16 %v1561
        %v1742 = vunpack.c.l.b16 %v1562
        %v1743 = vunpack.c.l.b16 %v1563
        %v1744 = vunpack.c.l.b16 %v1564
        %v1745 = vunpack.c.l.b16 %v1565
        %v1746 = vunpack.c.l.b16 %v1566
        %v1747 = vunpack.c.l.b16 %v1567
        %v1748 = vunpack.c.l.b16 %v1568
        %v1749 = vunpack.c.l.b16 %v1569
        %v1750 = vunpack.c.l.b16 %v1570
        %v1751 = vunpack.c.l.b16 %v1571
        %v1752 = vunpack.c.l.b16 %v1572
        %v1753 = vunpack.c.l.b16 %v1573
        %v1754 = vunpack.c.l.b16 %v1574
        %v1755 = vunpack.c.l.b16 %v1575
        %v1756 = vunpack.c.l.b16 %v1576
        %v1757 = vpack.c.b16 %v1740, %v1739
        %v1758 = vpack.c.b16 %v1742, %v1741
        %v1759 = vpack.c.b16 %v1744, %v1743
        %v1760 = vpack.c.b16 %v1746, %v1745
        %v1761 = vpack.c.b16 %v1748, %v1747
        %v1762 = vpack.c.b16 %v1750, %v1749
        %v1763 = vpack.c.b16 %v1752, %v1751
        %v1764 = vpack.c.b16 %v1754, %v1753
        %v1765 = vpack.c.b16 %v1756, %v1755
        %vm1774 = vcmask 89088
        %v1776 = vsel %vm1774, %v1674, 0
        %v1779 = vsel %vm1774, %v1676, 0
        %v1782 = vsel %vm1774, %v1678, 0
        %v1785 = vsel %vm1774, %v1680, 0
        %v1788 = vsel %vm1774, %v1682, 0
        %v1791 = vsel %vm1774, %v1684, 0
        %v1794 = vsel %vm1774, %v1686, 0
        %v1797 = vsel %vm1774, %v1688, 0
        %v1800 = vsel %vm1774, %v1690, 0
        %v1803 = vsel %vm1774, %v1692, 0
        %v1806 = vsel %vm1774, %v1694, 0
        %v1809 = vsel %vm1774, %v1696, 0
        %v1812 = vsel %vm1774, %v1698, 0
        %v1815 = vsel %vm1774, %v1700, 0
        %v1818 = vsel %vm1774, %v1702, 0
        %v1821 = vsel %vm1774, %v1704, 0
        %vm1823 = vcmask 1044480
        %vm1824 = vcmask 1045504
        %v1825 = vsel %vm1823, 4294967295, 65535
        %v1826 = vsel %vm1824, %v1825, 0
        %v1828 = vand.u32 %v1765, %v1826
        %1830 = vmatpush.bf16.msra.mxu0 %v1764
        %1831 = vmatpush.bf16.msra.mxu0 %v1763
        %1832 = vmatpush.bf16.msra.mxu0 %v1762
        %1833 = vmatpush.bf16.msra.mxu0 %v1761
        %1834 = vmatpush.bf16.msra.mxu0 %v1760
        %1835 = vmatpush.bf16.msra.mxu0 %v1759
        %1836 = vmatpush.bf16.msra.mxu0 %v1758
        %1837 = vmatpush.bf16.msra.mxu0 %v1757
        %1838 = vmatmul.bf16.gmra.mxu0 %v1673
        %v1839 = vpop.f32.mrf.mxu0
        %v1840 = vadd.f32 0.0, %v1839
        %v1841 = vpop.f32.mrf.mxu0
        %v1842 = vadd.f32 0.0, %v1841
        %1843 = vmatmul.bf16.gmra.mxu0 %v1675
        %v1844 = vpop.f32.mrf.mxu0
        %v1845 = vadd.f32 0.0, %v1844
        %v1846 = vpop.f32.mrf.mxu0
        %v1847 = vadd.f32 0.0, %v1846
        %1848 = vmatmul.bf16.gmra.mxu0 %v1677
        %v1849 = vpop.f32.mrf.mxu0
        %v1850 = vadd.f32 0.0, %v1849
        %v1851 = vpop.f32.mrf.mxu0
        %v1852 = vadd.f32 0.0, %v1851
        %1853 = vmatmul.bf16.gmra.mxu0 %v1679
        %v1854 = vpop.f32.mrf.mxu0
        %v1855 = vadd.f32 0.0, %v1854
        %v1856 = vpop.f32.mrf.mxu0
        %v1857 = vadd.f32 0.0, %v1856
        %1858 = vmatmul.bf16.gmra.mxu0 %v1681
        %v1859 = vpop.f32.mrf.mxu0
        %v1860 = vadd.f32 0.0, %v1859
        %v1861 = vpop.f32.mrf.mxu0
        %v1862 = vadd.f32 0.0, %v1861
        %1863 = vmatmul.bf16.gmra.mxu0 %v1683
        %v1864 = vpop.f32.mrf.mxu0
        %v1865 = vadd.f32 0.0, %v1864
        %v1866 = vpop.f32.mrf.mxu0
        %v1867 = vadd.f32 0.0, %v1866
        %1868 = vmatmul.bf16.gmra.mxu0 %v1685
        %v1869 = vpop.f32.mrf.mxu0
        %v1870 = vadd.f32 0.0, %v1869
        %v1871 = vpop.f32.mrf.mxu0
        %v1872 = vadd.f32 0.0, %v1871
        %1873 = vmatmul.bf16.gmra.mxu0 %v1687
        %v1874 = vpop.f32.mrf.mxu0
        %v1875 = vadd.f32 0.0, %v1874
        %v1876 = vpop.f32.mrf.mxu0
        %v1877 = vadd.f32 0.0, %v1876
        %1878 = vmatmul.bf16.gmra.mxu0 %v1689
        %v1879 = vpop.f32.mrf.mxu0
        %v1880 = vadd.f32 0.0, %v1879
        %v1881 = vpop.f32.mrf.mxu0
        %v1882 = vadd.f32 0.0, %v1881
        %1883 = vmatmul.bf16.gmra.mxu0 %v1691
        %v1884 = vpop.f32.mrf.mxu0
        %v1885 = vadd.f32 0.0, %v1884
        %v1886 = vpop.f32.mrf.mxu0
        %v1887 = vadd.f32 0.0, %v1886
        %1888 = vmatmul.bf16.gmra.mxu0 %v1693
        %v1889 = vpop.f32.mrf.mxu0
        %v1890 = vadd.f32 0.0, %v1889
        %v1891 = vpop.f32.mrf.mxu0
        %v1892 = vadd.f32 0.0, %v1891
        %1893 = vmatmul.bf16.gmra.mxu0 %v1695
        %v1894 = vpop.f32.mrf.mxu0
        %v1895 = vadd.f32 0.0, %v1894
        %v1896 = vpop.f32.mrf.mxu0
        %v1897 = vadd.f32 0.0, %v1896
        %1898 = vmatmul.bf16.gmra.mxu0 %v1697
        %v1899 = vpop.f32.mrf.mxu0
        %v1900 = vadd.f32 0.0, %v1899
        %v1901 = vpop.f32.mrf.mxu0
        %v1902 = vadd.f32 0.0, %v1901
        %1903 = vmatmul.bf16.gmra.mxu0 %v1699
        %v1904 = vpop.f32.mrf.mxu0
        %v1905 = vadd.f32 0.0, %v1904
        %v1906 = vpop.f32.mrf.mxu0
        %v1907 = vadd.f32 0.0, %v1906
        %1908 = vmatmul.bf16.gmra.mxu0 %v1701
        %v1909 = vpop.f32.mrf.mxu0
        %v1910 = vadd.f32 0.0, %v1909
        %v1911 = vpop.f32.mrf.mxu0
        %v1912 = vadd.f32 0.0, %v1911
        %1913 = vmatmul.bf16.gmra.mxu0 %v1703
        %v1914 = vpop.f32.mrf.mxu0
        %v1915 = vadd.f32 0.0, %v1914
        %v1916 = vpop.f32.mrf.mxu0
        %v1917 = vadd.f32 0.0, %v1916
        %1918 = vdwg.mxu0
        %1919 = vmatpush.bf16.msra.mxu0 0
        %1920 = vmatpush.bf16.msra.mxu0 0
        %1921 = vmatpush.bf16.msra.mxu0 0
        %1922 = vmatpush.bf16.msra.mxu0 0
        %1923 = vmatpush.bf16.msra.mxu0 0
        %1924 = vmatpush.bf16.msra.mxu0 0
        %1925 = vmatpush.bf16.msra.mxu0 0
        %1926 = vmatpush.bf16.msra.mxu0 %v1828
        %1927 = vmatmul.bf16.gmra.mxu0 %v1776
        %v1928 = vpop.f32.mrf.mxu0
        %v1929 = vadd.f32 %v1840, %v1928
        %v1930 = vpop.f32.mrf.mxu0
        %v1931 = vadd.f32 %v1842, %v1930
        %1932 = vmatmul.bf16.gmra.mxu0 %v1779
        %v1933 = vpop.f32.mrf.mxu0
        %v1934 = vadd.f32 %v1845, %v1933
        %v1935 = vpop.f32.mrf.mxu0
        %v1936 = vadd.f32 %v1847, %v1935
        %1937 = vmatmul.bf16.gmra.mxu0 %v1782
        %v1938 = vpop.f32.mrf.mxu0
        %v1939 = vadd.f32 %v1850, %v1938
        %v1940 = vpop.f32.mrf.mxu0
        %v1941 = vadd.f32 %v1852, %v1940
        %1942 = vmatmul.bf16.gmra.mxu0 %v1785
        %v1943 = vpop.f32.mrf.mxu0
        %v1944 = vadd.f32 %v1855, %v1943
        %v1945 = vpop.f32.mrf.mxu0
        %v1946 = vadd.f32 %v1857, %v1945
        %1947 = vmatmul.bf16.gmra.mxu0 %v1788
        %v1948 = vpop.f32.mrf.mxu0
        %v1949 = vadd.f32 %v1860, %v1948
        %v1950 = vpop.f32.mrf.mxu0
        %v1951 = vadd.f32 %v1862, %v1950
        %1952 = vmatmul.bf16.gmra.mxu0 %v1791
        %v1953 = vpop.f32.mrf.mxu0
        %v1954 = vadd.f32 %v1865, %v1953
        %v1955 = vpop.f32.mrf.mxu0
        %v1956 = vadd.f32 %v1867, %v1955
        %1957 = vmatmul.bf16.gmra.mxu0 %v1794
        %v1958 = vpop.f32.mrf.mxu0
        %v1959 = vadd.f32 %v1870, %v1958
        %v1960 = vpop.f32.mrf.mxu0
        %v1961 = vadd.f32 %v1872, %v1960
        %1962 = vmatmul.bf16.gmra.mxu0 %v1797
        %v1963 = vpop.f32.mrf.mxu0
        %v1964 = vadd.f32 %v1875, %v1963
        %v1965 = vpop.f32.mrf.mxu0
        %v1966 = vadd.f32 %v1877, %v1965
        %1967 = vmatmul.bf16.gmra.mxu0 %v1800
        %v1968 = vpop.f32.mrf.mxu0
        %v1969 = vadd.f32 %v1880, %v1968
        %v1970 = vpop.f32.mrf.mxu0
        %v1971 = vadd.f32 %v1882, %v1970
        %1972 = vmatmul.bf16.gmra.mxu0 %v1803
        %v1973 = vpop.f32.mrf.mxu0
        %v1974 = vadd.f32 %v1885, %v1973
        %v1975 = vpop.f32.mrf.mxu0
        %v1976 = vadd.f32 %v1887, %v1975
        %1977 = vmatmul.bf16.gmra.mxu0 %v1806
        %v1978 = vpop.f32.mrf.mxu0
        %v1979 = vadd.f32 %v1890, %v1978
        %v1980 = vpop.f32.mrf.mxu0
        %v1981 = vadd.f32 %v1892, %v1980
        %1982 = vmatmul.bf16.gmra.mxu0 %v1809
        %v1983 = vpop.f32.mrf.mxu0
        %v1984 = vadd.f32 %v1895, %v1983
        %v1985 = vpop.f32.mrf.mxu0
        %v1986 = vadd.f32 %v1897, %v1985
        %1987 = vmatmul.bf16.gmra.mxu0 %v1812
        %v1988 = vpop.f32.mrf.mxu0
        %v1989 = vadd.f32 %v1900, %v1988
        %v1990 = vpop.f32.mrf.mxu0
        %v1991 = vadd.f32 %v1902, %v1990
        %1992 = vmatmul.bf16.gmra.mxu0 %v1815
        %v1993 = vpop.f32.mrf.mxu0
        %v1994 = vadd.f32 %v1905, %v1993
        %v1995 = vpop.f32.mrf.mxu0
        %v1996 = vadd.f32 %v1907, %v1995
        %1997 = vmatmul.bf16.gmra.mxu0 %v1818
        %v1998 = vpop.f32.mrf.mxu0
        %v1999 = vadd.f32 %v1910, %v1998
        %v2000 = vpop.f32.mrf.mxu0
        %v2001 = vadd.f32 %v1912, %v2000
        %2002 = vmatmul.bf16.gmra.mxu0 %v1821
        %v2003 = vpop.f32.mrf.mxu0
        %v2004 = vadd.f32 %v1915, %v2003
        %v2005 = vpop.f32.mrf.mxu0
        %v2006 = vadd.f32 %v1917, %v2005
        %2007 = vdwg.mxu0
        %v2040 = vunpack.c.l.b16 %v1479
        %v2041 = vunpack.c.l.b16 %v1480
        %v2042 = vunpack.c.l.b16 %v1481
        %v2043 = vunpack.c.l.b16 %v1482
        %v2044 = vunpack.c.l.b16 %v1483
        %v2045 = vunpack.c.l.b16 %v1484
        %v2046 = vunpack.c.l.b16 %v1485
        %v2047 = vunpack.c.l.b16 %v1486
        %v2048 = vunpack.c.l.b16 %v1487
        %v2049 = vunpack.c.l.b16 %v1488
        %v2050 = vunpack.c.l.b16 %v1489
        %v2051 = vunpack.c.l.b16 %v1490
        %v2052 = vunpack.c.l.b16 %v1491
        %v2053 = vunpack.c.l.b16 %v1492
        %v2054 = vunpack.c.l.b16 %v1493
        %v2055 = vunpack.c.l.b16 %v1494
        %v2056 = vunpack.c.l.b16 %v1495
        %v2057 = vunpack.c.l.b16 %v1496
        %v2058 = vunpack.c.l.b16 %v1497
        %v2059 = vunpack.c.l.b16 %v1498
        %v2060 = vunpack.c.l.b16 %v1499
        %v2061 = vunpack.c.l.b16 %v1500
        %v2062 = vunpack.c.l.b16 %v1501
        %v2063 = vunpack.c.l.b16 %v1502
        %v2064 = vunpack.c.l.b16 %v1503
        %v2065 = vunpack.c.l.b16 %v1504
        %v2066 = vunpack.c.l.b16 %v1505
        %v2067 = vunpack.c.l.b16 %v1506
        %v2068 = vunpack.c.l.b16 %v1507
        %v2069 = vunpack.c.l.b16 %v1508
        %v2070 = vunpack.c.l.b16 %v1509
        %v2071 = vunpack.c.l.b16 %v1510
        %v2072 = vpack.c.b16 %v2041, %v2040
        %v2073 = vpack.c.b16 %v2043, %v2042
        %v2074 = vpack.c.b16 %v2045, %v2044
        %v2075 = vpack.c.b16 %v2047, %v2046
        %v2076 = vpack.c.b16 %v2049, %v2048
        %v2077 = vpack.c.b16 %v2051, %v2050
        %v2078 = vpack.c.b16 %v2053, %v2052
        %v2079 = vpack.c.b16 %v2055, %v2054
        %v2080 = vpack.c.b16 %v2057, %v2056
        %v2081 = vpack.c.b16 %v2059, %v2058
        %v2082 = vpack.c.b16 %v2061, %v2060
        %v2083 = vpack.c.b16 %v2063, %v2062
        %v2084 = vpack.c.b16 %v2065, %v2064
        %v2085 = vpack.c.b16 %v2067, %v2066
        %v2086 = vpack.c.b16 %v2069, %v2068
        %v2087 = vpack.c.b16 %v2071, %v2070
        %v2120 = vunpack.c.l.b16 %v1511
        %v2121 = vunpack.c.l.b16 %v1512
        %v2122 = vunpack.c.l.b16 %v1513
        %v2123 = vunpack.c.l.b16 %v1514
        %v2124 = vunpack.c.l.b16 %v1515
        %v2125 = vunpack.c.l.b16 %v1516
        %v2126 = vunpack.c.l.b16 %v1517
        %v2127 = vunpack.c.l.b16 %v1518
        %v2128 = vunpack.c.l.b16 %v1519
        %v2129 = vunpack.c.l.b16 %v1520
        %v2130 = vunpack.c.l.b16 %v1521
        %v2131 = vunpack.c.l.b16 %v1522
        %v2132 = vunpack.c.l.b16 %v1523
        %v2133 = vunpack.c.l.b16 %v1524
        %v2134 = vunpack.c.l.b16 %v1525
        %v2135 = vunpack.c.l.b16 %v1526
        %v2136 = vpack.c.b16 %v2121, %v2120
        %v2137 = vpack.c.b16 %v2123, %v2122
        %v2138 = vpack.c.b16 %v2125, %v2124
        %v2139 = vpack.c.b16 %v2127, %v2126
        %v2140 = vpack.c.b16 %v2129, %v2128
        %v2141 = vpack.c.b16 %v2131, %v2130
        %v2142 = vpack.c.b16 %v2133, %v2132
        %v2143 = vpack.c.b16 %v2135, %v2134
        %2152 = vmatpush.bf16.msra.mxu0 %v2143
        %2153 = vmatpush.bf16.msra.mxu0 %v2142
        %2154 = vmatpush.bf16.msra.mxu0 %v2141
        %2155 = vmatpush.bf16.msra.mxu0 %v2140
        %2156 = vmatpush.bf16.msra.mxu0 %v2139
        %2157 = vmatpush.bf16.msra.mxu0 %v2138
        %2158 = vmatpush.bf16.msra.mxu0 %v2137
        %2159 = vmatpush.bf16.msra.mxu0 %v2136
        %2160 = vmatmul.bf16.gmra.mxu0 %v2072
        %v2161 = vpop.f32.mrf.mxu0
        %v2162 = vadd.f32 %v1929, %v2161
        %v2163 = vpop.f32.mrf.mxu0
        %v2164 = vadd.f32 %v1931, %v2163
        %2165 = vmatmul.bf16.gmra.mxu0 %v2073
        %v2166 = vpop.f32.mrf.mxu0
        %v2167 = vadd.f32 %v1934, %v2166
        %v2168 = vpop.f32.mrf.mxu0
        %v2169 = vadd.f32 %v1936, %v2168
        %2170 = vmatmul.bf16.gmra.mxu0 %v2074
        %v2171 = vpop.f32.mrf.mxu0
        %v2172 = vadd.f32 %v1939, %v2171
        %v2173 = vpop.f32.mrf.mxu0
        %v2174 = vadd.f32 %v1941, %v2173
        %2175 = vmatmul.bf16.gmra.mxu0 %v2075
        %v2176 = vpop.f32.mrf.mxu0
        %v2177 = vadd.f32 %v1944, %v2176
        %v2178 = vpop.f32.mrf.mxu0
        %v2179 = vadd.f32 %v1946, %v2178
        %2180 = vmatmul.bf16.gmra.mxu0 %v2076
        %v2181 = vpop.f32.mrf.mxu0
        %v2182 = vadd.f32 %v1949, %v2181
        %v2183 = vpop.f32.mrf.mxu0
        %v2184 = vadd.f32 %v1951, %v2183
        %2185 = vmatmul.bf16.gmra.mxu0 %v2077
        %v2186 = vpop.f32.mrf.mxu0
        %v2187 = vadd.f32 %v1954, %v2186
        %v2188 = vpop.f32.mrf.mxu0
        %v2189 = vadd.f32 %v1956, %v2188
        %2190 = vmatmul.bf16.gmra.mxu0 %v2078
        %v2191 = vpop.f32.mrf.mxu0
        %v2192 = vadd.f32 %v1959, %v2191
        %v2193 = vpop.f32.mrf.mxu0
        %v2194 = vadd.f32 %v1961, %v2193
        %2195 = vmatmul.bf16.gmra.mxu0 %v2079
        %v2196 = vpop.f32.mrf.mxu0
        %v2197 = vadd.f32 %v1964, %v2196
        %v2198 = vpop.f32.mrf.mxu0
        %v2199 = vadd.f32 %v1966, %v2198
        %2200 = vmatmul.bf16.gmra.mxu0 %v2080
        %v2201 = vpop.f32.mrf.mxu0
        %v2202 = vadd.f32 %v1969, %v2201
        %v2203 = vpop.f32.mrf.mxu0
        %v2204 = vadd.f32 %v1971, %v2203
        %2205 = vmatmul.bf16.gmra.mxu0 %v2081
        %v2206 = vpop.f32.mrf.mxu0
        %v2207 = vadd.f32 %v1974, %v2206
        %v2208 = vpop.f32.mrf.mxu0
        %v2209 = vadd.f32 %v1976, %v2208
        %2210 = vmatmul.bf16.gmra.mxu0 %v2082
        %v2211 = vpop.f32.mrf.mxu0
        %v2212 = vadd.f32 %v1979, %v2211
        %v2213 = vpop.f32.mrf.mxu0
        %v2214 = vadd.f32 %v1981, %v2213
        %2215 = vmatmul.bf16.gmra.mxu0 %v2083
        %v2216 = vpop.f32.mrf.mxu0
        %v2217 = vadd.f32 %v1984, %v2216
        %v2218 = vpop.f32.mrf.mxu0
        %v2219 = vadd.f32 %v1986, %v2218
        %2220 = vmatmul.bf16.gmra.mxu0 %v2084
        %v2221 = vpop.f32.mrf.mxu0
        %v2222 = vadd.f32 %v1989, %v2221
        %v2223 = vpop.f32.mrf.mxu0
        %v2224 = vadd.f32 %v1991, %v2223
        %2225 = vmatmul.bf16.gmra.mxu0 %v2085
        %v2226 = vpop.f32.mrf.mxu0
        %v2227 = vadd.f32 %v1994, %v2226
        %v2228 = vpop.f32.mrf.mxu0
        %v2229 = vadd.f32 %v1996, %v2228
        %2230 = vmatmul.bf16.gmra.mxu0 %v2086
        %v2231 = vpop.f32.mrf.mxu0
        %v2232 = vadd.f32 %v1999, %v2231
        %v2233 = vpop.f32.mrf.mxu0
        %v2234 = vadd.f32 %v2001, %v2233
        %2235 = vmatmul.bf16.gmra.mxu0 %v2087
        %v2236 = vpop.f32.mrf.mxu0
        %v2237 = vadd.f32 %v2004, %v2236
        %v2238 = vpop.f32.mrf.mxu0
        %v2239 = vadd.f32 %v2006, %v2238
        %2240 = vdwg.mxu0
        %v2241 = vld [vmem:[%s595] sm:$0xff]
        %v2243 = vrot.slane %v2241, 1
        %v2244 = vrot.slane %v2241, 2
        %v2245 = vrot.slane %v2241, 3
        %v2246 = vrot.slane %v2241, 4
        %v2247 = vrot.slane %v2241, 5
        %v2248 = vrot.slane %v2241, 6
        %v2249 = vrot.slane %v2241, 7
        %v2250 = vld [vmem:[#allocation5] sm:$0xff]
        %v2251 = vld [vmem:[#allocation5 + $0x8] sm:$0xff]
        %v2252 = vld [vmem:[#allocation5 + $0x10] sm:$0xff]
        %v2253 = vld [vmem:[#allocation5 + $0x18] sm:$0xff]
        %v2254 = vperm.slane %v2241, 0
        %v2255 = vperm.slane %v2243, 0
        %v2256 = vperm.slane %v2244, 0
        %v2257 = vperm.slane %v2245, 0
        %v2258 = vperm.slane %v2246, 0
        %v2259 = vperm.slane %v2247, 0
        %v2260 = vperm.slane %v2248, 0
        %v2261 = vperm.slane %v2249, 0
        %v2270 = vadd.f32 %v2254, %v2250
        %v2271 = vadd.f32 %v2254, %v2251
        %v2272 = vadd.f32 %v2254, %v2252
        %v2273 = vadd.f32 %v2254, %v2253
        %v2274 = vadd.f32 %v2255, %v2250
        %v2275 = vadd.f32 %v2255, %v2251
        %v2276 = vadd.f32 %v2255, %v2252
        %v2277 = vadd.f32 %v2255, %v2253
        %v2278 = vadd.f32 %v2256, %v2250
        %v2279 = vadd.f32 %v2256, %v2251
        %v2280 = vadd.f32 %v2256, %v2252
        %v2281 = vadd.f32 %v2256, %v2253
        %v2282 = vadd.f32 %v2257, %v2250
        %v2283 = vadd.f32 %v2257, %v2251
        %v2284 = vadd.f32 %v2257, %v2252
        %v2285 = vadd.f32 %v2257, %v2253
        %v2286 = vadd.f32 %v2258, %v2250
        %v2287 = vadd.f32 %v2258, %v2251
        %v2288 = vadd.f32 %v2258, %v2252
        %v2289 = vadd.f32 %v2258, %v2253
        %v2290 = vadd.f32 %v2259, %v2250
        %v2291 = vadd.f32 %v2259, %v2251
        %v2292 = vadd.f32 %v2259, %v2252
        %v2293 = vadd.f32 %v2259, %v2253
        %v2294 = vadd.f32 %v2260, %v2250
        %v2295 = vadd.f32 %v2260, %v2251
        %v2296 = vadd.f32 %v2260, %v2252
        %v2297 = vadd.f32 %v2260, %v2253
        %v2298 = vadd.f32 %v2261, %v2250
        %v2299 = vadd.f32 %v2261, %v2251
        %v2300 = vadd.f32 %v2261, %v2252
        %v2301 = vadd.f32 %v2261, %v2253
        %v2302 = vadd.f32 %v2162, %v2270
        %v2303 = vadd.f32 %v2164, %v2271
        %v2304 = vadd.f32 %v2167, %v2272
        %v2305 = vadd.f32 %v2169, %v2273
        %v2306 = vadd.f32 %v2172, %v2274
        %v2307 = vadd.f32 %v2174, %v2275
        %v2308 = vadd.f32 %v2177, %v2276
        %v2309 = vadd.f32 %v2179, %v2277
        %v2310 = vadd.f32 %v2182, %v2278
        %v2311 = vadd.f32 %v2184, %v2279
        %v2312 = vadd.f32 %v2187, %v2280
        %v2313 = vadd.f32 %v2189, %v2281
        %v2314 = vadd.f32 %v2192, %v2282
        %v2315 = vadd.f32 %v2194, %v2283
        %v2316 = vadd.f32 %v2197, %v2284
        %v2317 = vadd.f32 %v2199, %v2285
        %v2318 = vadd.f32 %v2202, %v2286
        %v2319 = vadd.f32 %v2204, %v2287
        %v2320 = vadd.f32 %v2207, %v2288
        %v2321 = vadd.f32 %v2209, %v2289
        %v2322 = vadd.f32 %v2212, %v2290
        %v2323 = vadd.f32 %v2214, %v2291
        %v2324 = vadd.f32 %v2217, %v2292
        %v2325 = vadd.f32 %v2219, %v2293
        %v2326 = vadd.f32 %v2222, %v2294
        %v2327 = vadd.f32 %v2224, %v2295
        %v2328 = vadd.f32 %v2227, %v2296
        %v2329 = vadd.f32 %v2229, %v2297
        %v2330 = vadd.f32 %v2232, %v2298
        %v2331 = vadd.f32 %v2234, %v2299
        %v2332 = vadd.f32 %v2237, %v2300
        %v2333 = vadd.f32 %v2239, %v2301
        %v2334 = vld [vmem:[%s625] sm:$0xff]
        %v2335 = vld [vmem:[%s628] sm:$0x1]
        %2337 = vset.pattern.permute.xlu0 0
        %2338 = vperm.xlu0 %2337, %v2334
        %v2339 = vpop.permute.xlu0 %2338
        %v2342 = vperm.slane %v2335, 0
        %v2344 = vmul.f32 %v2339, %v2342
        %vm2345 = vcmask 261120
        %2346 = vst.msk [vmem:[%s590] sm:$0xff] %vm2345, %v2344
        %s2347 = sadd.s32 %s49, %s50
        %s2348 = sld [smem:[#allocation4 + %s2347]]
        %p2349 = scmp.gt.s32.totalorder %s2348, 0
        // Predicated region
        $region103: #{evoformer_forward.4} parent=97 // pred_check
          %p2350 = pneg %p2349
        $region104: #{evoformer_forward.4} parent=97 // pred_check_branch
          %2352 = sbr.rel (%p2350) target = $region106
        $region105: #{evoformer_forward.4} parent=97 // pred_region
          %s2353 = smul.u32 %s49, 8
          %v2354 = vlaneseq
          %v2355 = vshrl.u32 %v2354, 7
          %v2356 = vstv %s2353
          %v2357 = vadd.s32 %v2356, %v2355
          %s2358 = smul.u32 %s50, 32
          %v2359 = vlaneseq
          %v2360 = vand.u32 %v2359, 127
          %v2361 = vstv %s2358
          %v2362 = vadd.s32 %v2361, %v2360
          %v2363 = vmul.u32 %v2357, 32
          %v2364 = vadd.s32 %v2363, %v2362
          %s2365 = sld [smem:[#allocation3]]
          %v2366 = vstv %s2365
          %vm2367 = vcmp.eq.s32.totalorder %v2364, %v2366
          %v2368 = vsel %vm2367, 1, 0
          %v2369 = vcvt.s32.f32 %v2368
          %v2370 = vmax.f32 %v2369, 0.0
          %s2371 = sld [smem:[#allocation3 + $0x1]]
          %v2372 = vstv %s2371
          %vm2373 = vcmp.eq.s32.totalorder %v2364, %v2372
          %v2374 = vsel %vm2373, 1, 0
          %v2375 = vcvt.s32.f32 %v2374
          %v2376 = vmax.f32 %v2370, %v2375
          %s2377 = sld [smem:[#allocation3 + $0x2]]
          %v2378 = vstv %s2377
          %vm2379 = vcmp.eq.s32.totalorder %v2364, %v2378
          %v2380 = vsel %vm2379, 1, 0
          %v2381 = vcvt.s32.f32 %v2380
          %v2382 = vmax.f32 %v2376, %v2381
          %s2383 = sld [smem:[#allocation3 + $0x3]]
          %v2384 = vstv %s2383
          %vm2385 = vcmp.eq.s32.totalorder %v2364, %v2384
          %v2386 = vsel %vm2385, 1, 0
          %v2387 = vcvt.s32.f32 %v2386
          %v2388 = vmax.f32 %v2382, %v2387
          %v2389 = vperm.slane %v2388, 0
          %v2390 = vlaneseq
          %v2391 = vshrl.u32 %v2390, 7
          %2393 = vset.pattern.permute.xlu0 %v2391
          %2394 = vperm.xlu0 %2393, %v2389
          %v2395 = vpop.permute.xlu0 %2394
          %v2396 = vlaneseq
          %v2397 = vshrl.u32 %v2396, 7
          %v2398 = vadd.s32 %v2397, 8
          %2399 = vset.pattern.permute.xlu0 %v2398
          %2400 = vperm.xlu0 %2399, %v2389
          %v2401 = vpop.permute.xlu0 %2400
          %v2402 = vlaneseq
          %v2403 = vshrl.u32 %v2402, 7
          %v2404 = vadd.s32 %v2403, 16
          %2405 = vset.pattern.permute.xlu0 %v2404
          %2406 = vperm.xlu0 %2405, %v2389
          %v2407 = vpop.permute.xlu0 %2406
          %v2408 = vlaneseq
          %v2409 = vshrl.u32 %v2408, 7
          %v2410 = vadd.s32 %v2409, 24
          %2411 = vset.pattern.permute.xlu0 %v2410
          %2412 = vperm.xlu0 %2411, %v2389
          %v2413 = vpop.permute.xlu0 %2412
          %v2414 = vperm.slane %v2388, 1
          %v2415 = vlaneseq
          %v2416 = vshrl.u32 %v2415, 7
          %2418 = vset.pattern.permute.xlu0 %v2416
          %2419 = vperm.xlu0 %2418, %v2414
          %v2420 = vpop.permute.xlu0 %2419
          %v2421 = vlaneseq
          %v2422 = vshrl.u32 %v2421, 7
          %v2423 = vadd.s32 %v2422, 8
          %2424 = vset.pattern.permute.xlu0 %v2423
          %2425 = vperm.xlu0 %2424, %v2414
          %v2426 = vpop.permute.xlu0 %2425
          %v2427 = vlaneseq
          %v2428 = vshrl.u32 %v2427, 7
          %v2429 = vadd.s32 %v2428, 16
          %2430 = vset.pattern.permute.xlu0 %v2429
          %2431 = vperm.xlu0 %2430, %v2414
          %v2432 = vpop.permute.xlu0 %2431
          %v2433 = vlaneseq
          %v2434 = vshrl.u32 %v2433, 7
          %v2435 = vadd.s32 %v2434, 24
          %2436 = vset.pattern.permute.xlu0 %v2435
          %2437 = vperm.xlu0 %2436, %v2414
          %v2438 = vpop.permute.xlu0 %2437
          %v2439 = vperm.slane %v2388, 2
          %v2440 = vlaneseq
          %v2441 = vshrl.u32 %v2440, 7
          %2443 = vset.pattern.permute.xlu0 %v2441
          %2444 = vperm.xlu0 %2443, %v2439
          %v2445 = vpop.permute.xlu0 %2444
          %v2446 = vlaneseq
          %v2447 = vshrl.u32 %v2446, 7
          %v2448 = vadd.s32 %v2447, 8
          %2449 = vset.pattern.permute.xlu0 %v2448
          %2450 = vperm.xlu0 %2449, %v2439
          %v2451 = vpop.permute.xlu0 %2450
          %v2452 = vlaneseq
          %v2453 = vshrl.u32 %v2452, 7
          %v2454 = vadd.s32 %v2453, 16
          %2455 = vset.pattern.permute.xlu0 %v2454
          %2456 = vperm.xlu0 %2455, %v2439
          %v2457 = vpop.permute.xlu0 %2456
          %v2458 = vlaneseq
          %v2459 = vshrl.u32 %v2458, 7
          %v2460 = vadd.s32 %v2459, 24
          %2461 = vset.pattern.permute.xlu0 %v2460
          %2462 = vperm.xlu0 %2461, %v2439
          %v2463 = vpop.permute.xlu0 %2462
          %v2464 = vperm.slane %v2388, 3
          %v2465 = vlaneseq
          %v2466 = vshrl.u32 %v2465, 7
          %2468 = vset.pattern.permute.xlu0 %v2466
          %2469 = vperm.xlu0 %2468, %v2464
          %v2470 = vpop.permute.xlu0 %2469
          %v2471 = vlaneseq
          %v2472 = vshrl.u32 %v2471, 7
          %v2473 = vadd.s32 %v2472, 8
          %2474 = vset.pattern.permute.xlu0 %v2473
          %2475 = vperm.xlu0 %2474, %v2464
          %v2476 = vpop.permute.xlu0 %2475
          %v2477 = vlaneseq
          %v2478 = vshrl.u32 %v2477, 7
          %v2479 = vadd.s32 %v2478, 16
          %2480 = vset.pattern.permute.xlu0 %v2479
          %2481 = vperm.xlu0 %2480, %v2464
          %v2482 = vpop.permute.xlu0 %2481
          %v2483 = vlaneseq
          %v2484 = vshrl.u32 %v2483, 7
          %v2485 = vadd.s32 %v2484, 24
          %2486 = vset.pattern.permute.xlu0 %v2485
          %2487 = vperm.xlu0 %2486, %v2464
          %v2488 = vpop.permute.xlu0 %2487
          %v2489 = vperm.slane %v2388, 4
          %v2490 = vlaneseq
          %v2491 = vshrl.u32 %v2490, 7
          %2493 = vset.pattern.permute.xlu0 %v2491
          %2494 = vperm.xlu0 %2493, %v2489
          %v2495 = vpop.permute.xlu0 %2494
          %v2496 = vlaneseq
          %v2497 = vshrl.u32 %v2496, 7
          %v2498 = vadd.s32 %v2497, 8
          %2499 = vset.pattern.permute.xlu0 %v2498
          %2500 = vperm.xlu0 %2499, %v2489
          %v2501 = vpop.permute.xlu0 %2500
          %v2502 = vlaneseq
          %v2503 = vshrl.u32 %v2502, 7
          %v2504 = vadd.s32 %v2503, 16
          %2505 = vset.pattern.permute.xlu0 %v2504
          %2506 = vperm.xlu0 %2505, %v2489
          %v2507 = vpop.permute.xlu0 %2506
          %v2508 = vlaneseq
          %v2509 = vshrl.u32 %v2508, 7
          %v2510 = vadd.s32 %v2509, 24
          %2511 = vset.pattern.permute.xlu0 %v2510
          %2512 = vperm.xlu0 %2511, %v2489
          %v2513 = vpop.permute.xlu0 %2512
          %v2514 = vperm.slane %v2388, 5
          %v2515 = vlaneseq
          %v2516 = vshrl.u32 %v2515, 7
          %2518 = vset.pattern.permute.xlu0 %v2516
          %2519 = vperm.xlu0 %2518, %v2514
          %v2520 = vpop.permute.xlu0 %2519
          %v2521 = vlaneseq
          %v2522 = vshrl.u32 %v2521, 7
          %v2523 = vadd.s32 %v2522, 8
          %2524 = vset.pattern.permute.xlu0 %v2523
          %2525 = vperm.xlu0 %2524, %v2514
          %v2526 = vpop.permute.xlu0 %2525
          %v2527 = vlaneseq
          %v2528 = vshrl.u32 %v2527, 7
          %v2529 = vadd.s32 %v2528, 16
          %2530 = vset.pattern.permute.xlu0 %v2529
          %2531 = vperm.xlu0 %2530, %v2514
          %v2532 = vpop.permute.xlu0 %2531
          %v2533 = vlaneseq
          %v2534 = vshrl.u32 %v2533, 7
          %v2535 = vadd.s32 %v2534, 24
          %2536 = vset.pattern.permute.xlu0 %v2535
          %2537 = vperm.xlu0 %2536, %v2514
          %v2538 = vpop.permute.xlu0 %2537
          %v2539 = vperm.slane %v2388, 6
          %v2540 = vlaneseq
          %v2541 = vshrl.u32 %v2540, 7
          %2543 = vset.pattern.permute.xlu0 %v2541
          %2544 = vperm.xlu0 %2543, %v2539
          %v2545 = vpop.permute.xlu0 %2544
          %v2546 = vlaneseq
          %v2547 = vshrl.u32 %v2546, 7
          %v2548 = vadd.s32 %v2547, 8
          %2549 = vset.pattern.permute.xlu0 %v2548
          %2550 = vperm.xlu0 %2549, %v2539
          %v2551 = vpop.permute.xlu0 %2550
          %v2552 = vlaneseq
          %v2553 = vshrl.u32 %v2552, 7
          %v2554 = vadd.s32 %v2553, 16
          %2555 = vset.pattern.permute.xlu0 %v2554
          %2556 = vperm.xlu0 %2555, %v2539
          %v2557 = vpop.permute.xlu0 %2556
          %v2558 = vlaneseq
          %v2559 = vshrl.u32 %v2558, 7
          %v2560 = vadd.s32 %v2559, 24
          %2561 = vset.pattern.permute.xlu0 %v2560
          %2562 = vperm.xlu0 %2561, %v2539
          %v2563 = vpop.permute.xlu0 %2562
          %v2564 = vperm.slane %v2388, 7
          %v2565 = vlaneseq
          %v2566 = vshrl.u32 %v2565, 7
          %2568 = vset.pattern.permute.xlu0 %v2566
          %2569 = vperm.xlu0 %2568, %v2564
          %v2570 = vpop.permute.xlu0 %2569
          %v2571 = vlaneseq
          %v2572 = vshrl.u32 %v2571, 7
          %v2573 = vadd.s32 %v2572, 8
          %2574 = vset.pattern.permute.xlu0 %v2573
          %2575 = vperm.xlu0 %2574, %v2564
          %v2576 = vpop.permute.xlu0 %2575
          %v2577 = vlaneseq
          %v2578 = vshrl.u32 %v2577, 7
          %v2579 = vadd.s32 %v2578, 16
          %2580 = vset.pattern.permute.xlu0 %v2579
          %2581 = vperm.xlu0 %2580, %v2564
          %v2582 = vpop.permute.xlu0 %2581
          %v2583 = vlaneseq
          %v2584 = vshrl.u32 %v2583, 7
          %v2585 = vadd.s32 %v2584, 24
          %2586 = vset.pattern.permute.xlu0 %v2585
          %2587 = vperm.xlu0 %2586, %v2564
          %v2588 = vpop.permute.xlu0 %2587
          %v2589 = vld [vmem:[%s10] sm:$0x1]
          %v2591 = vperm.slane %v2589, 0
          %v2593 = vmul.f32 %v2395, %v2591
          %v2594 = vmul.f32 %v2401, %v2591
          %v2595 = vmul.f32 %v2407, %v2591
          %v2596 = vmul.f32 %v2413, %v2591
          %v2597 = vmul.f32 %v2420, %v2591
          %v2598 = vmul.f32 %v2426, %v2591
          %v2599 = vmul.f32 %v2432, %v2591
          %v2600 = vmul.f32 %v2438, %v2591
          %v2601 = vmul.f32 %v2445, %v2591
          %v2602 = vmul.f32 %v2451, %v2591
          %v2603 = vmul.f32 %v2457, %v2591
          %v2604 = vmul.f32 %v2463, %v2591
          %v2605 = vmul.f32 %v2470, %v2591
          %v2606 = vmul.f32 %v2476, %v2591
          %v2607 = vmul.f32 %v2482, %v2591
          %v2608 = vmul.f32 %v2488, %v2591
          %v2609 = vmul.f32 %v2495, %v2591
          %v2610 = vmul.f32 %v2501, %v2591
          %v2611 = vmul.f32 %v2507, %v2591
          %v2612 = vmul.f32 %v2513, %v2591
          %v2613 = vmul.f32 %v2520, %v2591
          %v2614 = vmul.f32 %v2526, %v2591
          %v2615 = vmul.f32 %v2532, %v2591
          %v2616 = vmul.f32 %v2538, %v2591
          %v2617 = vmul.f32 %v2545, %v2591
          %v2618 = vmul.f32 %v2551, %v2591
          %v2619 = vmul.f32 %v2557, %v2591
          %v2620 = vmul.f32 %v2563, %v2591
          %v2621 = vmul.f32 %v2570, %v2591
          %v2622 = vmul.f32 %v2576, %v2591
          %v2623 = vmul.f32 %v2582, %v2591
          %v2624 = vmul.f32 %v2588, %v2591
          %v2625 = vadd.f32 %v2302, %v2593
          %v2626 = vadd.f32 %v2303, %v2594
          %v2627 = vadd.f32 %v2304, %v2595
          %v2628 = vadd.f32 %v2305, %v2596
          %v2629 = vadd.f32 %v2306, %v2597
          %v2630 = vadd.f32 %v2307, %v2598
          %v2631 = vadd.f32 %v2308, %v2599
          %v2632 = vadd.f32 %v2309, %v2600
          %v2633 = vadd.f32 %v2310, %v2601
          %v2634 = vadd.f32 %v2311, %v2602
          %v2635 = vadd.f32 %v2312, %v2603
          %v2636 = vadd.f32 %v2313, %v2604
          %v2637 = vadd.f32 %v2314, %v2605
          %v2638 = vadd.f32 %v2315, %v2606
          %v2639 = vadd.f32 %v2316, %v2607
          %v2640 = vadd.f32 %v2317, %v2608
          %v2641 = vadd.f32 %v2318, %v2609
          %v2642 = vadd.f32 %v2319, %v2610
          %v2643 = vadd.f32 %v2320, %v2611
          %v2644 = vadd.f32 %v2321, %v2612
          %v2645 = vadd.f32 %v2322, %v2613
          %v2646 = vadd.f32 %v2323, %v2614
          %v2647 = vadd.f32 %v2324, %v2615
          %v2648 = vadd.f32 %v2325, %v2616
          %v2649 = vadd.f32 %v2326, %v2617
          %v2650 = vadd.f32 %v2327, %v2618
          %v2651 = vadd.f32 %v2328, %v2619
          %v2652 = vadd.f32 %v2329, %v2620
          %v2653 = vadd.f32 %v2330, %v2621
          %v2654 = vadd.f32 %v2331, %v2622
          %v2655 = vadd.f32 %v2332, %v2623
          %v2656 = vadd.f32 %v2333, %v2624
          %v2657 = vpack.c.bf16 %v2625, %v2625
          %v2658 = vpack.c.bf16 %v2626, %v2626
          %v2659 = vpack.c.bf16 %v2627, %v2627
          %v2660 = vpack.c.bf16 %v2628, %v2628
          %v2661 = vpack.c.bf16 %v2629, %v2629
          %v2662 = vpack.c.bf16 %v2630, %v2630
          %v2663 = vpack.c.bf16 %v2631, %v2631
          %v2664 = vpack.c.bf16 %v2632, %v2632
          %v2665 = vpack.c.bf16 %v2633, %v2633
          %v2666 = vpack.c.bf16 %v2634, %v2634
          %v2667 = vpack.c.bf16 %v2635, %v2635
          %v2668 = vpack.c.bf16 %v2636, %v2636
          %v2669 = vpack.c.bf16 %v2637, %v2637
          %v2670 = vpack.c.bf16 %v2638, %v2638
          %v2671 = vpack.c.bf16 %v2639, %v2639
          %v2672 = vpack.c.bf16 %v2640, %v2640
          %v2673 = vpack.c.bf16 %v2641, %v2641
          %v2674 = vpack.c.bf16 %v2642, %v2642
          %v2675 = vpack.c.bf16 %v2643, %v2643
          %v2676 = vpack.c.bf16 %v2644, %v2644
          %v2677 = vpack.c.bf16 %v2645, %v2645
          %v2678 = vpack.c.bf16 %v2646, %v2646
          %v2679 = vpack.c.bf16 %v2647, %v2647
          %v2680 = vpack.c.bf16 %v2648, %v2648
          %v2681 = vpack.c.bf16 %v2649, %v2649
          %v2682 = vpack.c.bf16 %v2650, %v2650
          %v2683 = vpack.c.bf16 %v2651, %v2651
          %v2684 = vpack.c.bf16 %v2652, %v2652
          %v2685 = vpack.c.bf16 %v2653, %v2653
          %v2686 = vpack.c.bf16 %v2654, %v2654
          %v2687 = vpack.c.bf16 %v2655, %v2655
          %v2688 = vpack.c.bf16 %v2656, %v2656
          %2689 = vst [vmem:[%s583] sm:$0xf] %v2657
          %2690 = vst [vmem:[%s583 + $0x4] sm:$0xf] %v2658
          %2691 = vst [vmem:[%s583 + $0x8] sm:$0xf] %v2659
          %2692 = vst [vmem:[%s583 + $0xc] sm:$0xf] %v2660
          %2693 = vst [vmem:[%s583 + $0x10] sm:$0xf] %v2661
          %2694 = vst [vmem:[%s583 + $0x14] sm:$0xf] %v2662
          %2695 = vst [vmem:[%s583 + $0x18] sm:$0xf] %v2663
          %2696 = vst [vmem:[%s583 + $0x1c] sm:$0xf] %v2664
          %2697 = vst [vmem:[%s583 + $0x20] sm:$0xf] %v2665
          %2698 = vst [vmem:[%s583 + $0x24] sm:$0xf] %v2666
          %2699 = vst [vmem:[%s583 + $0x28] sm:$0xf] %v2667
          %2700 = vst [vmem:[%s583 + $0x2c] sm:$0xf] %v2668
          %2701 = vst [vmem:[%s583 + $0x30] sm:$0xf] %v2669
          %2702 = vst [vmem:[%s583 + $0x34] sm:$0xf] %v2670
          %2703 = vst [vmem:[%s583 + $0x38] sm:$0xf] %v2671
          %2704 = vst [vmem:[%s583 + $0x3c] sm:$0xf] %v2672
          %2705 = vst [vmem:[%s583 + $0x40] sm:$0xf] %v2673
          %2706 = vst [vmem:[%s583 + $0x44] sm:$0xf] %v2674
          %2707 = vst [vmem:[%s583 + $0x48] sm:$0xf] %v2675
          %2708 = vst [vmem:[%s583 + $0x4c] sm:$0xf] %v2676
          %2709 = vst [vmem:[%s583 + $0x50] sm:$0xf] %v2677
          %2710 = vst [vmem:[%s583 + $0x54] sm:$0xf] %v2678
          %2711 = vst [vmem:[%s583 + $0x58] sm:$0xf] %v2679
          %2712 = vst [vmem:[%s583 + $0x5c] sm:$0xf] %v2680
          %2713 = vst [vmem:[%s583 + $0x60] sm:$0xf] %v2681
          %2714 = vst [vmem:[%s583 + $0x64] sm:$0xf] %v2682
          %2715 = vst [vmem:[%s583 + $0x68] sm:$0xf] %v2683
          %2716 = vst [vmem:[%s583 + $0x6c] sm:$0xf] %v2684
          %2717 = vst [vmem:[%s583 + $0x70] sm:$0xf] %v2685
          %2718 = vst [vmem:[%s583 + $0x74] sm:$0xf] %v2686
          %2719 = vst [vmem:[%s583 + $0x78] sm:$0xf] %v2687
          %2720 = vst [vmem:[%s583 + $0x7c] sm:$0xf] %v2688
        $region106: #{evoformer_forward.4} parent=97 // pred_fallthru
          _
        %p2721 = scmp.le.s32.totalorder %s2348, 0
        // Predicated region
        $region107: #{evoformer_forward.4} parent=97 // pred_check
          %p2722 = pneg %p2721
        $region108: #{evoformer_forward.4} parent=97 // pred_check_branch
          %2724 = sbr.rel (%p2722) target = $region110
        $region109: #{evoformer_forward.4} parent=97 // pred_region
          %v2725 = vpack.c.bf16 %v2302, %v2302
          %v2726 = vpack.c.bf16 %v2303, %v2303
          %v2727 = vpack.c.bf16 %v2304, %v2304
          %v2728 = vpack.c.bf16 %v2305, %v2305
          %v2729 = vpack.c.bf16 %v2306, %v2306
          %v2730 = vpack.c.bf16 %v2307, %v2307
          %v2731 = vpack.c.bf16 %v2308, %v2308
          %v2732 = vpack.c.bf16 %v2309, %v2309
          %v2733 = vpack.c.bf16 %v2310, %v2310
          %v2734 = vpack.c.bf16 %v2311, %v2311
          %v2735 = vpack.c.bf16 %v2312, %v2312
          %v2736 = vpack.c.bf16 %v2313, %v2313
          %v2737 = vpack.c.bf16 %v2314, %v2314
          %v2738 = vpack.c.bf16 %v2315, %v2315
          %v2739 = vpack.c.bf16 %v2316, %v2316
          %v2740 = vpack.c.bf16 %v2317, %v2317
          %v2741 = vpack.c.bf16 %v2318, %v2318
          %v2742 = vpack.c.bf16 %v2319, %v2319
          %v2743 = vpack.c.bf16 %v2320, %v2320
          %v2744 = vpack.c.bf16 %v2321, %v2321
          %v2745 = vpack.c.bf16 %v2322, %v2322
          %v2746 = vpack.c.bf16 %v2323, %v2323
          %v2747 = vpack.c.bf16 %v2324, %v2324
          %v2748 = vpack.c.bf16 %v2325, %v2325
          %v2749 = vpack.c.bf16 %v2326, %v2326
          %v2750 = vpack.c.bf16 %v2327, %v2327
          %v2751 = vpack.c.bf16 %v2328, %v2328
          %v2752 = vpack.c.bf16 %v2329, %v2329
          %v2753 = vpack.c.bf16 %v2330, %v2330
          %v2754 = vpack.c.bf16 %v2331, %v2331
          %v2755 = vpack.c.bf16 %v2332, %v2332
          %v2756 = vpack.c.bf16 %v2333, %v2333
          %2757 = vst [vmem:[%s583] sm:$0xf] %v2725
          %2758 = vst [vmem:[%s583 + $0x4] sm:$0xf] %v2726
          %2759 = vst [vmem:[%s583 + $0x8] sm:$0xf] %v2727
          %2760 = vst [vmem:[%s583 + $0xc] sm:$0xf] %v2728
          %2761 = vst [vmem:[%s583 + $0x10] sm:$0xf] %v2729
          %2762 = vst [vmem:[%s583 + $0x14] sm:$0xf] %v2730
          %2763 = vst [vmem:[%s583 + $0x18] sm:$0xf] %v2731
          %2764 = vst [vmem:[%s583 + $0x1c] sm:$0xf] %v2732
          %2765 = vst [vmem:[%s583 + $0x20] sm:$0xf] %v2733
          %2766 = vst [vmem:[%s583 + $0x24] sm:$0xf] %v2734
          %2767 = vst [vmem:[%s583 + $0x28] sm:$0xf] %v2735
          %2768 = vst [vmem:[%s583 + $0x2c] sm:$0xf] %v2736
          %2769 = vst [vmem:[%s583 + $0x30] sm:$0xf] %v2737
          %2770 = vst [vmem:[%s583 + $0x34] sm:$0xf] %v2738
          %2771 = vst [vmem:[%s583 + $0x38] sm:$0xf] %v2739
          %2772 = vst [vmem:[%s583 + $0x3c] sm:$0xf] %v2740
          %2773 = vst [vmem:[%s583 + $0x40] sm:$0xf] %v2741
          %2774 = vst [vmem:[%s583 + $0x44] sm:$0xf] %v2742
          %2775 = vst [vmem:[%s583 + $0x48] sm:$0xf] %v2743
          %2776 = vst [vmem:[%s583 + $0x4c] sm:$0xf] %v2744
          %2777 = vst [vmem:[%s583 + $0x50] sm:$0xf] %v2745
          %2778 = vst [vmem:[%s583 + $0x54] sm:$0xf] %v2746
          %2779 = vst [vmem:[%s583 + $0x58] sm:$0xf] %v2747
          %2780 = vst [vmem:[%s583 + $0x5c] sm:$0xf] %v2748
          %2781 = vst [vmem:[%s583 + $0x60] sm:$0xf] %v2749
          %2782 = vst [vmem:[%s583 + $0x64] sm:$0xf] %v2750
          %2783 = vst [vmem:[%s583 + $0x68] sm:$0xf] %v2751
          %2784 = vst [vmem:[%s583 + $0x6c] sm:$0xf] %v2752
          %2785 = vst [vmem:[%s583 + $0x70] sm:$0xf] %v2753
          %2786 = vst [vmem:[%s583 + $0x74] sm:$0xf] %v2754
          %2787 = vst [vmem:[%s583 + $0x78] sm:$0xf] %v2755
          %2788 = vst [vmem:[%s583 + $0x7c] sm:$0xf] %v2756
        $region110: #{evoformer_forward.4} parent=97 // pred_fallthru
          _
        %s2789 = sand.u32 %s332, 1
        %s2790 = scalar_lea.sflag [#allocation7], %s2789
        %s2791 = sand.u32 %s332, 1
        %s2792 = smul.addr %s2791, 128
        %s2793 = scalar_lea.vmem [#allocation6], %s2792
        %s2794 = sand.u32 %s360, 1
        %s2795 = scalar_lea.sflag [#allocation9], %s2794
        %s2796 = sand.u32 %s360, 1
        %s2797 = smul.addr %s2796, 8
        %s2798 = scalar_lea.vmem [#allocation8], %s2797
        // Predicated region
        $region111: #{evoformer_forward.4} parent=97 // pred_check
          %p2799 = pneg %p342
        $region112: #{evoformer_forward.4} parent=97 // pred_check_branch
          %2801 = sbr.rel (%p2799) target = $region114
        $region113: #{evoformer_forward.4} parent=97 // pred_region
          %s2802 = smul.u32 8, %s49
          %s2803 = smul.u32 4, %s50
          %2805 = vsyncadd %s2790, 0
          %s2806 = smul.addr %s2802, 4
          %s2807 = sadd.s32 %s2803, %s2806
          %s2808 = smul.addr %s2807, 4
          %s2809 = scalar_lea.hbm %s13, %s2808
          %s2810 = sshll.u32 %s2793, 4
          %s2811 = int_to_ptr.vmem [resolvable:$true] %s2810
          %s2812 = sshll.u32 %s2809, 4
          %s2813 = int_to_ptr.hbm [resolvable:$true] %s2812
          %2818 = dma.vmem_to_hbm [thread:$0]  %s2811, 2048, %s2813, %s2790, 64, 64, 4
        $region114: #{evoformer_forward.4} parent=97 // pred_fallthru
          _
        // Predicated region
        $region115: #{evoformer_forward.4} parent=97 // pred_check
          %p2819 = pneg %p370
        $region116: #{evoformer_forward.4} parent=97 // pred_check_branch
          %2821 = sbr.rel (%p2819) target = $region118
        $region117: #{evoformer_forward.4} parent=97 // pred_region
          %2823 = vsyncadd %s2795, 0
          %s2824 = sadd.s32 %s50, %s49
          %s2825 = smul.addr %s2824, 8
          %s2826 = scalar_lea.hbm %s14, %s2825
          %s2828 = sshll.u32 %s2798, 4
          %s2829 = int_to_ptr.vmem [resolvable:$true] %s2828
          %s2830 = sshll.u32 %s2826, 4
          %s2831 = int_to_ptr.hbm [resolvable:$true] %s2830
          %2833 = dma.vmem_to_hbm [thread:$0]  %s2829, 128, %s2831, %s2795
        $region118: #{evoformer_forward.4} parent=97 // pred_fallthru
          _
      $region98: #{evoformer_forward.4} parent=5 // pred_fallthru
        _
      %p2834 = scmp.le.s32.totalorder 2, %s40
      // Predicated region
      $region119: #{evoformer_forward.4} parent=5 // pred_check
        %p2835 = pneg %p2834
      $region120: #{evoformer_forward.4} parent=5 // pred_check_branch
        %2837 = sbr.rel (%p2835) target = $region122
      $region121: #{evoformer_forward.4} parent=5 // pred_region
        %s2838 = ssub.s32 %s40, 2
        // Predicated region
        $region123: #{evoformer_forward.4} parent=121 // pred_check
          %p2839 = pneg %p348
        $region124: #{evoformer_forward.4} parent=121 // pred_check_branch
          %2841 = sbr.rel (%p2839) target = $region126
        $region125: #{evoformer_forward.4} parent=121 // pred_region
          %s2842 = sand.u32 %s333, 1
          %s2843 = scalar_lea.sflag [#allocation7], %s2842
          %s2844 = sand.u32 %s333, 1
          %s2845 = smul.addr %s2844, 128
          %s2846 = scalar_lea.vmem [#allocation6], %s2845
          %2848 = dma.done %s2843, 2048
        $region126: #{evoformer_forward.4} parent=121 // pred_fallthru
          _
        // Predicated region
        $region127: #{evoformer_forward.4} parent=121 // pred_check
          %p2849 = pneg %p376
        $region128: #{evoformer_forward.4} parent=121 // pred_check_branch
          %2851 = sbr.rel (%p2849) target = $region130
        $region129: #{evoformer_forward.4} parent=121 // pred_region
          %s2852 = sand.u32 %s361, 1
          %s2853 = scalar_lea.sflag [#allocation9], %s2852
          %s2854 = sand.u32 %s361, 1
          %s2855 = smul.addr %s2854, 8
          %s2856 = scalar_lea.vmem [#allocation8], %s2855
          %2858 = dma.done %s2853, 128
        $region130: #{evoformer_forward.4} parent=121 // pred_fallthru
          _
      $region122: #{evoformer_forward.4} parent=5 // pred_fallthru
        _
    $region6: #{evoformer_forward.4} parent=1 // loop_footer
      %s44 = sadd.s32 1, %s40
    $region7: #{evoformer_forward.4} parent=1 // loop_footer_branch
      %39 = sbr.rel target = $region3
    $region8: #{evoformer_forward.4} parent=1 // loop_exit
      _
    %2859 = vsyncpa [#allocation7], 1
    %s2860 = scalar_lea.sflag [#allocation7], 1
    %2861 = vsyncpa %s2860, 1
    %2862 = vsyncpa [#allocation9], 1
    %s2863 = scalar_lea.sflag [#allocation9], 1
    %2864 = vsyncpa %s2863, 1

</llo_original>
